<compile_context>
chip_gen: v6e
topology: v6e:2x2x1
jax: 0.10.0
libtpu: 0.0.40
codegen_flags: <defaults>
</compile_context>

<pallas_src>
import jax
import jax.numpy as jnp
from jax.experimental import pallas as pl
from jax.experimental.pallas import tpu as pltpu


# ----------------------------------------------------------------------------
# Fused whole-network kernel factory.
# metas[i] = (cin, cout, k, s, has_sc)   (static Python config, unrolled).
# ----------------------------------------------------------------------------
def _make_kernel(N, metas, L0):

    def run_block(x3d, Lin, meta, wrefs, stage_ref):
        cin, cout, k, s, has_sc = meta
        if has_sc:
            wdw_ref, bdw_ref, wpw_ref, bpw_ref, wsc_ref, bsc_ref = wrefs
        else:
            wdw_ref, bdw_ref, wpw_ref, bpw_ref = wrefs
        p = k // 2
        Lout = (Lin + 2 * p - k) // s + 1

        # ---- stage zero-padded (and stride-split) input into VMEM scratch ----
        stage_ref[...] = jnp.zeros(stage_ref.shape, jnp.float32)
        if s == 1:
            # stage[n, j, c] == x_padded[n, j, c]
            stage_ref[:, p:p + Lin, :] = x3d
            stage = stage_ref[...]                               # (N, Lin+2p, cin)
            taps = [stage[:, t:t + Lout, :] for t in range(k)]
            sc3d = x3d                                           # identity shortcut
        else:
            # stage[n, Q, r, c] == x_padded[n, Q*s + r, c]   (requires s|p, s|Lin)
            for q in range(Lin // s):
                stage_ref[:, p // s + q, :, :] = x3d[:, q * s:(q + 1) * s, :]
            stage = stage_ref[...]                               # (N, Ls, s, cin)
            taps = [stage[:, t // s:t // s + Lout, t % s, :] for t in range(k)]
            # strided 1x1 shortcut reads x[:, ::s, :]  (p % s == 0 here)
            sc3d = stage[:, p // s:p // s + Lout, p % s, :]

        # ---- depthwise conv: k unrolled broadcast-MACs on the VPU ----
        wdw = wdw_ref[...]                                       # (k, cin)
        acc = jnp.zeros((N, Lout, cin), jnp.float32)
        for t in range(k):
            acc = acc + taps[t] * wdw[t:t + 1, :]

        # ---- pointwise 1x1 conv (+folded BN): single dot over M = N*Lout ----
        acc2d = acc.reshape(N * Lout, cin) + bdw_ref[...]
        h = jnp.dot(acc2d, wpw_ref[...],
                    preferred_element_type=jnp.float32) + bpw_ref[...]

        # ---- residual shortcut ----
        sc2d = sc3d.reshape(N * Lout, cin)
        if has_sc:
            sc2d = jnp.dot(sc2d, wsc_ref[...],
                           preferred_element_type=jnp.float32) + bsc_ref[...]

        out = jnp.clip(h + sc2d, 0.0, 6.0)                       # ReLU6
        return out.reshape(N, Lout, cout), Lout

    def kernel(*refs):
        # -------- unpack refs: inputs, outputs, scratch --------
        idx = 0
        x_ref = refs[idx]; idx += 1
        block_wrefs = []
        for (_, _, _, _, has_sc) in metas:
            n = 6 if has_sc else 4
            block_wrefs.append(refs[idx:idx + n]); idx += n
        w1_ref, b1_ref, w2_ref, b2_ref = refs[idx:idx + 4]; idx += 4
        probs_ref, feat_ref = refs[idx:idx + 2]; idx += 2
        stage_refs = refs[idx:]

        # -------- body: all 6 blocks, VMEM-resident activations --------
        x3d = x_ref[...].astype(jnp.float32)                     # (N, L0, C0)
        Lcur = L0
        for i, meta in enumerate(metas):
            x3d, Lcur = run_block(x3d, Lcur, meta, block_wrefs[i], stage_refs[i])

        # -------- head: AdaptiveAvgPool1d(1) + squeeze + MLP + Softmax --------
        feat = jnp.mean(x3d, axis=1)                             # (N, C_final)
        z1 = jnp.dot(feat, w1_ref[...],
                     preferred_element_type=jnp.float32) + b1_ref[...]
        z1 = jnp.clip(z1, 0.0, 6.0)                              # ReLU6
        z2 = jnp.dot(z1, w2_ref[...],
                     preferred_element_type=jnp.float32) + b2_ref[...]
        z2 = z2 - jnp.max(z2, axis=-1, keepdims=True)
        e = jnp.exp(z2)
        inv = pl.reciprocal(jnp.sum(e, axis=-1, keepdims=True), approx=True)
        probs_ref[...] = (e * inv).astype(probs_ref.dtype)
        feat_ref[...] = feat.astype(feat_ref.dtype)

    return kernel


# ----------------------------------------------------------------------------
# Wrapper: fold BN, build inputs/scratch, launch one pallas_call.
# ----------------------------------------------------------------------------
def nirs_rescnn_forward(x_ncl, cfg, blocks, head_p):
    N, _, L0 = x_ncl.shape
    x_nlc = jnp.transpose(x_ncl, (0, 2, 1))          # NCL -> NLC (once)

    inputs = [x_nlc]
    metas = []
    scratch = []
    Lcur = L0
    for blk, (cin, cout, k, s) in zip(blocks, cfg):
        p = k // 2
        has_sc = (s != 1) or (cin != cout)

        # Fold eval-mode BatchNorm (running stats) into the 1x1 convs.
        bn_s = blk["bn_gamma"] * jax.lax.rsqrt(blk["bn_var"] + 1e-5)
        bn_b = blk["bn_beta"] - blk["bn_mean"] * bn_s
        wpw_f = blk["wpw"] * bn_s[None, :]
        bpw_f = (blk["bpw"] * bn_s + bn_b)[None, :]
        binps = [blk["wdw"], blk["bdw"][None, :], wpw_f, bpw_f]
        if has_sc:
            sc_s = blk["sc_gamma"] * jax.lax.rsqrt(blk["sc_var"] + 1e-5)
            sc_b = blk["sc_beta"] - blk["sc_mean"] * sc_s
            binps += [blk["wsc"] * sc_s[None, :], (blk["bsc"] * sc_s + sc_b)[None, :]]
        inputs += binps
        metas.append((cin, cout, k, s, has_sc))

        # Per-block staging scratch (padded, stride-split layout for s > 1).
        if s == 1:
            scratch.append(pltpu.VMEM((N, Lcur + 2 * p, cin), jnp.float32))
        else:
            assert k % 2 == 1 and p % s == 0 and Lcur % s == 0, \
                "stride/pad staging layout assumption"
            Ls = Lcur // s + 2 * (p // s)
            scratch.append(pltpu.VMEM((N, Ls, s, cin), jnp.float32))
        Lcur = (Lcur + 2 * p - k) // s + 1

    inputs += [head_p["w1"], head_p["b1"][None, :],
               head_p["w2"], head_p["b2"][None, :]]

    vmem = pl.BlockSpec(memory_space=pltpu.MemorySpace.VMEM)
    kernel = _make_kernel(N, metas, L0)
    return pl.pallas_call(
        kernel,
        out_shape=(jax.ShapeDtypeStruct((N, 2), jnp.float32),
                   jax.ShapeDtypeStruct((N, cfg[-1][1]), jnp.float32)),
        in_specs=[vmem] * len(inputs),
        out_specs=(vmem, vmem),
        scratch_shapes=scratch,
    )(*inputs)


# ----------------------------------------------------------------------------
# Parameter init (deterministic, torch-like uniform bounds; fresh BN stats).
# ----------------------------------------------------------------------------
def init_params(key, channel):
    cfg = [(channel, 2 * channel, 9, 4),
           (2 * channel, 2 * channel, 3, 1),
           (2 * channel, 2 * channel, 3, 1),
           (2 * channel, 4 * channel, 9, 4),
           (4 * channel, 4 * channel, 3, 1),
           (4 * channel, 4 * channel, 3, 1)]
    blocks = []
    for (cin, cout, k, s) in cfg:
        key, *ks = jax.random.split(key, 7)
        b_dw = 1.0 / (1 * k) ** 0.5
        b_pw = 1.0 / cin ** 0.5
        blk = {
            "wdw": jax.random.uniform(ks[0], (k, cin), jnp.float32, -b_dw, b_dw),
            "bdw": jax.random.uniform(ks[1], (cin,), jnp.float32, -b_dw, b_dw),
            "wpw": jax.random.uniform(ks[2], (cin, cout), jnp.float32, -b_pw, b_pw),
            "bpw": jax.random.uniform(ks[3], (cout,), jnp.float32, -b_pw, b_pw),
            "bn_gamma": jnp.ones((cout,), jnp.float32),
            "bn_beta": jnp.zeros((cout,), jnp.float32),
            "bn_mean": jnp.zeros((cout,), jnp.float32),
            "bn_var": jnp.ones((cout,), jnp.float32),
        }
        if s != 1 or cin != cout:
            blk.update({
                "wsc": jax.random.uniform(ks[4], (cin, cout), jnp.float32, -b_pw, b_pw),
                "bsc": jax.random.uniform(ks[5], (cout,), jnp.float32, -b_pw, b_pw),
                "sc_gamma": jnp.ones((cout,), jnp.float32),
                "sc_beta": jnp.zeros((cout,), jnp.float32),
                "sc_mean": jnp.zeros((cout,), jnp.float32),
                "sc_var": jnp.ones((cout,), jnp.float32),
            })
        blocks.append(blk)
    c4, c2 = 4 * channel, 2 * channel
    key, k1, k2, k3, k4 = jax.random.split(key, 5)
    head_p = {
        "w1": jax.random.uniform(k1, (c4, c2), jnp.float32, -1 / c4 ** 0.5, 1 / c4 ** 0.5),
        "b1": jax.random.uniform(k2, (c2,), jnp.float32, -1 / c4 ** 0.5, 1 / c4 ** 0.5),
        "w2": jax.random.uniform(k3, (c2, 2), jnp.float32, -1 / c2 ** 0.5, 1 / c2 ** 0.5),
        "b2": jax.random.uniform(k4, (2,), jnp.float32, -1 / c2 ** 0.5, 1 / c2 ** 0.5),
    }
    return cfg, blocks, head_p


if __name__ == "__main__":
    key = jax.random.PRNGKey(0)
    pkey, xkey = jax.random.split(key)
    channel = 4
    cfg, blocks, head_p = init_params(pkey, channel)

    # PyTorch Conv1d-style input: (batch=2, channels=4, length=64)
    x = jax.random.normal(xkey, (2, channel, 64), jnp.float32)

    fwd = jax.jit(lambda inp: nirs_rescnn_forward(inp, cfg, blocks, head_p))
    probs, feat = fwd(x)
    jax.block_until_ready((probs, feat))

    assert probs.shape == (2, 2)
    assert feat.shape == (2, 4 * channel)
    assert bool(jnp.all(jnp.isfinite(probs))) and bool(jnp.all(jnp.isfinite(feat)))
    # softmax rows sum to ~1 (approx EUP reciprocal => relaxed tolerance)
    assert bool(jnp.all(jnp.abs(jnp.sum(probs, axis=-1) - 1.0) < 5e-3))
    print("KERNEL_OK")
</pallas_src>

<mosaic_0001>
module attributes {stable_mosaic.version = 11 : i64} {
  func.func @kernel(%arg0: memref<2x64x4xf32, #tpu.memory_space<vmem>>, %arg1: memref<9x4xf32, #tpu.memory_space<vmem>>, %arg2: memref<1x4xf32, #tpu.memory_space<vmem>>, %arg3: memref<4x8xf32, #tpu.memory_space<vmem>>, %arg4: memref<1x8xf32, #tpu.memory_space<vmem>>, %arg5: memref<4x8xf32, #tpu.memory_space<vmem>>, %arg6: memref<1x8xf32, #tpu.memory_space<vmem>>, %arg7: memref<3x8xf32, #tpu.memory_space<vmem>>, %arg8: memref<1x8xf32, #tpu.memory_space<vmem>>, %arg9: memref<8x8xf32, #tpu.memory_space<vmem>>, %arg10: memref<1x8xf32, #tpu.memory_space<vmem>>, %arg11: memref<3x8xf32, #tpu.memory_space<vmem>>, %arg12: memref<1x8xf32, #tpu.memory_space<vmem>>, %arg13: memref<8x8xf32, #tpu.memory_space<vmem>>, %arg14: memref<1x8xf32, #tpu.memory_space<vmem>>, %arg15: memref<9x8xf32, #tpu.memory_space<vmem>>, %arg16: memref<1x8xf32, #tpu.memory_space<vmem>>, %arg17: memref<8x16xf32, #tpu.memory_space<vmem>>, %arg18: memref<1x16xf32, #tpu.memory_space<vmem>>, %arg19: memref<8x16xf32, #tpu.memory_space<vmem>>, %arg20: memref<1x16xf32, #tpu.memory_space<vmem>>, %arg21: memref<3x16xf32, #tpu.memory_space<vmem>>, %arg22: memref<1x16xf32, #tpu.memory_space<vmem>>, %arg23: memref<16x16xf32, #tpu.memory_space<vmem>>, %arg24: memref<1x16xf32, #tpu.memory_space<vmem>>, %arg25: memref<3x16xf32, #tpu.memory_space<vmem>>, %arg26: memref<1x16xf32, #tpu.memory_space<vmem>>, %arg27: memref<16x16xf32, #tpu.memory_space<vmem>>, %arg28: memref<1x16xf32, #tpu.memory_space<vmem>>, %arg29: memref<16x8xf32, #tpu.memory_space<vmem>>, %arg30: memref<1x8xf32, #tpu.memory_space<vmem>>, %arg31: memref<8x2xf32, #tpu.memory_space<vmem>>, %arg32: memref<1x2xf32, #tpu.memory_space<vmem>>, %arg33: memref<2x2xf32, #tpu.memory_space<vmem>>, %arg34: memref<2x16xf32, #tpu.memory_space<vmem>>, %arg35: memref<2x18x4x4xf32, #tpu.memory_space<vmem>>, %arg36: memref<2x18x8xf32, #tpu.memory_space<vmem>>, %arg37: memref<2x18x8xf32, #tpu.memory_space<vmem>>, %arg38: memref<2x6x4x8xf32, #tpu.memory_space<vmem>>, %arg39: memref<2x6x16xf32, #tpu.memory_space<vmem>>, %arg40: memref<2x6x16xf32, #tpu.memory_space<vmem>>) attributes {dimension_semantics = [], scalar_prefetch = 0 : i64, scratch_operands = 6 : i64, tpu.core_type = #tpu.core_type<tc>} {
    %c0 = arith.constant 0 : index
    %c0_0 = arith.constant 0 : index
    %c0_1 = arith.constant 0 : index
    %0 = vector.load %arg0[%c0, %c0_0, %c0_1] : memref<2x64x4xf32, #tpu.memory_space<vmem>>, vector<2x64x4xf32>
    %cst = arith.constant 0.000000e+00 : f32
    %1 = vector.broadcast %cst : f32 to vector<2x18x4x4xf32>
    %c0_2 = arith.constant 0 : index
    %c0_3 = arith.constant 0 : index
    %c0_4 = arith.constant 0 : index
    %c0_5 = arith.constant 0 : index
    %2 = vector.load %arg35[%c0_2, %c0_3, %c0_4, %c0_5] : memref<2x18x4x4xf32, #tpu.memory_space<vmem>>, vector<2x18x4x4xf32>
    tpu.vector_store %arg35[%c0_2, %c0_3, %c0_4, %c0_5], %1 {strides = array<i32>} : memref<2x18x4x4xf32, #tpu.memory_space<vmem>>, vector<2x18x4x4xf32>,
    %3 = vector.extract_strided_slice %0 {offsets = [0, 0, 0], sizes = [2, 4, 4], strides = [1, 1, 1]} : vector<2x64x4xf32> to vector<2x4x4xf32>
    %c0_6 = arith.constant 0 : index
    %c1 = arith.constant 1 : index
    %c0_7 = arith.constant 0 : index
    %c0_8 = arith.constant 0 : index
    %4 = vector.load %arg35[%c0_6, %c1, %c0_7, %c0_8] : memref<2x18x4x4xf32, #tpu.memory_space<vmem>>, vector<2x1x4x4xf32>
    %5 = vector.shape_cast %4 : vector<2x1x4x4xf32> to vector<2x4x4xf32>
    %6 = vector.shape_cast %3 : vector<2x4x4xf32> to vector<2x1x4x4xf32>
    tpu.vector_store %arg35[%c0_6, %c1, %c0_7, %c0_8], %6 {strides = array<i32>} : memref<2x18x4x4xf32, #tpu.memory_space<vmem>>, vector<2x1x4x4xf32>,
    %7 = vector.extract_strided_slice %0 {offsets = [0, 4, 0], sizes = [2, 4, 4], strides = [1, 1, 1]} : vector<2x64x4xf32> to vector<2x4x4xf32>
    %c0_9 = arith.constant 0 : index
    %c2 = arith.constant 2 : index
    %c0_10 = arith.constant 0 : index
    %c0_11 = arith.constant 0 : index
    %8 = vector.load %arg35[%c0_9, %c2, %c0_10, %c0_11] : memref<2x18x4x4xf32, #tpu.memory_space<vmem>>, vector<2x1x4x4xf32>
    %9 = vector.shape_cast %8 : vector<2x1x4x4xf32> to vector<2x4x4xf32>
    %10 = vector.shape_cast %7 : vector<2x4x4xf32> to vector<2x1x4x4xf32>
    tpu.vector_store %arg35[%c0_9, %c2, %c0_10, %c0_11], %10 {strides = array<i32>} : memref<2x18x4x4xf32, #tpu.memory_space<vmem>>, vector<2x1x4x4xf32>,
    %11 = vector.extract_strided_slice %0 {offsets = [0, 8, 0], sizes = [2, 4, 4], strides = [1, 1, 1]} : vector<2x64x4xf32> to vector<2x4x4xf32>
    %c0_12 = arith.constant 0 : index
    %c3 = arith.constant 3 : index
    %c0_13 = arith.constant 0 : index
    %c0_14 = arith.constant 0 : index
    %12 = vector.load %arg35[%c0_12, %c3, %c0_13, %c0_14] : memref<2x18x4x4xf32, #tpu.memory_space<vmem>>, vector<2x1x4x4xf32>
    %13 = vector.shape_cast %12 : vector<2x1x4x4xf32> to vector<2x4x4xf32>
    %14 = vector.shape_cast %11 : vector<2x4x4xf32> to vector<2x1x4x4xf32>
    tpu.vector_store %arg35[%c0_12, %c3, %c0_13, %c0_14], %14 {strides = array<i32>} : memref<2x18x4x4xf32, #tpu.memory_space<vmem>>, vector<2x1x4x4xf32>,
    %15 = vector.extract_strided_slice %0 {offsets = [0, 12, 0], sizes = [2, 4, 4], strides = [1, 1, 1]} : vector<2x64x4xf32> to vector<2x4x4xf32>
    %c0_15 = arith.constant 0 : index
    %c4 = arith.constant 4 : index
    %c0_16 = arith.constant 0 : index
    %c0_17 = arith.constant 0 : index
    %16 = vector.load %arg35[%c0_15, %c4, %c0_16, %c0_17] : memref<2x18x4x4xf32, #tpu.memory_space<vmem>>, vector<2x1x4x4xf32>
    %17 = vector.shape_cast %16 : vector<2x1x4x4xf32> to vector<2x4x4xf32>
    %18 = vector.shape_cast %15 : vector<2x4x4xf32> to vector<2x1x4x4xf32>
    tpu.vector_store %arg35[%c0_15, %c4, %c0_16, %c0_17], %18 {strides = array<i32>} : memref<2x18x4x4xf32, #tpu.memory_space<vmem>>, vector<2x1x4x4xf32>,
    %19 = vector.extract_strided_slice %0 {offsets = [0, 16, 0], sizes = [2, 4, 4], strides = [1, 1, 1]} : vector<2x64x4xf32> to vector<2x4x4xf32>
    %c0_18 = arith.constant 0 : index
    %c5 = arith.constant 5 : index
    %c0_19 = arith.constant 0 : index
    %c0_20 = arith.constant 0 : index
    %20 = vector.load %arg35[%c0_18, %c5, %c0_19, %c0_20] : memref<2x18x4x4xf32, #tpu.memory_space<vmem>>, vector<2x1x4x4xf32>
    %21 = vector.shape_cast %20 : vector<2x1x4x4xf32> to vector<2x4x4xf32>
    %22 = vector.shape_cast %19 : vector<2x4x4xf32> to vector<2x1x4x4xf32>
    tpu.vector_store %arg35[%c0_18, %c5, %c0_19, %c0_20], %22 {strides = array<i32>} : memref<2x18x4x4xf32, #tpu.memory_space<vmem>>, vector<2x1x4x4xf32>,
    %23 = vector.extract_strided_slice %0 {offsets = [0, 20, 0], sizes = [2, 4, 4], strides = [1, 1, 1]} : vector<2x64x4xf32> to vector<2x4x4xf32>
    %c0_21 = arith.constant 0 : index
    %c6 = arith.constant 6 : index
    %c0_22 = arith.constant 0 : index
    %c0_23 = arith.constant 0 : index
    %24 = vector.load %arg35[%c0_21, %c6, %c0_22, %c0_23] : memref<2x18x4x4xf32, #tpu.memory_space<vmem>>, vector<2x1x4x4xf32>
    %25 = vector.shape_cast %24 : vector<2x1x4x4xf32> to vector<2x4x4xf32>
    %26 = vector.shape_cast %23 : vector<2x4x4xf32> to vector<2x1x4x4xf32>
    tpu.vector_store %arg35[%c0_21, %c6, %c0_22, %c0_23], %26 {strides = array<i32>} : memref<2x18x4x4xf32, #tpu.memory_space<vmem>>, vector<2x1x4x4xf32>,
    %27 = vector.extract_strided_slice %0 {offsets = [0, 24, 0], sizes = [2, 4, 4], strides = [1, 1, 1]} : vector<2x64x4xf32> to vector<2x4x4xf32>
    %c0_24 = arith.constant 0 : index
    %c7 = arith.constant 7 : index
    %c0_25 = arith.constant 0 : index
    %c0_26 = arith.constant 0 : index
    %28 = vector.load %arg35[%c0_24, %c7, %c0_25, %c0_26] : memref<2x18x4x4xf32, #tpu.memory_space<vmem>>, vector<2x1x4x4xf32>
    %29 = vector.shape_cast %28 : vector<2x1x4x4xf32> to vector<2x4x4xf32>
    %30 = vector.shape_cast %27 : vector<2x4x4xf32> to vector<2x1x4x4xf32>
    tpu.vector_store %arg35[%c0_24, %c7, %c0_25, %c0_26], %30 {strides = array<i32>} : memref<2x18x4x4xf32, #tpu.memory_space<vmem>>, vector<2x1x4x4xf32>,
    %31 = vector.extract_strided_slice %0 {offsets = [0, 28, 0], sizes = [2, 4, 4], strides = [1, 1, 1]} : vector<2x64x4xf32> to vector<2x4x4xf32>
    %c0_27 = arith.constant 0 : index
    %c8 = arith.constant 8 : index
    %c0_28 = arith.constant 0 : index
    %c0_29 = arith.constant 0 : index
    %32 = vector.load %arg35[%c0_27, %c8, %c0_28, %c0_29] : memref<2x18x4x4xf32, #tpu.memory_space<vmem>>, vector<2x1x4x4xf32>
    %33 = vector.shape_cast %32 : vector<2x1x4x4xf32> to vector<2x4x4xf32>
    %34 = vector.shape_cast %31 : vector<2x4x4xf32> to vector<2x1x4x4xf32>
    tpu.vector_store %arg35[%c0_27, %c8, %c0_28, %c0_29], %34 {strides = array<i32>} : memref<2x18x4x4xf32, #tpu.memory_space<vmem>>, vector<2x1x4x4xf32>,
    %35 = vector.extract_strided_slice %0 {offsets = [0, 32, 0], sizes = [2, 4, 4], strides = [1, 1, 1]} : vector<2x64x4xf32> to vector<2x4x4xf32>
    %c0_30 = arith.constant 0 : index
    %c9 = arith.constant 9 : index
    %c0_31 = arith.constant 0 : index
    %c0_32 = arith.constant 0 : index
    %36 = vector.load %arg35[%c0_30, %c9, %c0_31, %c0_32] : memref<2x18x4x4xf32, #tpu.memory_space<vmem>>, vector<2x1x4x4xf32>
    %37 = vector.shape_cast %36 : vector<2x1x4x4xf32> to vector<2x4x4xf32>
    %38 = vector.shape_cast %35 : vector<2x4x4xf32> to vector<2x1x4x4xf32>
    tpu.vector_store %arg35[%c0_30, %c9, %c0_31, %c0_32], %38 {strides = array<i32>} : memref<2x18x4x4xf32, #tpu.memory_space<vmem>>, vector<2x1x4x4xf32>,
    %39 = vector.extract_strided_slice %0 {offsets = [0, 36, 0], sizes = [2, 4, 4], strides = [1, 1, 1]} : vector<2x64x4xf32> to vector<2x4x4xf32>
    %c0_33 = arith.constant 0 : index
    %c10 = arith.constant 10 : index
    %c0_34 = arith.constant 0 : index
    %c0_35 = arith.constant 0 : index
    %40 = vector.load %arg35[%c0_33, %c10, %c0_34, %c0_35] : memref<2x18x4x4xf32, #tpu.memory_space<vmem>>, vector<2x1x4x4xf32>
    %41 = vector.shape_cast %40 : vector<2x1x4x4xf32> to vector<2x4x4xf32>
    %42 = vector.shape_cast %39 : vector<2x4x4xf32> to vector<2x1x4x4xf32>
    tpu.vector_store %arg35[%c0_33, %c10, %c0_34, %c0_35], %42 {strides = array<i32>} : memref<2x18x4x4xf32, #tpu.memory_space<vmem>>, vector<2x1x4x4xf32>,
    %43 = vector.extract_strided_slice %0 {offsets = [0, 40, 0], sizes = [2, 4, 4], strides = [1, 1, 1]} : vector<2x64x4xf32> to vector<2x4x4xf32>
    %c0_36 = arith.constant 0 : index
    %c11 = arith.constant 11 : index
    %c0_37 = arith.constant 0 : index
    %c0_38 = arith.constant 0 : index
    %44 = vector.load %arg35[%c0_36, %c11, %c0_37, %c0_38] : memref<2x18x4x4xf32, #tpu.memory_space<vmem>>, vector<2x1x4x4xf32>
    %45 = vector.shape_cast %44 : vector<2x1x4x4xf32> to vector<2x4x4xf32>
    %46 = vector.shape_cast %43 : vector<2x4x4xf32> to vector<2x1x4x4xf32>
    tpu.vector_store %arg35[%c0_36, %c11, %c0_37, %c0_38], %46 {strides = array<i32>} : memref<2x18x4x4xf32, #tpu.memory_space<vmem>>, vector<2x1x4x4xf32>,
    %47 = vector.extract_strided_slice %0 {offsets = [0, 44, 0], sizes = [2, 4, 4], strides = [1, 1, 1]} : vector<2x64x4xf32> to vector<2x4x4xf32>
    %c0_39 = arith.constant 0 : index
    %c12 = arith.constant 12 : index
    %c0_40 = arith.constant 0 : index
    %c0_41 = arith.constant 0 : index
    %48 = vector.load %arg35[%c0_39, %c12, %c0_40, %c0_41] : memref<2x18x4x4xf32, #tpu.memory_space<vmem>>, vector<2x1x4x4xf32>
    %49 = vector.shape_cast %48 : vector<2x1x4x4xf32> to vector<2x4x4xf32>
    %50 = vector.shape_cast %47 : vector<2x4x4xf32> to vector<2x1x4x4xf32>
    tpu.vector_store %arg35[%c0_39, %c12, %c0_40, %c0_41], %50 {strides = array<i32>} : memref<2x18x4x4xf32, #tpu.memory_space<vmem>>, vector<2x1x4x4xf32>,
    %51 = vector.extract_strided_slice %0 {offsets = [0, 48, 0], sizes = [2, 4, 4], strides = [1, 1, 1]} : vector<2x64x4xf32> to vector<2x4x4xf32>
    %c0_42 = arith.constant 0 : index
    %c13 = arith.constant 13 : index
    %c0_43 = arith.constant 0 : index
    %c0_44 = arith.constant 0 : index
    %52 = vector.load %arg35[%c0_42, %c13, %c0_43, %c0_44] : memref<2x18x4x4xf32, #tpu.memory_space<vmem>>, vector<2x1x4x4xf32>
    %53 = vector.shape_cast %52 : vector<2x1x4x4xf32> to vector<2x4x4xf32>
    %54 = vector.shape_cast %51 : vector<2x4x4xf32> to vector<2x1x4x4xf32>
    tpu.vector_store %arg35[%c0_42, %c13, %c0_43, %c0_44], %54 {strides = array<i32>} : memref<2x18x4x4xf32, #tpu.memory_space<vmem>>, vector<2x1x4x4xf32>,
    %55 = vector.extract_strided_slice %0 {offsets = [0, 52, 0], sizes = [2, 4, 4], strides = [1, 1, 1]} : vector<2x64x4xf32> to vector<2x4x4xf32>
    %c0_45 = arith.constant 0 : index
    %c14 = arith.constant 14 : index
    %c0_46 = arith.constant 0 : index
    %c0_47 = arith.constant 0 : index
    %56 = vector.load %arg35[%c0_45, %c14, %c0_46, %c0_47] : memref<2x18x4x4xf32, #tpu.memory_space<vmem>>, vector<2x1x4x4xf32>
    %57 = vector.shape_cast %56 : vector<2x1x4x4xf32> to vector<2x4x4xf32>
    %58 = vector.shape_cast %55 : vector<2x4x4xf32> to vector<2x1x4x4xf32>
    tpu.vector_store %arg35[%c0_45, %c14, %c0_46, %c0_47], %58 {strides = array<i32>} : memref<2x18x4x4xf32, #tpu.memory_space<vmem>>, vector<2x1x4x4xf32>,
    %59 = vector.extract_strided_slice %0 {offsets = [0, 56, 0], sizes = [2, 4, 4], strides = [1, 1, 1]} : vector<2x64x4xf32> to vector<2x4x4xf32>
    %c0_48 = arith.constant 0 : index
    %c15 = arith.constant 15 : index
    %c0_49 = arith.constant 0 : index
    %c0_50 = arith.constant 0 : index
    %60 = vector.load %arg35[%c0_48, %c15, %c0_49, %c0_50] : memref<2x18x4x4xf32, #tpu.memory_space<vmem>>, vector<2x1x4x4xf32>
    %61 = vector.shape_cast %60 : vector<2x1x4x4xf32> to vector<2x4x4xf32>
    %62 = vector.shape_cast %59 : vector<2x4x4xf32> to vector<2x1x4x4xf32>
    tpu.vector_store %arg35[%c0_48, %c15, %c0_49, %c0_50], %62 {strides = array<i32>} : memref<2x18x4x4xf32, #tpu.memory_space<vmem>>, vector<2x1x4x4xf32>,
    %63 = vector.extract_strided_slice %0 {offsets = [0, 60, 0], sizes = [2, 4, 4], strides = [1, 1, 1]} : vector<2x64x4xf32> to vector<2x4x4xf32>
    %c0_51 = arith.constant 0 : index
    %c16 = arith.constant 16 : index
    %c0_52 = arith.constant 0 : index
    %c0_53 = arith.constant 0 : index
    %64 = vector.load %arg35[%c0_51, %c16, %c0_52, %c0_53] : memref<2x18x4x4xf32, #tpu.memory_space<vmem>>, vector<2x1x4x4xf32>
    %65 = vector.shape_cast %64 : vector<2x1x4x4xf32> to vector<2x4x4xf32>
    %66 = vector.shape_cast %63 : vector<2x4x4xf32> to vector<2x1x4x4xf32>
    tpu.vector_store %arg35[%c0_51, %c16, %c0_52, %c0_53], %66 {strides = array<i32>} : memref<2x18x4x4xf32, #tpu.memory_space<vmem>>, vector<2x1x4x4xf32>,
    %c0_54 = arith.constant 0 : index
    %c0_55 = arith.constant 0 : index
    %c0_56 = arith.constant 0 : index
    %c0_57 = arith.constant 0 : index
    %67 = vector.load %arg35[%c0_54, %c0_55, %c0_56, %c0_57] : memref<2x18x4x4xf32, #tpu.memory_space<vmem>>, vector<2x18x4x4xf32>
    %68 = vector.extract_strided_slice %67 {offsets = [0, 0, 0, 0], sizes = [2, 16, 1, 4], strides = [1, 1, 1, 1]} : vector<2x18x4x4xf32> to vector<2x16x1x4xf32>
    %69 = vector.shape_cast %68 : vector<2x16x1x4xf32> to vector<2x16x4xf32>
    %70 = vector.extract_strided_slice %67 {offsets = [0, 0, 1, 0], sizes = [2, 16, 1, 4], strides = [1, 1, 1, 1]} : vector<2x18x4x4xf32> to vector<2x16x1x4xf32>
    %71 = vector.shape_cast %70 : vector<2x16x1x4xf32> to vector<2x16x4xf32>
    %72 = vector.extract_strided_slice %67 {offsets = [0, 0, 2, 0], sizes = [2, 16, 1, 4], strides = [1, 1, 1, 1]} : vector<2x18x4x4xf32> to vector<2x16x1x4xf32>
    %73 = vector.shape_cast %72 : vector<2x16x1x4xf32> to vector<2x16x4xf32>
    %74 = vector.extract_strided_slice %67 {offsets = [0, 0, 3, 0], sizes = [2, 16, 1, 4], strides = [1, 1, 1, 1]} : vector<2x18x4x4xf32> to vector<2x16x1x4xf32>
    %75 = vector.shape_cast %74 : vector<2x16x1x4xf32> to vector<2x16x4xf32>
    %76 = vector.extract_strided_slice %67 {offsets = [0, 1, 0, 0], sizes = [2, 16, 1, 4], strides = [1, 1, 1, 1]} : vector<2x18x4x4xf32> to vector<2x16x1x4xf32>
    %77 = vector.shape_cast %76 : vector<2x16x1x4xf32> to vector<2x16x4xf32>
    %78 = vector.extract_strided_slice %67 {offsets = [0, 1, 1, 0], sizes = [2, 16, 1, 4], strides = [1, 1, 1, 1]} : vector<2x18x4x4xf32> to vector<2x16x1x4xf32>
    %79 = vector.shape_cast %78 : vector<2x16x1x4xf32> to vector<2x16x4xf32>
    %80 = vector.extract_strided_slice %67 {offsets = [0, 1, 2, 0], sizes = [2, 16, 1, 4], strides = [1, 1, 1, 1]} : vector<2x18x4x4xf32> to vector<2x16x1x4xf32>
    %81 = vector.shape_cast %80 : vector<2x16x1x4xf32> to vector<2x16x4xf32>
    %82 = vector.extract_strided_slice %67 {offsets = [0, 1, 3, 0], sizes = [2, 16, 1, 4], strides = [1, 1, 1, 1]} : vector<2x18x4x4xf32> to vector<2x16x1x4xf32>
    %83 = vector.shape_cast %82 : vector<2x16x1x4xf32> to vector<2x16x4xf32>
    %84 = vector.extract_strided_slice %67 {offsets = [0, 2, 0, 0], sizes = [2, 16, 1, 4], strides = [1, 1, 1, 1]} : vector<2x18x4x4xf32> to vector<2x16x1x4xf32>
    %85 = vector.shape_cast %84 : vector<2x16x1x4xf32> to vector<2x16x4xf32>
    %86 = vector.extract_strided_slice %67 {offsets = [0, 1, 0, 0], sizes = [2, 16, 1, 4], strides = [1, 1, 1, 1]} : vector<2x18x4x4xf32> to vector<2x16x1x4xf32>
    %87 = vector.shape_cast %86 : vector<2x16x1x4xf32> to vector<2x16x4xf32>
    %c0_58 = arith.constant 0 : index
    %c0_59 = arith.constant 0 : index
    %88 = vector.load %arg1[%c0_58, %c0_59] : memref<9x4xf32, #tpu.memory_space<vmem>>, vector<9x4xf32>
    %cst_60 = arith.constant 0.000000e+00 : f32
    %89 = vector.broadcast %cst_60 : f32 to vector<2x16x4xf32>
    %90 = vector.extract_strided_slice %88 {offsets = [0, 0], sizes = [1, 4], strides = [1, 1]} : vector<9x4xf32> to vector<1x4xf32>
    %91 = vector.shape_cast %90 : vector<1x4xf32> to vector<1x1x4xf32>
    %92 = vector.broadcast %91 : vector<1x1x4xf32> to vector<2x16x4xf32>
    %93 = arith.mulf %69, %92 : vector<2x16x4xf32>
    %94 = arith.addf %89, %93 : vector<2x16x4xf32>
    %95 = vector.extract_strided_slice %88 {offsets = [1, 0], sizes = [1, 4], strides = [1, 1]} : vector<9x4xf32> to vector<1x4xf32>
    %96 = vector.shape_cast %95 : vector<1x4xf32> to vector<1x1x4xf32>
    %97 = vector.broadcast %96 : vector<1x1x4xf32> to vector<2x16x4xf32>
    %98 = arith.mulf %71, %97 : vector<2x16x4xf32>
    %99 = arith.addf %94, %98 : vector<2x16x4xf32>
    %100 = vector.extract_strided_slice %88 {offsets = [2, 0], sizes = [1, 4], strides = [1, 1]} : vector<9x4xf32> to vector<1x4xf32>
    %101 = vector.shape_cast %100 : vector<1x4xf32> to vector<1x1x4xf32>
    %102 = vector.broadcast %101 : vector<1x1x4xf32> to vector<2x16x4xf32>
    %103 = arith.mulf %73, %102 : vector<2x16x4xf32>
    %104 = arith.addf %99, %103 : vector<2x16x4xf32>
    %105 = vector.extract_strided_slice %88 {offsets = [3, 0], sizes = [1, 4], strides = [1, 1]} : vector<9x4xf32> to vector<1x4xf32>
    %106 = vector.shape_cast %105 : vector<1x4xf32> to vector<1x1x4xf32>
    %107 = vector.broadcast %106 : vector<1x1x4xf32> to vector<2x16x4xf32>
    %108 = arith.mulf %75, %107 : vector<2x16x4xf32>
    %109 = arith.addf %104, %108 : vector<2x16x4xf32>
    %110 = vector.extract_strided_slice %88 {offsets = [4, 0], sizes = [1, 4], strides = [1, 1]} : vector<9x4xf32> to vector<1x4xf32>
    %111 = vector.shape_cast %110 : vector<1x4xf32> to vector<1x1x4xf32>
    %112 = vector.broadcast %111 : vector<1x1x4xf32> to vector<2x16x4xf32>
    %113 = arith.mulf %77, %112 : vector<2x16x4xf32>
    %114 = arith.addf %109, %113 : vector<2x16x4xf32>
    %115 = vector.extract_strided_slice %88 {offsets = [5, 0], sizes = [1, 4], strides = [1, 1]} : vector<9x4xf32> to vector<1x4xf32>
    %116 = vector.shape_cast %115 : vector<1x4xf32> to vector<1x1x4xf32>
    %117 = vector.broadcast %116 : vector<1x1x4xf32> to vector<2x16x4xf32>
    %118 = arith.mulf %79, %117 : vector<2x16x4xf32>
    %119 = arith.addf %114, %118 : vector<2x16x4xf32>
    %120 = vector.extract_strided_slice %88 {offsets = [6, 0], sizes = [1, 4], strides = [1, 1]} : vector<9x4xf32> to vector<1x4xf32>
    %121 = vector.shape_cast %120 : vector<1x4xf32> to vector<1x1x4xf32>
    %122 = vector.broadcast %121 : vector<1x1x4xf32> to vector<2x16x4xf32>
    %123 = arith.mulf %81, %122 : vector<2x16x4xf32>
    %124 = arith.addf %119, %123 : vector<2x16x4xf32>
    %125 = vector.extract_strided_slice %88 {offsets = [7, 0], sizes = [1, 4], strides = [1, 1]} : vector<9x4xf32> to vector<1x4xf32>
    %126 = vector.shape_cast %125 : vector<1x4xf32> to vector<1x1x4xf32>
    %127 = vector.broadcast %126 : vector<1x1x4xf32> to vector<2x16x4xf32>
    %128 = arith.mulf %83, %127 : vector<2x16x4xf32>
    %129 = arith.addf %124, %128 : vector<2x16x4xf32>
    %130 = vector.extract_strided_slice %88 {offsets = [8, 0], sizes = [1, 4], strides = [1, 1]} : vector<9x4xf32> to vector<1x4xf32>
    %131 = vector.shape_cast %130 : vector<1x4xf32> to vector<1x1x4xf32>
    %132 = vector.broadcast %131 : vector<1x1x4xf32> to vector<2x16x4xf32>
    %133 = arith.mulf %85, %132 : vector<2x16x4xf32>
    %134 = arith.addf %129, %133 : vector<2x16x4xf32>
    %135 = vector.shape_cast %134 : vector<2x16x4xf32> to vector<32x4xf32>
    %c0_61 = arith.constant 0 : index
    %c0_62 = arith.constant 0 : index
    %136 = vector.load %arg2[%c0_61, %c0_62] : memref<1x4xf32, #tpu.memory_space<vmem>>, vector<1x4xf32>
    %137 = vector.broadcast %136 : vector<1x4xf32> to vector<32x4xf32>
    %138 = arith.addf %135, %137 : vector<32x4xf32>
    %c0_63 = arith.constant 0 : index
    %c0_64 = arith.constant 0 : index
    %139 = vector.load %arg3[%c0_63, %c0_64] : memref<4x8xf32, #tpu.memory_space<vmem>>, vector<4x8xf32>
    %cst_65 = arith.constant dense<0.000000e+00> : vector<32x8xf32>
    %140 = tpu.matmul %138, %139, %cst_65 {dimension_numbers = #tpu.dot_dimension_numbers<[1], [0], [0], [1], [0, 0, 1, 1], [], []>} : vector<32x4xf32>, vector<4x8xf32>, vector<32x8xf32> -> vector<32x8xf32>
    %c0_66 = arith.constant 0 : index
    %c0_67 = arith.constant 0 : index
    %141 = vector.load %arg4[%c0_66, %c0_67] : memref<1x8xf32, #tpu.memory_space<vmem>>, vector<1x8xf32>
    %142 = vector.broadcast %141 : vector<1x8xf32> to vector<32x8xf32>
    %143 = arith.addf %140, %142 : vector<32x8xf32>
    %144 = vector.shape_cast %87 : vector<2x16x4xf32> to vector<32x4xf32>
    %c0_68 = arith.constant 0 : index
    %c0_69 = arith.constant 0 : index
    %145 = vector.load %arg5[%c0_68, %c0_69] : memref<4x8xf32, #tpu.memory_space<vmem>>, vector<4x8xf32>
    %cst_70 = arith.constant dense<0.000000e+00> : vector<32x8xf32>
    %146 = tpu.matmul %144, %145, %cst_70 {dimension_numbers = #tpu.dot_dimension_numbers<[1], [0], [0], [1], [0, 0, 1, 1], [], []>} : vector<32x4xf32>, vector<4x8xf32>, vector<32x8xf32> -> vector<32x8xf32>
    %c0_71 = arith.constant 0 : index
    %c0_72 = arith.constant 0 : index
    %147 = vector.load %arg6[%c0_71, %c0_72] : memref<1x8xf32, #tpu.memory_space<vmem>>, vector<1x8xf32>
    %148 = vector.broadcast %147 : vector<1x8xf32> to vector<32x8xf32>
    %149 = arith.addf %146, %148 : vector<32x8xf32>
    %150 = arith.addf %143, %149 : vector<32x8xf32>
    %cst_73 = arith.constant 0.000000e+00 : f32
    %cst_74 = arith.constant 6.000000e+00 : f32
    %151 = vector.broadcast %cst_73 : f32 to vector<32x8xf32>
    %152 = arith.maximumf %151, %150 : vector<32x8xf32>
    %153 = vector.broadcast %cst_74 : f32 to vector<32x8xf32>
    %154 = arith.minimumf %153, %152 : vector<32x8xf32>
    %155 = vector.shape_cast %154 : vector<32x8xf32> to vector<2x16x8xf32>
    %cst_75 = arith.constant 0.000000e+00 : f32
    %156 = vector.broadcast %cst_75 : f32 to vector<2x18x8xf32>
    %c0_76 = arith.constant 0 : index
    %c0_77 = arith.constant 0 : index
    %c0_78 = arith.constant 0 : index
    %157 = vector.load %arg36[%c0_76, %c0_77, %c0_78] : memref<2x18x8xf32, #tpu.memory_space<vmem>>, vector<2x18x8xf32>
    tpu.vector_store %arg36[%c0_76, %c0_77, %c0_78], %156 {strides = array<i32>} : memref<2x18x8xf32, #tpu.memory_space<vmem>>, vector<2x18x8xf32>,
    %c0_79 = arith.constant 0 : index
    %c1_80 = arith.constant 1 : index
    %c0_81 = arith.constant 0 : index
    %158 = vector.load %arg36[%c0_79, %c1_80, %c0_81] : memref<2x18x8xf32, #tpu.memory_space<vmem>>, vector<2x16x8xf32>
    tpu.vector_store %arg36[%c0_79, %c1_80, %c0_81], %155 {strides = array<i32>} : memref<2x18x8xf32, #tpu.memory_space<vmem>>, vector<2x16x8xf32>,
    %c0_82 = arith.constant 0 : index
    %c0_83 = arith.constant 0 : index
    %c0_84 = arith.constant 0 : index
    %159 = vector.load %arg36[%c0_82, %c0_83, %c0_84] : memref<2x18x8xf32, #tpu.memory_space<vmem>>, vector<2x18x8xf32>
    %160 = vector.extract_strided_slice %159 {offsets = [0, 0, 0], sizes = [2, 16, 8], strides = [1, 1, 1]} : vector<2x18x8xf32> to vector<2x16x8xf32>
    %161 = vector.extract_strided_slice %159 {offsets = [0, 1, 0], sizes = [2, 16, 8], strides = [1, 1, 1]} : vector<2x18x8xf32> to vector<2x16x8xf32>
    %162 = vector.extract_strided_slice %159 {offsets = [0, 2, 0], sizes = [2, 16, 8], strides = [1, 1, 1]} : vector<2x18x8xf32> to vector<2x16x8xf32>
    %c0_85 = arith.constant 0 : index
    %c0_86 = arith.constant 0 : index
    %163 = vector.load %arg7[%c0_85, %c0_86] : memref<3x8xf32, #tpu.memory_space<vmem>>, vector<3x8xf32>
    %cst_87 = arith.constant 0.000000e+00 : f32
    %164 = vector.broadcast %cst_87 : f32 to vector<2x16x8xf32>
    %165 = vector.extract_strided_slice %163 {offsets = [0, 0], sizes = [1, 8], strides = [1, 1]} : vector<3x8xf32> to vector<1x8xf32>
    %166 = vector.shape_cast %165 : vector<1x8xf32> to vector<1x1x8xf32>
    %167 = vector.broadcast %166 : vector<1x1x8xf32> to vector<2x16x8xf32>
    %168 = arith.mulf %160, %167 : vector<2x16x8xf32>
    %169 = arith.addf %164, %168 : vector<2x16x8xf32>
    %170 = vector.extract_strided_slice %163 {offsets = [1, 0], sizes = [1, 8], strides = [1, 1]} : vector<3x8xf32> to vector<1x8xf32>
    %171 = vector.shape_cast %170 : vector<1x8xf32> to vector<1x1x8xf32>
    %172 = vector.broadcast %171 : vector<1x1x8xf32> to vector<2x16x8xf32>
    %173 = arith.mulf %161, %172 : vector<2x16x8xf32>
    %174 = arith.addf %169, %173 : vector<2x16x8xf32>
    %175 = vector.extract_strided_slice %163 {offsets = [2, 0], sizes = [1, 8], strides = [1, 1]} : vector<3x8xf32> to vector<1x8xf32>
    %176 = vector.shape_cast %175 : vector<1x8xf32> to vector<1x1x8xf32>
    %177 = vector.broadcast %176 : vector<1x1x8xf32> to vector<2x16x8xf32>
    %178 = arith.mulf %162, %177 : vector<2x16x8xf32>
    %179 = arith.addf %174, %178 : vector<2x16x8xf32>
    %180 = vector.shape_cast %179 : vector<2x16x8xf32> to vector<32x8xf32>
    %c0_88 = arith.constant 0 : index
    %c0_89 = arith.constant 0 : index
    %181 = vector.load %arg8[%c0_88, %c0_89] : memref<1x8xf32, #tpu.memory_space<vmem>>, vector<1x8xf32>
    %182 = vector.broadcast %181 : vector<1x8xf32> to vector<32x8xf32>
    %183 = arith.addf %180, %182 : vector<32x8xf32>
    %c0_90 = arith.constant 0 : index
    %c0_91 = arith.constant 0 : index
    %184 = vector.load %arg9[%c0_90, %c0_91] : memref<8x8xf32, #tpu.memory_space<vmem>>, vector<8x8xf32>
    %cst_92 = arith.constant dense<0.000000e+00> : vector<32x8xf32>
    %185 = tpu.matmul %183, %184, %cst_92 {dimension_numbers = #tpu.dot_dimension_numbers<[1], [0], [0], [1], [0, 0, 1, 1], [], []>} : vector<32x8xf32>, vector<8x8xf32>, vector<32x8xf32> -> vector<32x8xf32>
    %c0_93 = arith.constant 0 : index
    %c0_94 = arith.constant 0 : index
    %186 = vector.load %arg10[%c0_93, %c0_94] : memref<1x8xf32, #tpu.memory_space<vmem>>, vector<1x8xf32>
    %187 = vector.broadcast %186 : vector<1x8xf32> to vector<32x8xf32>
    %188 = arith.addf %185, %187 : vector<32x8xf32>
    %189 = vector.shape_cast %155 : vector<2x16x8xf32> to vector<32x8xf32>
    %190 = arith.addf %188, %189 : vector<32x8xf32>
    %cst_95 = arith.constant 0.000000e+00 : f32
    %cst_96 = arith.constant 6.000000e+00 : f32
    %191 = vector.broadcast %cst_95 : f32 to vector<32x8xf32>
    %192 = arith.maximumf %191, %190 : vector<32x8xf32>
    %193 = vector.broadcast %cst_96 : f32 to vector<32x8xf32>
    %194 = arith.minimumf %193, %192 : vector<32x8xf32>
    %195 = vector.shape_cast %194 : vector<32x8xf32> to vector<2x16x8xf32>
    %cst_97 = arith.constant 0.000000e+00 : f32
    %196 = vector.broadcast %cst_97 : f32 to vector<2x18x8xf32>
    %c0_98 = arith.constant 0 : index
    %c0_99 = arith.constant 0 : index
    %c0_100 = arith.constant 0 : index
    %197 = vector.load %arg37[%c0_98, %c0_99, %c0_100] : memref<2x18x8xf32, #tpu.memory_space<vmem>>, vector<2x18x8xf32>
    tpu.vector_store %arg37[%c0_98, %c0_99, %c0_100], %196 {strides = array<i32>} : memref<2x18x8xf32, #tpu.memory_space<vmem>>, vector<2x18x8xf32>,
    %c0_101 = arith.constant 0 : index
    %c1_102 = arith.constant 1 : index
    %c0_103 = arith.constant 0 : index
    %198 = vector.load %arg37[%c0_101, %c1_102, %c0_103] : memref<2x18x8xf32, #tpu.memory_space<vmem>>, vector<2x16x8xf32>
    tpu.vector_store %arg37[%c0_101, %c1_102, %c0_103], %195 {strides = array<i32>} : memref<2x18x8xf32, #tpu.memory_space<vmem>>, vector<2x16x8xf32>,
    %c0_104 = arith.constant 0 : index
    %c0_105 = arith.constant 0 : index
    %c0_106 = arith.constant 0 : index
    %199 = vector.load %arg37[%c0_104, %c0_105, %c0_106] : memref<2x18x8xf32, #tpu.memory_space<vmem>>, vector<2x18x8xf32>
    %200 = vector.extract_strided_slice %199 {offsets = [0, 0, 0], sizes = [2, 16, 8], strides = [1, 1, 1]} : vector<2x18x8xf32> to vector<2x16x8xf32>
    %201 = vector.extract_strided_slice %199 {offsets = [0, 1, 0], sizes = [2, 16, 8], strides = [1, 1, 1]} : vector<2x18x8xf32> to vector<2x16x8xf32>
    %202 = vector.extract_strided_slice %199 {offsets = [0, 2, 0], sizes = [2, 16, 8], strides = [1, 1, 1]} : vector<2x18x8xf32> to vector<2x16x8xf32>
    %c0_107 = arith.constant 0 : index
    %c0_108 = arith.constant 0 : index
    %203 = vector.load %arg11[%c0_107, %c0_108] : memref<3x8xf32, #tpu.memory_space<vmem>>, vector<3x8xf32>
    %cst_109 = arith.constant 0.000000e+00 : f32
    %204 = vector.broadcast %cst_109 : f32 to vector<2x16x8xf32>
    %205 = vector.extract_strided_slice %203 {offsets = [0, 0], sizes = [1, 8], strides = [1, 1]} : vector<3x8xf32> to vector<1x8xf32>
    %206 = vector.shape_cast %205 : vector<1x8xf32> to vector<1x1x8xf32>
    %207 = vector.broadcast %206 : vector<1x1x8xf32> to vector<2x16x8xf32>
    %208 = arith.mulf %200, %207 : vector<2x16x8xf32>
    %209 = arith.addf %204, %208 : vector<2x16x8xf32>
    %210 = vector.extract_strided_slice %203 {offsets = [1, 0], sizes = [1, 8], strides = [1, 1]} : vector<3x8xf32> to vector<1x8xf32>
    %211 = vector.shape_cast %210 : vector<1x8xf32> to vector<1x1x8xf32>
    %212 = vector.broadcast %211 : vector<1x1x8xf32> to vector<2x16x8xf32>
    %213 = arith.mulf %201, %212 : vector<2x16x8xf32>
    %214 = arith.addf %209, %213 : vector<2x16x8xf32>
    %215 = vector.extract_strided_slice %203 {offsets = [2, 0], sizes = [1, 8], strides = [1, 1]} : vector<3x8xf32> to vector<1x8xf32>
    %216 = vector.shape_cast %215 : vector<1x8xf32> to vector<1x1x8xf32>
    %217 = vector.broadcast %216 : vector<1x1x8xf32> to vector<2x16x8xf32>
    %218 = arith.mulf %202, %217 : vector<2x16x8xf32>
    %219 = arith.addf %214, %218 : vector<2x16x8xf32>
    %220 = vector.shape_cast %219 : vector<2x16x8xf32> to vector<32x8xf32>
    %c0_110 = arith.constant 0 : index
    %c0_111 = arith.constant 0 : index
    %221 = vector.load %arg12[%c0_110, %c0_111] : memref<1x8xf32, #tpu.memory_space<vmem>>, vector<1x8xf32>
    %222 = vector.broadcast %221 : vector<1x8xf32> to vector<32x8xf32>
    %223 = arith.addf %220, %222 : vector<32x8xf32>
    %c0_112 = arith.constant 0 : index
    %c0_113 = arith.constant 0 : index
    %224 = vector.load %arg13[%c0_112, %c0_113] : memref<8x8xf32, #tpu.memory_space<vmem>>, vector<8x8xf32>
    %cst_114 = arith.constant dense<0.000000e+00> : vector<32x8xf32>
    %225 = tpu.matmul %223, %224, %cst_114 {dimension_numbers = #tpu.dot_dimension_numbers<[1], [0], [0], [1], [0, 0, 1, 1], [], []>} : vector<32x8xf32>, vector<8x8xf32>, vector<32x8xf32> -> vector<32x8xf32>
    %c0_115 = arith.constant 0 : index
    %c0_116 = arith.constant 0 : index
    %226 = vector.load %arg14[%c0_115, %c0_116] : memref<1x8xf32, #tpu.memory_space<vmem>>, vector<1x8xf32>
    %227 = vector.broadcast %226 : vector<1x8xf32> to vector<32x8xf32>
    %228 = arith.addf %225, %227 : vector<32x8xf32>
    %229 = vector.shape_cast %195 : vector<2x16x8xf32> to vector<32x8xf32>
    %230 = arith.addf %228, %229 : vector<32x8xf32>
    %cst_117 = arith.constant 0.000000e+00 : f32
    %cst_118 = arith.constant 6.000000e+00 : f32
    %231 = vector.broadcast %cst_117 : f32 to vector<32x8xf32>
    %232 = arith.maximumf %231, %230 : vector<32x8xf32>
    %233 = vector.broadcast %cst_118 : f32 to vector<32x8xf32>
    %234 = arith.minimumf %233, %232 : vector<32x8xf32>
    %235 = vector.shape_cast %234 : vector<32x8xf32> to vector<2x16x8xf32>
    %cst_119 = arith.constant 0.000000e+00 : f32
    %236 = vector.broadcast %cst_119 : f32 to vector<2x6x4x8xf32>
    %c0_120 = arith.constant 0 : index
    %c0_121 = arith.constant 0 : index
    %c0_122 = arith.constant 0 : index
    %c0_123 = arith.constant 0 : index
    %237 = vector.load %arg38[%c0_120, %c0_121, %c0_122, %c0_123] : memref<2x6x4x8xf32, #tpu.memory_space<vmem>>, vector<2x6x4x8xf32>
    tpu.vector_store %arg38[%c0_120, %c0_121, %c0_122, %c0_123], %236 {strides = array<i32>} : memref<2x6x4x8xf32, #tpu.memory_space<vmem>>, vector<2x6x4x8xf32>,
    %238 = vector.extract_strided_slice %235 {offsets = [0, 0, 0], sizes = [2, 4, 8], strides = [1, 1, 1]} : vector<2x16x8xf32> to vector<2x4x8xf32>
    %c0_124 = arith.constant 0 : index
    %c1_125 = arith.constant 1 : index
    %c0_126 = arith.constant 0 : index
    %c0_127 = arith.constant 0 : index
    %239 = vector.load %arg38[%c0_124, %c1_125, %c0_126, %c0_127] : memref<2x6x4x8xf32, #tpu.memory_space<vmem>>, vector<2x1x4x8xf32>
    %240 = vector.shape_cast %239 : vector<2x1x4x8xf32> to vector<2x4x8xf32>
    %241 = vector.shape_cast %238 : vector<2x4x8xf32> to vector<2x1x4x8xf32>
    tpu.vector_store %arg38[%c0_124, %c1_125, %c0_126, %c0_127], %241 {strides = array<i32>} : memref<2x6x4x8xf32, #tpu.memory_space<vmem>>, vector<2x1x4x8xf32>,
    %242 = vector.extract_strided_slice %235 {offsets = [0, 4, 0], sizes = [2, 4, 8], strides = [1, 1, 1]} : vector<2x16x8xf32> to vector<2x4x8xf32>
    %c0_128 = arith.constant 0 : index
    %c2_129 = arith.constant 2 : index
    %c0_130 = arith.constant 0 : index
    %c0_131 = arith.constant 0 : index
    %243 = vector.load %arg38[%c0_128, %c2_129, %c0_130, %c0_131] : memref<2x6x4x8xf32, #tpu.memory_space<vmem>>, vector<2x1x4x8xf32>
    %244 = vector.shape_cast %243 : vector<2x1x4x8xf32> to vector<2x4x8xf32>
    %245 = vector.shape_cast %242 : vector<2x4x8xf32> to vector<2x1x4x8xf32>
    tpu.vector_store %arg38[%c0_128, %c2_129, %c0_130, %c0_131], %245 {strides = array<i32>} : memref<2x6x4x8xf32, #tpu.memory_space<vmem>>, vector<2x1x4x8xf32>,
    %246 = vector.extract_strided_slice %235 {offsets = [0, 8, 0], sizes = [2, 4, 8], strides = [1, 1, 1]} : vector<2x16x8xf32> to vector<2x4x8xf32>
    %c0_132 = arith.constant 0 : index
    %c3_133 = arith.constant 3 : index
    %c0_134 = arith.constant 0 : index
    %c0_135 = arith.constant 0 : index
    %247 = vector.load %arg38[%c0_132, %c3_133, %c0_134, %c0_135] : memref<2x6x4x8xf32, #tpu.memory_space<vmem>>, vector<2x1x4x8xf32>
    %248 = vector.shape_cast %247 : vector<2x1x4x8xf32> to vector<2x4x8xf32>
    %249 = vector.shape_cast %246 : vector<2x4x8xf32> to vector<2x1x4x8xf32>
    tpu.vector_store %arg38[%c0_132, %c3_133, %c0_134, %c0_135], %249 {strides = array<i32>} : memref<2x6x4x8xf32, #tpu.memory_space<vmem>>, vector<2x1x4x8xf32>,
    %250 = vector.extract_strided_slice %235 {offsets = [0, 12, 0], sizes = [2, 4, 8], strides = [1, 1, 1]} : vector<2x16x8xf32> to vector<2x4x8xf32>
    %c0_136 = arith.constant 0 : index
    %c4_137 = arith.constant 4 : index
    %c0_138 = arith.constant 0 : index
    %c0_139 = arith.constant 0 : index
    %251 = vector.load %arg38[%c0_136, %c4_137, %c0_138, %c0_139] : memref<2x6x4x8xf32, #tpu.memory_space<vmem>>, vector<2x1x4x8xf32>
    %252 = vector.shape_cast %251 : vector<2x1x4x8xf32> to vector<2x4x8xf32>
    %253 = vector.shape_cast %250 : vector<2x4x8xf32> to vector<2x1x4x8xf32>
    tpu.vector_store %arg38[%c0_136, %c4_137, %c0_138, %c0_139], %253 {strides = array<i32>} : memref<2x6x4x8xf32, #tpu.memory_space<vmem>>, vector<2x1x4x8xf32>,
    %c0_140 = arith.constant 0 : index
    %c0_141 = arith.constant 0 : index
    %c0_142 = arith.constant 0 : index
    %c0_143 = arith.constant 0 : index
    %254 = vector.load %arg38[%c0_140, %c0_141, %c0_142, %c0_143] : memref<2x6x4x8xf32, #tpu.memory_space<vmem>>, vector<2x6x4x8xf32>
    %255 = vector.extract_strided_slice %254 {offsets = [0, 0, 0, 0], sizes = [2, 4, 1, 8], strides = [1, 1, 1, 1]} : vector<2x6x4x8xf32> to vector<2x4x1x8xf32>
    %256 = vector.shape_cast %255 : vector<2x4x1x8xf32> to vector<2x4x8xf32>
    %257 = vector.extract_strided_slice %254 {offsets = [0, 0, 1, 0], sizes = [2, 4, 1, 8], strides = [1, 1, 1, 1]} : vector<2x6x4x8xf32> to vector<2x4x1x8xf32>
    %258 = vector.shape_cast %257 : vector<2x4x1x8xf32> to vector<2x4x8xf32>
    %259 = vector.extract_strided_slice %254 {offsets = [0, 0, 2, 0], sizes = [2, 4, 1, 8], strides = [1, 1, 1, 1]} : vector<2x6x4x8xf32> to vector<2x4x1x8xf32>
    %260 = vector.shape_cast %259 : vector<2x4x1x8xf32> to vector<2x4x8xf32>
    %261 = vector.extract_strided_slice %254 {offsets = [0, 0, 3, 0], sizes = [2, 4, 1, 8], strides = [1, 1, 1, 1]} : vector<2x6x4x8xf32> to vector<2x4x1x8xf32>
    %262 = vector.shape_cast %261 : vector<2x4x1x8xf32> to vector<2x4x8xf32>
    %263 = vector.extract_strided_slice %254 {offsets = [0, 1, 0, 0], sizes = [2, 4, 1, 8], strides = [1, 1, 1, 1]} : vector<2x6x4x8xf32> to vector<2x4x1x8xf32>
    %264 = vector.shape_cast %263 : vector<2x4x1x8xf32> to vector<2x4x8xf32>
    %265 = vector.extract_strided_slice %254 {offsets = [0, 1, 1, 0], sizes = [2, 4, 1, 8], strides = [1, 1, 1, 1]} : vector<2x6x4x8xf32> to vector<2x4x1x8xf32>
    %266 = vector.shape_cast %265 : vector<2x4x1x8xf32> to vector<2x4x8xf32>
    %267 = vector.extract_strided_slice %254 {offsets = [0, 1, 2, 0], sizes = [2, 4, 1, 8], strides = [1, 1, 1, 1]} : vector<2x6x4x8xf32> to vector<2x4x1x8xf32>
    %268 = vector.shape_cast %267 : vector<2x4x1x8xf32> to vector<2x4x8xf32>
    %269 = vector.extract_strided_slice %254 {offsets = [0, 1, 3, 0], sizes = [2, 4, 1, 8], strides = [1, 1, 1, 1]} : vector<2x6x4x8xf32> to vector<2x4x1x8xf32>
    %270 = vector.shape_cast %269 : vector<2x4x1x8xf32> to vector<2x4x8xf32>
    %271 = vector.extract_strided_slice %254 {offsets = [0, 2, 0, 0], sizes = [2, 4, 1, 8], strides = [1, 1, 1, 1]} : vector<2x6x4x8xf32> to vector<2x4x1x8xf32>
    %272 = vector.shape_cast %271 : vector<2x4x1x8xf32> to vector<2x4x8xf32>
    %273 = vector.extract_strided_slice %254 {offsets = [0, 1, 0, 0], sizes = [2, 4, 1, 8], strides = [1, 1, 1, 1]} : vector<2x6x4x8xf32> to vector<2x4x1x8xf32>
    %274 = vector.shape_cast %273 : vector<2x4x1x8xf32> to vector<2x4x8xf32>
    %c0_144 = arith.constant 0 : index
    %c0_145 = arith.constant 0 : index
    %275 = vector.load %arg15[%c0_144, %c0_145] : memref<9x8xf32, #tpu.memory_space<vmem>>, vector<9x8xf32>
    %cst_146 = arith.constant 0.000000e+00 : f32
    %276 = vector.broadcast %cst_146 : f32 to vector<2x4x8xf32>
    %277 = vector.extract_strided_slice %275 {offsets = [0, 0], sizes = [1, 8], strides = [1, 1]} : vector<9x8xf32> to vector<1x8xf32>
    %278 = vector.shape_cast %277 : vector<1x8xf32> to vector<1x1x8xf32>
    %279 = vector.broadcast %278 : vector<1x1x8xf32> to vector<2x4x8xf32>
    %280 = arith.mulf %256, %279 : vector<2x4x8xf32>
    %281 = arith.addf %276, %280 : vector<2x4x8xf32>
    %282 = vector.extract_strided_slice %275 {offsets = [1, 0], sizes = [1, 8], strides = [1, 1]} : vector<9x8xf32> to vector<1x8xf32>
    %283 = vector.shape_cast %282 : vector<1x8xf32> to vector<1x1x8xf32>
    %284 = vector.broadcast %283 : vector<1x1x8xf32> to vector<2x4x8xf32>
    %285 = arith.mulf %258, %284 : vector<2x4x8xf32>
    %286 = arith.addf %281, %285 : vector<2x4x8xf32>
    %287 = vector.extract_strided_slice %275 {offsets = [2, 0], sizes = [1, 8], strides = [1, 1]} : vector<9x8xf32> to vector<1x8xf32>
    %288 = vector.shape_cast %287 : vector<1x8xf32> to vector<1x1x8xf32>
    %289 = vector.broadcast %288 : vector<1x1x8xf32> to vector<2x4x8xf32>
    %290 = arith.mulf %260, %289 : vector<2x4x8xf32>
    %291 = arith.addf %286, %290 : vector<2x4x8xf32>
    %292 = vector.extract_strided_slice %275 {offsets = [3, 0], sizes = [1, 8], strides = [1, 1]} : vector<9x8xf32> to vector<1x8xf32>
    %293 = vector.shape_cast %292 : vector<1x8xf32> to vector<1x1x8xf32>
    %294 = vector.broadcast %293 : vector<1x1x8xf32> to vector<2x4x8xf32>
    %295 = arith.mulf %262, %294 : vector<2x4x8xf32>
    %296 = arith.addf %291, %295 : vector<2x4x8xf32>
    %297 = vector.extract_strided_slice %275 {offsets = [4, 0], sizes = [1, 8], strides = [1, 1]} : vector<9x8xf32> to vector<1x8xf32>
    %298 = vector.shape_cast %297 : vector<1x8xf32> to vector<1x1x8xf32>
    %299 = vector.broadcast %298 : vector<1x1x8xf32> to vector<2x4x8xf32>
    %300 = arith.mulf %264, %299 : vector<2x4x8xf32>
    %301 = arith.addf %296, %300 : vector<2x4x8xf32>
    %302 = vector.extract_strided_slice %275 {offsets = [5, 0], sizes = [1, 8], strides = [1, 1]} : vector<9x8xf32> to vector<1x8xf32>
    %303 = vector.shape_cast %302 : vector<1x8xf32> to vector<1x1x8xf32>
    %304 = vector.broadcast %303 : vector<1x1x8xf32> to vector<2x4x8xf32>
    %305 = arith.mulf %266, %304 : vector<2x4x8xf32>
    %306 = arith.addf %301, %305 : vector<2x4x8xf32>
    %307 = vector.extract_strided_slice %275 {offsets = [6, 0], sizes = [1, 8], strides = [1, 1]} : vector<9x8xf32> to vector<1x8xf32>
    %308 = vector.shape_cast %307 : vector<1x8xf32> to vector<1x1x8xf32>
    %309 = vector.broadcast %308 : vector<1x1x8xf32> to vector<2x4x8xf32>
    %310 = arith.mulf %268, %309 : vector<2x4x8xf32>
    %311 = arith.addf %306, %310 : vector<2x4x8xf32>
    %312 = vector.extract_strided_slice %275 {offsets = [7, 0], sizes = [1, 8], strides = [1, 1]} : vector<9x8xf32> to vector<1x8xf32>
    %313 = vector.shape_cast %312 : vector<1x8xf32> to vector<1x1x8xf32>
    %314 = vector.broadcast %313 : vector<1x1x8xf32> to vector<2x4x8xf32>
    %315 = arith.mulf %270, %314 : vector<2x4x8xf32>
    %316 = arith.addf %311, %315 : vector<2x4x8xf32>
    %317 = vector.extract_strided_slice %275 {offsets = [8, 0], sizes = [1, 8], strides = [1, 1]} : vector<9x8xf32> to vector<1x8xf32>
    %318 = vector.shape_cast %317 : vector<1x8xf32> to vector<1x1x8xf32>
    %319 = vector.broadcast %318 : vector<1x1x8xf32> to vector<2x4x8xf32>
    %320 = arith.mulf %272, %319 : vector<2x4x8xf32>
    %321 = arith.addf %316, %320 : vector<2x4x8xf32>
    %322 = vector.shape_cast %321 : vector<2x4x8xf32> to vector<8x8xf32>
    %c0_147 = arith.constant 0 : index
    %c0_148 = arith.constant 0 : index
    %323 = vector.load %arg16[%c0_147, %c0_148] : memref<1x8xf32, #tpu.memory_space<vmem>>, vector<1x8xf32>
    %324 = vector.broadcast %323 : vector<1x8xf32> to vector<8x8xf32>
    %325 = arith.addf %322, %324 : vector<8x8xf32>
    %c0_149 = arith.constant 0 : index
    %c0_150 = arith.constant 0 : index
    %326 = vector.load %arg17[%c0_149, %c0_150] : memref<8x16xf32, #tpu.memory_space<vmem>>, vector<8x16xf32>
    %cst_151 = arith.constant dense<0.000000e+00> : vector<8x16xf32>
    %327 = tpu.matmul %325, %326, %cst_151 {dimension_numbers = #tpu.dot_dimension_numbers<[1], [0], [0], [1], [0, 0, 1, 1], [], []>} : vector<8x8xf32>, vector<8x16xf32>, vector<8x16xf32> -> vector<8x16xf32>
    %c0_152 = arith.constant 0 : index
    %c0_153 = arith.constant 0 : index
    %328 = vector.load %arg18[%c0_152, %c0_153] : memref<1x16xf32, #tpu.memory_space<vmem>>, vector<1x16xf32>
    %329 = vector.broadcast %328 : vector<1x16xf32> to vector<8x16xf32>
    %330 = arith.addf %327, %329 : vector<8x16xf32>
    %331 = vector.shape_cast %274 : vector<2x4x8xf32> to vector<8x8xf32>
    %c0_154 = arith.constant 0 : index
    %c0_155 = arith.constant 0 : index
    %332 = vector.load %arg19[%c0_154, %c0_155] : memref<8x16xf32, #tpu.memory_space<vmem>>, vector<8x16xf32>
    %cst_156 = arith.constant dense<0.000000e+00> : vector<8x16xf32>
    %333 = tpu.matmul %331, %332, %cst_156 {dimension_numbers = #tpu.dot_dimension_numbers<[1], [0], [0], [1], [0, 0, 1, 1], [], []>} : vector<8x8xf32>, vector<8x16xf32>, vector<8x16xf32> -> vector<8x16xf32>
    %c0_157 = arith.constant 0 : index
    %c0_158 = arith.constant 0 : index
    %334 = vector.load %arg20[%c0_157, %c0_158] : memref<1x16xf32, #tpu.memory_space<vmem>>, vector<1x16xf32>
    %335 = vector.broadcast %334 : vector<1x16xf32> to vector<8x16xf32>
    %336 = arith.addf %333, %335 : vector<8x16xf32>
    %337 = arith.addf %330, %336 : vector<8x16xf32>
    %cst_159 = arith.constant 0.000000e+00 : f32
    %cst_160 = arith.constant 6.000000e+00 : f32
    %338 = vector.broadcast %cst_159 : f32 to vector<8x16xf32>
    %339 = arith.maximumf %338, %337 : vector<8x16xf32>
    %340 = vector.broadcast %cst_160 : f32 to vector<8x16xf32>
    %341 = arith.minimumf %340, %339 : vector<8x16xf32>
    %342 = vector.shape_cast %341 : vector<8x16xf32> to vector<2x4x16xf32>
    %cst_161 = arith.constant 0.000000e+00 : f32
    %343 = vector.broadcast %cst_161 : f32 to vector<2x6x16xf32>
    %c0_162 = arith.constant 0 : index
    %c0_163 = arith.constant 0 : index
    %c0_164 = arith.constant 0 : index
    %344 = vector.load %arg39[%c0_162, %c0_163, %c0_164] : memref<2x6x16xf32, #tpu.memory_space<vmem>>, vector<2x6x16xf32>
    tpu.vector_store %arg39[%c0_162, %c0_163, %c0_164], %343 {strides = array<i32>} : memref<2x6x16xf32, #tpu.memory_space<vmem>>, vector<2x6x16xf32>,
    %c0_165 = arith.constant 0 : index
    %c1_166 = arith.constant 1 : index
    %c0_167 = arith.constant 0 : index
    %345 = vector.load %arg39[%c0_165, %c1_166, %c0_167] : memref<2x6x16xf32, #tpu.memory_space<vmem>>, vector<2x4x16xf32>
    tpu.vector_store %arg39[%c0_165, %c1_166, %c0_167], %342 {strides = array<i32>} : memref<2x6x16xf32, #tpu.memory_space<vmem>>, vector<2x4x16xf32>,
    %c0_168 = arith.constant 0 : index
    %c0_169 = arith.constant 0 : index
    %c0_170 = arith.constant 0 : index
    %346 = vector.load %arg39[%c0_168, %c0_169, %c0_170] : memref<2x6x16xf32, #tpu.memory_space<vmem>>, vector<2x6x16xf32>
    %347 = vector.extract_strided_slice %346 {offsets = [0, 0, 0], sizes = [2, 4, 16], strides = [1, 1, 1]} : vector<2x6x16xf32> to vector<2x4x16xf32>
    %348 = vector.extract_strided_slice %346 {offsets = [0, 1, 0], sizes = [2, 4, 16], strides = [1, 1, 1]} : vector<2x6x16xf32> to vector<2x4x16xf32>
    %349 = vector.extract_strided_slice %346 {offsets = [0, 2, 0], sizes = [2, 4, 16], strides = [1, 1, 1]} : vector<2x6x16xf32> to vector<2x4x16xf32>
    %c0_171 = arith.constant 0 : index
    %c0_172 = arith.constant 0 : index
    %350 = vector.load %arg21[%c0_171, %c0_172] : memref<3x16xf32, #tpu.memory_space<vmem>>, vector<3x16xf32>
    %cst_173 = arith.constant 0.000000e+00 : f32
    %351 = vector.broadcast %cst_173 : f32 to vector<2x4x16xf32>
    %352 = vector.extract_strided_slice %350 {offsets = [0, 0], sizes = [1, 16], strides = [1, 1]} : vector<3x16xf32> to vector<1x16xf32>
    %353 = vector.shape_cast %352 : vector<1x16xf32> to vector<1x1x16xf32>
    %354 = vector.broadcast %353 : vector<1x1x16xf32> to vector<2x4x16xf32>
    %355 = arith.mulf %347, %354 : vector<2x4x16xf32>
    %356 = arith.addf %351, %355 : vector<2x4x16xf32>
    %357 = vector.extract_strided_slice %350 {offsets = [1, 0], sizes = [1, 16], strides = [1, 1]} : vector<3x16xf32> to vector<1x16xf32>
    %358 = vector.shape_cast %357 : vector<1x16xf32> to vector<1x1x16xf32>
    %359 = vector.broadcast %358 : vector<1x1x16xf32> to vector<2x4x16xf32>
    %360 = arith.mulf %348, %359 : vector<2x4x16xf32>
    %361 = arith.addf %356, %360 : vector<2x4x16xf32>
    %362 = vector.extract_strided_slice %350 {offsets = [2, 0], sizes = [1, 16], strides = [1, 1]} : vector<3x16xf32> to vector<1x16xf32>
    %363 = vector.shape_cast %362 : vector<1x16xf32> to vector<1x1x16xf32>
    %364 = vector.broadcast %363 : vector<1x1x16xf32> to vector<2x4x16xf32>
    %365 = arith.mulf %349, %364 : vector<2x4x16xf32>
    %366 = arith.addf %361, %365 : vector<2x4x16xf32>
    %367 = vector.shape_cast %366 : vector<2x4x16xf32> to vector<8x16xf32>
    %c0_174 = arith.constant 0 : index
    %c0_175 = arith.constant 0 : index
    %368 = vector.load %arg22[%c0_174, %c0_175] : memref<1x16xf32, #tpu.memory_space<vmem>>, vector<1x16xf32>
    %369 = vector.broadcast %368 : vector<1x16xf32> to vector<8x16xf32>
    %370 = arith.addf %367, %369 : vector<8x16xf32>
    %c0_176 = arith.constant 0 : index
    %c0_177 = arith.constant 0 : index
    %371 = vector.load %arg23[%c0_176, %c0_177] : memref<16x16xf32, #tpu.memory_space<vmem>>, vector<16x16xf32>
    %cst_178 = arith.constant dense<0.000000e+00> : vector<8x16xf32>
    %372 = tpu.matmul %370, %371, %cst_178 {dimension_numbers = #tpu.dot_dimension_numbers<[1], [0], [0], [1], [0, 0, 1, 1], [], []>} : vector<8x16xf32>, vector<16x16xf32>, vector<8x16xf32> -> vector<8x16xf32>
    %c0_179 = arith.constant 0 : index
    %c0_180 = arith.constant 0 : index
    %373 = vector.load %arg24[%c0_179, %c0_180] : memref<1x16xf32, #tpu.memory_space<vmem>>, vector<1x16xf32>
    %374 = vector.broadcast %373 : vector<1x16xf32> to vector<8x16xf32>
    %375 = arith.addf %372, %374 : vector<8x16xf32>
    %376 = vector.shape_cast %342 : vector<2x4x16xf32> to vector<8x16xf32>
    %377 = arith.addf %375, %376 : vector<8x16xf32>
    %cst_181 = arith.constant 0.000000e+00 : f32
    %cst_182 = arith.constant 6.000000e+00 : f32
    %378 = vector.broadcast %cst_181 : f32 to vector<8x16xf32>
    %379 = arith.maximumf %378, %377 : vector<8x16xf32>
    %380 = vector.broadcast %cst_182 : f32 to vector<8x16xf32>
    %381 = arith.minimumf %380, %379 : vector<8x16xf32>
    %382 = vector.shape_cast %381 : vector<8x16xf32> to vector<2x4x16xf32>
    %cst_183 = arith.constant 0.000000e+00 : f32
    %383 = vector.broadcast %cst_183 : f32 to vector<2x6x16xf32>
    %c0_184 = arith.constant 0 : index
    %c0_185 = arith.constant 0 : index
    %c0_186 = arith.constant 0 : index
    %384 = vector.load %arg40[%c0_184, %c0_185, %c0_186] : memref<2x6x16xf32, #tpu.memory_space<vmem>>, vector<2x6x16xf32>
    tpu.vector_store %arg40[%c0_184, %c0_185, %c0_186], %383 {strides = array<i32>} : memref<2x6x16xf32, #tpu.memory_space<vmem>>, vector<2x6x16xf32>,
    %c0_187 = arith.constant 0 : index
    %c1_188 = arith.constant 1 : index
    %c0_189 = arith.constant 0 : index
    %385 = vector.load %arg40[%c0_187, %c1_188, %c0_189] : memref<2x6x16xf32, #tpu.memory_space<vmem>>, vector<2x4x16xf32>
    tpu.vector_store %arg40[%c0_187, %c1_188, %c0_189], %382 {strides = array<i32>} : memref<2x6x16xf32, #tpu.memory_space<vmem>>, vector<2x4x16xf32>,
    %c0_190 = arith.constant 0 : index
    %c0_191 = arith.constant 0 : index
    %c0_192 = arith.constant 0 : index
    %386 = vector.load %arg40[%c0_190, %c0_191, %c0_192] : memref<2x6x16xf32, #tpu.memory_space<vmem>>, vector<2x6x16xf32>
    %387 = vector.extract_strided_slice %386 {offsets = [0, 0, 0], sizes = [2, 4, 16], strides = [1, 1, 1]} : vector<2x6x16xf32> to vector<2x4x16xf32>
    %388 = vector.extract_strided_slice %386 {offsets = [0, 1, 0], sizes = [2, 4, 16], strides = [1, 1, 1]} : vector<2x6x16xf32> to vector<2x4x16xf32>
    %389 = vector.extract_strided_slice %386 {offsets = [0, 2, 0], sizes = [2, 4, 16], strides = [1, 1, 1]} : vector<2x6x16xf32> to vector<2x4x16xf32>
    %c0_193 = arith.constant 0 : index
    %c0_194 = arith.constant 0 : index
    %390 = vector.load %arg25[%c0_193, %c0_194] : memref<3x16xf32, #tpu.memory_space<vmem>>, vector<3x16xf32>
    %cst_195 = arith.constant 0.000000e+00 : f32
    %391 = vector.broadcast %cst_195 : f32 to vector<2x4x16xf32>
    %392 = vector.extract_strided_slice %390 {offsets = [0, 0], sizes = [1, 16], strides = [1, 1]} : vector<3x16xf32> to vector<1x16xf32>
    %393 = vector.shape_cast %392 : vector<1x16xf32> to vector<1x1x16xf32>
    %394 = vector.broadcast %393 : vector<1x1x16xf32> to vector<2x4x16xf32>
    %395 = arith.mulf %387, %394 : vector<2x4x16xf32>
    %396 = arith.addf %391, %395 : vector<2x4x16xf32>
    %397 = vector.extract_strided_slice %390 {offsets = [1, 0], sizes = [1, 16], strides = [1, 1]} : vector<3x16xf32> to vector<1x16xf32>
    %398 = vector.shape_cast %397 : vector<1x16xf32> to vector<1x1x16xf32>
    %399 = vector.broadcast %398 : vector<1x1x16xf32> to vector<2x4x16xf32>
    %400 = arith.mulf %388, %399 : vector<2x4x16xf32>
    %401 = arith.addf %396, %400 : vector<2x4x16xf32>
    %402 = vector.extract_strided_slice %390 {offsets = [2, 0], sizes = [1, 16], strides = [1, 1]} : vector<3x16xf32> to vector<1x16xf32>
    %403 = vector.shape_cast %402 : vector<1x16xf32> to vector<1x1x16xf32>
    %404 = vector.broadcast %403 : vector<1x1x16xf32> to vector<2x4x16xf32>
    %405 = arith.mulf %389, %404 : vector<2x4x16xf32>
    %406 = arith.addf %401, %405 : vector<2x4x16xf32>
    %407 = vector.shape_cast %406 : vector<2x4x16xf32> to vector<8x16xf32>
    %c0_196 = arith.constant 0 : index
    %c0_197 = arith.constant 0 : index
    %408 = vector.load %arg26[%c0_196, %c0_197] : memref<1x16xf32, #tpu.memory_space<vmem>>, vector<1x16xf32>
    %409 = vector.broadcast %408 : vector<1x16xf32> to vector<8x16xf32>
    %410 = arith.addf %407, %409 : vector<8x16xf32>
    %c0_198 = arith.constant 0 : index
    %c0_199 = arith.constant 0 : index
    %411 = vector.load %arg27[%c0_198, %c0_199] : memref<16x16xf32, #tpu.memory_space<vmem>>, vector<16x16xf32>
    %cst_200 = arith.constant dense<0.000000e+00> : vector<8x16xf32>
    %412 = tpu.matmul %410, %411, %cst_200 {dimension_numbers = #tpu.dot_dimension_numbers<[1], [0], [0], [1], [0, 0, 1, 1], [], []>} : vector<8x16xf32>, vector<16x16xf32>, vector<8x16xf32> -> vector<8x16xf32>
    %c0_201 = arith.constant 0 : index
    %c0_202 = arith.constant 0 : index
    %413 = vector.load %arg28[%c0_201, %c0_202] : memref<1x16xf32, #tpu.memory_space<vmem>>, vector<1x16xf32>
    %414 = vector.broadcast %413 : vector<1x16xf32> to vector<8x16xf32>
    %415 = arith.addf %412, %414 : vector<8x16xf32>
    %416 = vector.shape_cast %382 : vector<2x4x16xf32> to vector<8x16xf32>
    %417 = arith.addf %415, %416 : vector<8x16xf32>
    %cst_203 = arith.constant 0.000000e+00 : f32
    %cst_204 = arith.constant 6.000000e+00 : f32
    %418 = vector.broadcast %cst_203 : f32 to vector<8x16xf32>
    %419 = arith.maximumf %418, %417 : vector<8x16xf32>
    %420 = vector.broadcast %cst_204 : f32 to vector<8x16xf32>
    %421 = arith.minimumf %420, %419 : vector<8x16xf32>
    %422 = vector.shape_cast %421 : vector<8x16xf32> to vector<2x4x16xf32>
    %cst_205 = arith.constant dense<0.000000e+00> : vector<2x16xf32>
    %423 = vector.multi_reduction <add>, %422, %cst_205 [1] : vector<2x4x16xf32> to vector<2x16xf32>
    %cst_206 = arith.constant 4.000000e+00 : f32
    %424 = vector.broadcast %cst_206 : f32 to vector<2x16xf32>
    %425 = arith.divf %423, %424 : vector<2x16xf32>
    %c0_207 = arith.constant 0 : index
    %c0_208 = arith.constant 0 : index
    %426 = vector.load %arg29[%c0_207, %c0_208] : memref<16x8xf32, #tpu.memory_space<vmem>>, vector<16x8xf32>
    %cst_209 = arith.constant dense<0.000000e+00> : vector<2x8xf32>
    %427 = tpu.matmul %425, %426, %cst_209 {dimension_numbers = #tpu.dot_dimension_numbers<[1], [0], [0], [1], [0, 0, 1, 1], [], []>} : vector<2x16xf32>, vector<16x8xf32>, vector<2x8xf32> -> vector<2x8xf32>
    %c0_210 = arith.constant 0 : index
    %c0_211 = arith.constant 0 : index
    %428 = vector.load %arg30[%c0_210, %c0_211] : memref<1x8xf32, #tpu.memory_space<vmem>>, vector<1x8xf32>
    %429 = vector.broadcast %428 : vector<1x8xf32> to vector<2x8xf32>
    %430 = arith.addf %427, %429 : vector<2x8xf32>
    %cst_212 = arith.constant 0.000000e+00 : f32
    %cst_213 = arith.constant 6.000000e+00 : f32
    %431 = vector.broadcast %cst_212 : f32 to vector<2x8xf32>
    %432 = arith.maximumf %431, %430 : vector<2x8xf32>
    %433 = vector.broadcast %cst_213 : f32 to vector<2x8xf32>
    %434 = arith.minimumf %433, %432 : vector<2x8xf32>
    %c0_214 = arith.constant 0 : index
    %c0_215 = arith.constant 0 : index
    %435 = vector.load %arg31[%c0_214, %c0_215] : memref<8x2xf32, #tpu.memory_space<vmem>>, vector<8x2xf32>
    %cst_216 = arith.constant dense<0.000000e+00> : vector<2x2xf32>
    %436 = tpu.matmul %434, %435, %cst_216 {dimension_numbers = #tpu.dot_dimension_numbers<[1], [0], [0], [1], [0, 0, 1, 1], [], []>} : vector<2x8xf32>, vector<8x2xf32>, vector<2x2xf32> -> vector<2x2xf32>
    %c0_217 = arith.constant 0 : index
    %c0_218 = arith.constant 0 : index
    %437 = vector.load %arg32[%c0_217, %c0_218] : memref<1x2xf32, #tpu.memory_space<vmem>>, vector<1x2xf32>
    %438 = vector.broadcast %437 : vector<1x2xf32> to vector<2x2xf32>
    %439 = arith.addf %436, %438 : vector<2x2xf32>
    %cst_219 = arith.constant dense<0xFF800000> : vector<2xf32>
    %440 = vector.multi_reduction <maximumf>, %439, %cst_219 [1] : vector<2x2xf32> to vector<2xf32>
    %441 = vector.shape_cast %440 : vector<2xf32> to vector<2x1xf32>
    %442 = vector.broadcast %441 : vector<2x1xf32> to vector<2x2xf32>
    %443 = arith.subf %439, %442 : vector<2x2xf32>
    %444 = math.exp %443 : vector<2x2xf32>
    %cst_220 = arith.constant dense<0.000000e+00> : vector<2xf32>
    %445 = vector.multi_reduction <add>, %444, %cst_220 [1] : vector<2x2xf32> to vector<2xf32>
    %446 = vector.shape_cast %445 : vector<2xf32> to vector<2x1xf32>
    %447 = tpu.reciprocal %446 {approx = true} : vector<2x1xf32> -> vector<2x1xf32>
    %448 = vector.broadcast %447 : vector<2x1xf32> to vector<2x2xf32>
    %449 = arith.mulf %444, %448 : vector<2x2xf32>
    %c0_221 = arith.constant 0 : index
    %c0_222 = arith.constant 0 : index
    %450 = vector.load %arg33[%c0_221, %c0_222] : memref<2x2xf32, #tpu.memory_space<vmem>>, vector<2x2xf32>
    tpu.vector_store %arg33[%c0_221, %c0_222], %449 {strides = array<i32>} : memref<2x2xf32, #tpu.memory_space<vmem>>, vector<2x2xf32>,
    %c0_223 = arith.constant 0 : index
    %c0_224 = arith.constant 0 : index
    %451 = vector.load %arg34[%c0_223, %c0_224] : memref<2x16xf32, #tpu.memory_space<vmem>>, vector<2x16xf32>
    tpu.vector_store %arg34[%c0_223, %c0_224], %425 {strides = array<i32>} : memref<2x16xf32, #tpu.memory_space<vmem>>, vector<2x16xf32>,
    return
  }
}

</mosaic_0001>

<llo_original>
// kernel: _lambda_.1
$region0: #{_lambda_.1}
  #allocation0 [shape = 'u32[]', space=smem, size = 0x4, offset = 0x4, fixed_abs, tag = 'smem constant byte address 0x4 - core index']
  #allocation1 [shape = 'u32[144,128]{1,0:T(1,128)}', space=vmem, size = 0x12000, scoped, tag = 'internal scratch']
  #allocation2 [shape = 'f32[2,18,4,4]{3,2,1,0:T(4,128)}', space=vmem, size = 0x12000, scoped, tag = 'scratch operand']
  #allocation3 [shape = 'f32[2,18,8]{2,1,0:T(8,128)}', space=vmem, size = 0x6000, scoped, tag = 'scratch operand']
  #allocation4 [shape = 'f32[2,18,8]{2,1,0:T(8,128)}', space=vmem, size = 0x6000, scoped, tag = 'scratch operand']
  #allocation5 [shape = 'f32[2,6,4,8]{3,2,1,0:T(4,128)}', space=vmem, size = 0x6000, scoped, tag = 'scratch operand']
  #allocation6 [shape = 'f32[2,6,16]{2,1,0:T(8,128)}', space=vmem, size = 0x2000, scoped, tag = 'scratch operand']
  #allocation7 [shape = 'f32[2,6,16]{2,1,0:T(8,128)}', space=vmem, size = 0x2000, scoped, tag = 'scratch operand']
  %s0 = inlined_call_operand.smem [shape: u32[35], index: -1, kind: input, shape index: {}]
  %s1 = sld [smem:[%s0]]
  %s2 = scalar_lea.smem %s0, 1
  %s3 = sld [smem:[%s2]]
  %s4 = scalar_lea.smem %s0, 2
  %s5 = sld [smem:[%s4]]
  %s6 = scalar_lea.smem %s0, 3
  %s7 = sld [smem:[%s6]]
  %s8 = scalar_lea.smem %s0, 4
  %s9 = sld [smem:[%s8]]
  %s10 = scalar_lea.smem %s0, 5
  %s11 = sld [smem:[%s10]]
  %s12 = scalar_lea.smem %s0, 6
  %s13 = sld [smem:[%s12]]
  %s14 = scalar_lea.smem %s0, 7
  %s15 = sld [smem:[%s14]]
  %s16 = scalar_lea.smem %s0, 8
  %s17 = sld [smem:[%s16]]
  %s18 = scalar_lea.smem %s0, 9
  %s19 = sld [smem:[%s18]]
  %s20 = scalar_lea.smem %s0, 10
  %s21 = sld [smem:[%s20]]
  %s22 = scalar_lea.smem %s0, 11
  %s23 = sld [smem:[%s22]]
  %s24 = scalar_lea.smem %s0, 12
  %s25 = sld [smem:[%s24]]
  %s26 = scalar_lea.smem %s0, 13
  %s27 = sld [smem:[%s26]]
  %s28 = scalar_lea.smem %s0, 14
  %s29 = sld [smem:[%s28]]
  %s30 = scalar_lea.smem %s0, 15
  %s31 = sld [smem:[%s30]]
  %s32 = scalar_lea.smem %s0, 16
  %s33 = sld [smem:[%s32]]
  %s34 = scalar_lea.smem %s0, 17
  %s35 = sld [smem:[%s34]]
  %s36 = scalar_lea.smem %s0, 18
  %s37 = sld [smem:[%s36]]
  %s38 = scalar_lea.smem %s0, 19
  %s39 = sld [smem:[%s38]]
  %s40 = scalar_lea.smem %s0, 20
  %s41 = sld [smem:[%s40]]
  %s42 = scalar_lea.smem %s0, 21
  %s43 = sld [smem:[%s42]]
  %s44 = scalar_lea.smem %s0, 22
  %s45 = sld [smem:[%s44]]
  %s46 = scalar_lea.smem %s0, 23
  %s47 = sld [smem:[%s46]]
  %s48 = scalar_lea.smem %s0, 24
  %s49 = sld [smem:[%s48]]
  %s50 = scalar_lea.smem %s0, 25
  %s51 = sld [smem:[%s50]]
  %s52 = scalar_lea.smem %s0, 26
  %s53 = sld [smem:[%s52]]
  %s54 = scalar_lea.smem %s0, 27
  %s55 = sld [smem:[%s54]]
  %s56 = scalar_lea.smem %s0, 28
  %s57 = sld [smem:[%s56]]
  %s58 = scalar_lea.smem %s0, 29
  %s59 = sld [smem:[%s58]]
  %s60 = scalar_lea.smem %s0, 30
  %s61 = sld [smem:[%s60]]
  %s62 = scalar_lea.smem %s0, 31
  %s63 = sld [smem:[%s62]]
  %s64 = scalar_lea.smem %s0, 32
  %s65 = sld [smem:[%s64]]
  %s66 = scalar_lea.smem %s0, 33
  %s67 = sld [smem:[%s66]]
  %s68 = scalar_lea.smem %s0, 34
  %s69 = sld [smem:[%s68]]
  %70 = xla_tuple %s67, %s69
  %s71 = sld [smem:[#allocation0]]
  $region174: #{_lambda_.1} parent=0
    _
  %s73 = ssub.s32 1, %s71
  %s74 = scalar_select 0, %s73, %s71
  $region1: #{_lambda_.1} parent=0
    #allocation8 [shape = 'u8[512]{0}', space=vmem, size = 0x400, scoped, tag = 'input window, operand 22, single buffered']
    #allocation9 [shape = 's32[1]{0}', space=sflag, size = 0x4, scoped, tag = 'scoped memory for _lambda_.1']
    #allocation10 [shape = 's32[1]{0}', space=sflag, size = 0x4, scoped, tag = 'scoped memory for _lambda_.1']
    #allocation11 [shape = 'u8[512]{0}', space=vmem, size = 0x400, scoped, tag = 'input window, operand 24, single buffered']
    #allocation12 [shape = 's32[1]{0}', space=sflag, size = 0x4, scoped, tag = 'scoped memory for _lambda_.1']
    #allocation13 [shape = 'u8[512]{0}', space=vmem, size = 0x400, scoped, tag = 'input window, operand 26, single buffered']
    #allocation14 [shape = 'u8[512]{0}', space=vmem, size = 0x400, scoped, tag = 'input window, operand 28, single buffered']
    #allocation15 [shape = 's32[1]{0}', space=sflag, size = 0x4, scoped, tag = 'scoped memory for _lambda_.1']
    #allocation16 [shape = 'u8[512]{0}', space=vmem, size = 0x400, scoped, tag = 'input window, operand 30, single buffered']
    #allocation17 [shape = 'u8[512]{0}', space=vmem, size = 0x400, scoped, tag = 'input window, operand 32, single buffered']
    #allocation18 [shape = 's32[1]{0}', space=sflag, size = 0x4, scoped, tag = 'scoped memory for _lambda_.1']
    #allocation19 [shape = 'u8[1024]{0}', space=vmem, size = 0x400, scoped, tag = 'output window, operand 0, single buffered']
    #allocation20 [shape = 'u8[1024]{0}', space=vmem, size = 0x400, scoped, tag = 'output window, operand 1, single buffered']
    #allocation21 [shape = 's32[1]{0}', space=sflag, size = 0x4, scoped, tag = 'scoped memory for _lambda_.1']
    %75 = vsyncpa [#allocation9], 0
    %76 = vsyncpa [#allocation12], 0
    %77 = vsyncpa [#allocation15], 0
    %78 = vsyncpa [#allocation18], 0
    %79 = vsyncpa [#allocation10], 0
    %80 = vsyncpa [#allocation21], 0
    // Predicated region
    $region2: #{_lambda_.1} parent=1 // pred_check
      _
    $region3: #{_lambda_.1} parent=1 // pred_check_branch
      %82 = sbr.rel (0) target = $region5
    $region4: #{_lambda_.1} parent=1 // pred_region
      _
    $region5: #{_lambda_.1} parent=1 // pred_fallthru
      _
    // Predicated region
    $region6: #{_lambda_.1} parent=1 // pred_check
      _
    $region7: #{_lambda_.1} parent=1 // pred_check_branch
      %84 = sbr.rel (0) target = $region9
    $region8: #{_lambda_.1} parent=1 // pred_region
      _
    $region9: #{_lambda_.1} parent=1 // pred_fallthru
      _
    // Predicated region
    $region10: #{_lambda_.1} parent=1 // pred_check
      _
    $region11: #{_lambda_.1} parent=1 // pred_check_branch
      %86 = sbr.rel (0) target = $region13
    $region12: #{_lambda_.1} parent=1 // pred_region
      _
    $region13: #{_lambda_.1} parent=1 // pred_fallthru
      _
    // Predicated region
    $region14: #{_lambda_.1} parent=1 // pred_check
      _
    $region15: #{_lambda_.1} parent=1 // pred_check_branch
      %88 = sbr.rel (0) target = $region17
    $region16: #{_lambda_.1} parent=1 // pred_region
      _
    $region17: #{_lambda_.1} parent=1 // pred_fallthru
      _
    // Predicated region
    $region18: #{_lambda_.1} parent=1 // pred_check
      _
    $region19: #{_lambda_.1} parent=1 // pred_check_branch
      %90 = sbr.rel (0) target = $region21
    $region20: #{_lambda_.1} parent=1 // pred_region
      _
    $region21: #{_lambda_.1} parent=1 // pred_fallthru
      _
    // Predicated region
    $region22: #{_lambda_.1} parent=1 // pred_check
      _
    $region23: #{_lambda_.1} parent=1 // pred_check_branch
      %92 = sbr.rel (0) target = $region25
    $region24: #{_lambda_.1} parent=1 // pred_region
      _
    $region25: #{_lambda_.1} parent=1 // pred_fallthru
      _
    // Predicated region
    $region26: #{_lambda_.1} parent=1 // pred_check
      _
    $region27: #{_lambda_.1} parent=1 // pred_check_branch
      %94 = sbr.rel (0) target = $region29
    $region28: #{_lambda_.1} parent=1 // pred_region
      _
    $region29: #{_lambda_.1} parent=1 // pred_fallthru
      _
    // Predicated region
    $region30: #{_lambda_.1} parent=1 // pred_check
      _
    $region31: #{_lambda_.1} parent=1 // pred_check_branch
      %96 = sbr.rel (0) target = $region33
    $region32: #{_lambda_.1} parent=1 // pred_region
      _
    $region33: #{_lambda_.1} parent=1 // pred_fallthru
      _
    // Predicated region
    $region34: #{_lambda_.1} parent=1 // pred_check
      _
    $region35: #{_lambda_.1} parent=1 // pred_check_branch
      %98 = sbr.rel (0) target = $region37
    $region36: #{_lambda_.1} parent=1 // pred_region
      _
    $region37: #{_lambda_.1} parent=1 // pred_fallthru
      _
    // Predicated region
    $region38: #{_lambda_.1} parent=1 // pred_check
      _
    $region39: #{_lambda_.1} parent=1 // pred_check_branch
      %100 = sbr.rel (0) target = $region41
    $region40: #{_lambda_.1} parent=1 // pred_region
      _
    $region41: #{_lambda_.1} parent=1 // pred_fallthru
      _
    // Predicated region
    $region42: #{_lambda_.1} parent=1 // pred_check
      _
    $region43: #{_lambda_.1} parent=1 // pred_check_branch
      %102 = sbr.rel (0) target = $region45
    $region44: #{_lambda_.1} parent=1 // pred_region
      _
    $region45: #{_lambda_.1} parent=1 // pred_fallthru
      _
    // Predicated region
    $region46: #{_lambda_.1} parent=1 // pred_check
      _
    $region47: #{_lambda_.1} parent=1 // pred_check_branch
      %104 = sbr.rel (0) target = $region49
    $region48: #{_lambda_.1} parent=1 // pred_region
      _
    $region49: #{_lambda_.1} parent=1 // pred_fallthru
      _
    // Predicated region
    $region50: #{_lambda_.1} parent=1 // pred_check
      _
    $region51: #{_lambda_.1} parent=1 // pred_check_branch
      %106 = sbr.rel (0) target = $region53
    $region52: #{_lambda_.1} parent=1 // pred_region
      _
    $region53: #{_lambda_.1} parent=1 // pred_fallthru
      _
    // Predicated region
    $region54: #{_lambda_.1} parent=1 // pred_check
      _
    $region55: #{_lambda_.1} parent=1 // pred_check_branch
      %108 = sbr.rel (0) target = $region57
    $region56: #{_lambda_.1} parent=1 // pred_region
      _
    $region57: #{_lambda_.1} parent=1 // pred_fallthru
      _
    // Predicated region
    $region58: #{_lambda_.1} parent=1 // pred_check
      _
    $region59: #{_lambda_.1} parent=1 // pred_check_branch
      %110 = sbr.rel (0) target = $region61
    $region60: #{_lambda_.1} parent=1 // pred_region
      _
    $region61: #{_lambda_.1} parent=1 // pred_fallthru
      _
    // Predicated region
    $region62: #{_lambda_.1} parent=1 // pred_check
      _
    $region63: #{_lambda_.1} parent=1 // pred_check_branch
      %112 = sbr.rel (0) target = $region65
    $region64: #{_lambda_.1} parent=1 // pred_region
      _
    $region65: #{_lambda_.1} parent=1 // pred_fallthru
      _
    // Predicated region
    $region66: #{_lambda_.1} parent=1 // pred_check
      _
    $region67: #{_lambda_.1} parent=1 // pred_check_branch
      %114 = sbr.rel (0) target = $region69
    $region68: #{_lambda_.1} parent=1 // pred_region
      _
    $region69: #{_lambda_.1} parent=1 // pred_fallthru
      _
    // Predicated region
    $region70: #{_lambda_.1} parent=1 // pred_check
      _
    $region71: #{_lambda_.1} parent=1 // pred_check_branch
      %116 = sbr.rel (0) target = $region73
    $region72: #{_lambda_.1} parent=1 // pred_region
      _
    $region73: #{_lambda_.1} parent=1 // pred_fallthru
      _
    // Predicated region
    $region74: #{_lambda_.1} parent=1 // pred_check
      _
    $region75: #{_lambda_.1} parent=1 // pred_check_branch
      %118 = sbr.rel (0) target = $region77
    $region76: #{_lambda_.1} parent=1 // pred_region
      _
    $region77: #{_lambda_.1} parent=1 // pred_fallthru
      _
    // Predicated region
    $region78: #{_lambda_.1} parent=1 // pred_check
      _
    $region79: #{_lambda_.1} parent=1 // pred_check_branch
      %120 = sbr.rel (0) target = $region81
    $region80: #{_lambda_.1} parent=1 // pred_region
      _
    $region81: #{_lambda_.1} parent=1 // pred_fallthru
      _
    // Predicated region
    $region82: #{_lambda_.1} parent=1 // pred_check
      _
    $region83: #{_lambda_.1} parent=1 // pred_check_branch
      %122 = sbr.rel (0) target = $region85
    $region84: #{_lambda_.1} parent=1 // pred_region
      _
    $region85: #{_lambda_.1} parent=1 // pred_fallthru
      _
    // Predicated region
    $region86: #{_lambda_.1} parent=1 // pred_check
      _
    $region87: #{_lambda_.1} parent=1 // pred_check_branch
      %124 = sbr.rel (0) target = $region89
    $region88: #{_lambda_.1} parent=1 // pred_region
      _
    $region89: #{_lambda_.1} parent=1 // pred_fallthru
      _
    // Predicated region
    $region90: #{_lambda_.1} parent=1 // pred_check
      _
    $region91: #{_lambda_.1} parent=1 // pred_check_branch
      %126 = sbr.rel (0) target = $region93
    $region92: #{_lambda_.1} parent=1 // pred_region
      %s128 = ssub.s32 16, 16
      %129 = vsyncadd [#allocation9], %s128
      %s131 = sshll.u32 [#allocation8], 4
      %s132 = int_to_ptr.vmem [resolvable:$true] %s131
      %134 = dma.hbm_to_vmem [thread:$0]  %s45, 16, %s132, [#allocation9]
    $region93: #{_lambda_.1} parent=1 // pred_fallthru
      _
    // Predicated region
    $region94: #{_lambda_.1} parent=1 // pred_check
      _
    $region95: #{_lambda_.1} parent=1 // pred_check_branch
      %136 = sbr.rel (0) target = $region97
    $region96: #{_lambda_.1} parent=1 // pred_region
      _
    $region97: #{_lambda_.1} parent=1 // pred_fallthru
      _
    // Predicated region
    $region98: #{_lambda_.1} parent=1 // pred_check
      _
    $region99: #{_lambda_.1} parent=1 // pred_check_branch
      %138 = sbr.rel (0) target = $region101
    $region100: #{_lambda_.1} parent=1 // pred_region
      %s140 = ssub.s32 16, 16
      %141 = vsyncadd [#allocation12], %s140
      %s143 = sshll.u32 [#allocation11], 4
      %s144 = int_to_ptr.vmem [resolvable:$true] %s143
      %146 = dma.hbm_to_vmem [thread:$0]  %s49, 16, %s144, [#allocation12]
    $region101: #{_lambda_.1} parent=1 // pred_fallthru
      _
    // Predicated region
    $region102: #{_lambda_.1} parent=1 // pred_check
      _
    $region103: #{_lambda_.1} parent=1 // pred_check_branch
      %148 = sbr.rel (0) target = $region105
    $region104: #{_lambda_.1} parent=1 // pred_region
      _
    $region105: #{_lambda_.1} parent=1 // pred_fallthru
      _
    // Predicated region
    $region106: #{_lambda_.1} parent=1 // pred_check
      _
    $region107: #{_lambda_.1} parent=1 // pred_check_branch
      %150 = sbr.rel (0) target = $region109
    $region108: #{_lambda_.1} parent=1 // pred_region
      %s152 = ssub.s32 16, 16
      %153 = vsyncadd [#allocation12], %s152
      %s155 = sshll.u32 [#allocation13], 4
      %s156 = int_to_ptr.vmem [resolvable:$true] %s155
      %158 = dma.hbm_to_vmem [thread:$0]  %s53, 16, %s156, [#allocation12]
    $region109: #{_lambda_.1} parent=1 // pred_fallthru
      _
    // Predicated region
    $region110: #{_lambda_.1} parent=1 // pred_check
      _
    $region111: #{_lambda_.1} parent=1 // pred_check_branch
      %160 = sbr.rel (0) target = $region113
    $region112: #{_lambda_.1} parent=1 // pred_region
      _
    $region113: #{_lambda_.1} parent=1 // pred_fallthru
      _
    // Predicated region
    $region114: #{_lambda_.1} parent=1 // pred_check
      _
    $region115: #{_lambda_.1} parent=1 // pred_check_branch
      %162 = sbr.rel (0) target = $region117
    $region116: #{_lambda_.1} parent=1 // pred_region
      %s164 = ssub.s32 16, 16
      %165 = vsyncadd [#allocation15], %s164
      %s167 = sshll.u32 [#allocation14], 4
      %s168 = int_to_ptr.vmem [resolvable:$true] %s167
      %170 = dma.hbm_to_vmem [thread:$0]  %s57, 16, %s168, [#allocation15]
    $region117: #{_lambda_.1} parent=1 // pred_fallthru
      _
    // Predicated region
    $region118: #{_lambda_.1} parent=1 // pred_check
      _
    $region119: #{_lambda_.1} parent=1 // pred_check_branch
      %172 = sbr.rel (0) target = $region121
    $region120: #{_lambda_.1} parent=1 // pred_region
      _
    $region121: #{_lambda_.1} parent=1 // pred_fallthru
      _
    // Predicated region
    $region122: #{_lambda_.1} parent=1 // pred_check
      _
    $region123: #{_lambda_.1} parent=1 // pred_check_branch
      %174 = sbr.rel (0) target = $region125
    $region124: #{_lambda_.1} parent=1 // pred_region
      %s176 = ssub.s32 16, 16
      %177 = vsyncadd [#allocation15], %s176
      %s179 = sshll.u32 [#allocation16], 4
      %s180 = int_to_ptr.vmem [resolvable:$true] %s179
      %182 = dma.hbm_to_vmem [thread:$0]  %s61, 16, %s180, [#allocation15]
    $region125: #{_lambda_.1} parent=1 // pred_fallthru
      _
    // Predicated region
    $region126: #{_lambda_.1} parent=1 // pred_check
      _
    $region127: #{_lambda_.1} parent=1 // pred_check_branch
      %184 = sbr.rel (0) target = $region129
    $region128: #{_lambda_.1} parent=1 // pred_region
      _
    $region129: #{_lambda_.1} parent=1 // pred_fallthru
      _
    // Predicated region
    $region130: #{_lambda_.1} parent=1 // pred_check
      _
    $region131: #{_lambda_.1} parent=1 // pred_check_branch
      %186 = sbr.rel (0) target = $region133
    $region132: #{_lambda_.1} parent=1 // pred_region
      %s188 = ssub.s32 16, 16
      %189 = vsyncadd [#allocation18], %s188
      %s191 = sshll.u32 [#allocation17], 4
      %s192 = int_to_ptr.vmem [resolvable:$true] %s191
      %194 = dma.hbm_to_vmem [thread:$0]  %s65, 16, %s192, [#allocation18]
    $region133: #{_lambda_.1} parent=1 // pred_fallthru
      _
    // Predicated region
    $region134: #{_lambda_.1} parent=1 // pred_check
      _
    $region135: #{_lambda_.1} parent=1 // pred_check_branch
      %196 = sbr.rel (0) target = $region137
    $region136: #{_lambda_.1} parent=1 // pred_region
      %197 = dma.done [#allocation9], 16
    $region137: #{_lambda_.1} parent=1 // pred_fallthru
      _
    // Predicated region
    $region138: #{_lambda_.1} parent=1 // pred_check
      _
    $region139: #{_lambda_.1} parent=1 // pred_check_branch
      %199 = sbr.rel (0) target = $region141
    $region140: #{_lambda_.1} parent=1 // pred_region
      %200 = dma.done [#allocation12], 16
    $region141: #{_lambda_.1} parent=1 // pred_fallthru
      _
    // Predicated region
    $region142: #{_lambda_.1} parent=1 // pred_check
      _
    $region143: #{_lambda_.1} parent=1 // pred_check_branch
      %202 = sbr.rel (0) target = $region145
    $region144: #{_lambda_.1} parent=1 // pred_region
      %203 = dma.done [#allocation12], 16
    $region145: #{_lambda_.1} parent=1 // pred_fallthru
      _
    // Predicated region
    $region146: #{_lambda_.1} parent=1 // pred_check
      _
    $region147: #{_lambda_.1} parent=1 // pred_check_branch
      %205 = sbr.rel (0) target = $region149
    $region148: #{_lambda_.1} parent=1 // pred_region
      %206 = dma.done [#allocation15], 16
    $region149: #{_lambda_.1} parent=1 // pred_fallthru
      _
    // Predicated region
    $region150: #{_lambda_.1} parent=1 // pred_check
      _
    $region151: #{_lambda_.1} parent=1 // pred_check_branch
      %208 = sbr.rel (0) target = $region153
    $region152: #{_lambda_.1} parent=1 // pred_region
      %209 = dma.done [#allocation15], 16
    $region153: #{_lambda_.1} parent=1 // pred_fallthru
      _
    // Predicated region
    $region154: #{_lambda_.1} parent=1 // pred_check
      _
    $region155: #{_lambda_.1} parent=1 // pred_check_branch
      %211 = sbr.rel (0) target = $region157
    $region156: #{_lambda_.1} parent=1 // pred_region
      %212 = dma.done [#allocation18], 16
    $region157: #{_lambda_.1} parent=1 // pred_fallthru
      _
    %v213 = vld [vmem:[%s1] sm:$0xff]
    %v214 = vld [vmem:[%s1 + $0x8] sm:$0xff]
    %v215 = vld [vmem:[%s1 + $0x10] sm:$0xff]
    %v216 = vld [vmem:[%s1 + $0x18] sm:$0xff]
    %v217 = vld [vmem:[%s1 + $0x20] sm:$0xff]
    %v218 = vld [vmem:[%s1 + $0x28] sm:$0xff]
    %v219 = vld [vmem:[%s1 + $0x30] sm:$0xff]
    %v220 = vld [vmem:[%s1 + $0x38] sm:$0xff]
    %v221 = vld [vmem:[%s1 + $0x40] sm:$0xff]
    %v222 = vld [vmem:[%s1 + $0x48] sm:$0xff]
    %v223 = vld [vmem:[%s1 + $0x50] sm:$0xff]
    %v224 = vld [vmem:[%s1 + $0x58] sm:$0xff]
    %v225 = vld [vmem:[%s1 + $0x60] sm:$0xff]
    %v226 = vld [vmem:[%s1 + $0x68] sm:$0xff]
    %v227 = vld [vmem:[%s1 + $0x70] sm:$0xff]
    %v228 = vld [vmem:[%s1 + $0x78] sm:$0xff]
    %vm229 = vcmask 27648
    %230 = vst.msk [vmem:[#allocation2] sm:$0xf] %vm229, 0.0
    %231 = vst.msk [vmem:[#allocation2 + $0x4] sm:$0xf] %vm229, 0.0
    %232 = vst.msk [vmem:[#allocation2 + $0x8] sm:$0xf] %vm229, 0.0
    %233 = vst.msk [vmem:[#allocation2 + $0xc] sm:$0xf] %vm229, 0.0
    %234 = vst.msk [vmem:[#allocation2 + $0x10] sm:$0xf] %vm229, 0.0
    %235 = vst.msk [vmem:[#allocation2 + $0x14] sm:$0xf] %vm229, 0.0
    %236 = vst.msk [vmem:[#allocation2 + $0x18] sm:$0xf] %vm229, 0.0
    %237 = vst.msk [vmem:[#allocation2 + $0x1c] sm:$0xf] %vm229, 0.0
    %238 = vst.msk [vmem:[#allocation2 + $0x20] sm:$0xf] %vm229, 0.0
    %239 = vst.msk [vmem:[#allocation2 + $0x24] sm:$0xf] %vm229, 0.0
    %240 = vst.msk [vmem:[#allocation2 + $0x28] sm:$0xf] %vm229, 0.0
    %241 = vst.msk [vmem:[#allocation2 + $0x2c] sm:$0xf] %vm229, 0.0
    %242 = vst.msk [vmem:[#allocation2 + $0x30] sm:$0xf] %vm229, 0.0
    %243 = vst.msk [vmem:[#allocation2 + $0x34] sm:$0xf] %vm229, 0.0
    %244 = vst.msk [vmem:[#allocation2 + $0x38] sm:$0xf] %vm229, 0.0
    %245 = vst.msk [vmem:[#allocation2 + $0x3c] sm:$0xf] %vm229, 0.0
    %246 = vst.msk [vmem:[#allocation2 + $0x40] sm:$0xf] %vm229, 0.0
    %247 = vst.msk [vmem:[#allocation2 + $0x44] sm:$0xf] %vm229, 0.0
    %248 = vst.msk [vmem:[#allocation2 + $0x48] sm:$0xf] %vm229, 0.0
    %249 = vst.msk [vmem:[#allocation2 + $0x4c] sm:$0xf] %vm229, 0.0
    %250 = vst.msk [vmem:[#allocation2 + $0x50] sm:$0xf] %vm229, 0.0
    %251 = vst.msk [vmem:[#allocation2 + $0x54] sm:$0xf] %vm229, 0.0
    %252 = vst.msk [vmem:[#allocation2 + $0x58] sm:$0xf] %vm229, 0.0
    %253 = vst.msk [vmem:[#allocation2 + $0x5c] sm:$0xf] %vm229, 0.0
    %254 = vst.msk [vmem:[#allocation2 + $0x60] sm:$0xf] %vm229, 0.0
    %255 = vst.msk [vmem:[#allocation2 + $0x64] sm:$0xf] %vm229, 0.0
    %256 = vst.msk [vmem:[#allocation2 + $0x68] sm:$0xf] %vm229, 0.0
    %257 = vst.msk [vmem:[#allocation2 + $0x6c] sm:$0xf] %vm229, 0.0
    %258 = vst.msk [vmem:[#allocation2 + $0x70] sm:$0xf] %vm229, 0.0
    %259 = vst.msk [vmem:[#allocation2 + $0x74] sm:$0xf] %vm229, 0.0
    %260 = vst.msk [vmem:[#allocation2 + $0x78] sm:$0xf] %vm229, 0.0
    %261 = vst.msk [vmem:[#allocation2 + $0x7c] sm:$0xf] %vm229, 0.0
    %262 = vst.msk [vmem:[#allocation2 + $0x80] sm:$0xf] %vm229, 0.0
    %263 = vst.msk [vmem:[#allocation2 + $0x84] sm:$0xf] %vm229, 0.0
    %264 = vst.msk [vmem:[#allocation2 + $0x88] sm:$0xf] %vm229, 0.0
    %265 = vst.msk [vmem:[#allocation2 + $0x8c] sm:$0xf] %vm229, 0.0
    %s266 = scalar_lea.vmem [#allocation2], 4
    %267 = vst.msk [vmem:[%s266] sm:$0xf] %vm229, %v213
    %268 = vst.msk [vmem:[%s266 + $0x48] sm:$0xf] %vm229, %v221
    %s269 = scalar_lea.vmem [#allocation2], 8
    %vm270 = vcmask 31748
    %271 = vst.msk [vmem:[%s269 - $0x4] sm:$0xf0] %vm270, %v213
    %272 = vst.msk [vmem:[%s269 + $0x44] sm:$0xf0] %vm270, %v221
    %s273 = scalar_lea.vmem [#allocation2], 12
    %274 = vst.msk [vmem:[%s273] sm:$0xf] %vm229, %v214
    %275 = vst.msk [vmem:[%s273 + $0x48] sm:$0xf] %vm229, %v222
    %s276 = scalar_lea.vmem [#allocation2], 16
    %277 = vst.msk [vmem:[%s276 - $0x4] sm:$0xf0] %vm270, %v214
    %278 = vst.msk [vmem:[%s276 + $0x44] sm:$0xf0] %vm270, %v222
    %s279 = scalar_lea.vmem [#allocation2], 20
    %280 = vst.msk [vmem:[%s279] sm:$0xf] %vm229, %v215
    %281 = vst.msk [vmem:[%s279 + $0x48] sm:$0xf] %vm229, %v223
    %s282 = scalar_lea.vmem [#allocation2], 24
    %283 = vst.msk [vmem:[%s282 - $0x4] sm:$0xf0] %vm270, %v215
    %284 = vst.msk [vmem:[%s282 + $0x44] sm:$0xf0] %vm270, %v223
    %s285 = scalar_lea.vmem [#allocation2], 28
    %286 = vst.msk [vmem:[%s285] sm:$0xf] %vm229, %v216
    %287 = vst.msk [vmem:[%s285 + $0x48] sm:$0xf] %vm229, %v224
    %s288 = scalar_lea.vmem [#allocation2], 32
    %289 = vst.msk [vmem:[%s288 - $0x4] sm:$0xf0] %vm270, %v216
    %290 = vst.msk [vmem:[%s288 + $0x44] sm:$0xf0] %vm270, %v224
    %s291 = scalar_lea.vmem [#allocation2], 36
    %292 = vst.msk [vmem:[%s291] sm:$0xf] %vm229, %v217
    %293 = vst.msk [vmem:[%s291 + $0x48] sm:$0xf] %vm229, %v225
    %s294 = scalar_lea.vmem [#allocation2], 40
    %295 = vst.msk [vmem:[%s294 - $0x4] sm:$0xf0] %vm270, %v217
    %296 = vst.msk [vmem:[%s294 + $0x44] sm:$0xf0] %vm270, %v225
    %s297 = scalar_lea.vmem [#allocation2], 44
    %298 = vst.msk [vmem:[%s297] sm:$0xf] %vm229, %v218
    %299 = vst.msk [vmem:[%s297 + $0x48] sm:$0xf] %vm229, %v226
    %s300 = scalar_lea.vmem [#allocation2], 48
    %301 = vst.msk [vmem:[%s300 - $0x4] sm:$0xf0] %vm270, %v218
    %302 = vst.msk [vmem:[%s300 + $0x44] sm:$0xf0] %vm270, %v226
    %s303 = scalar_lea.vmem [#allocation2], 52
    %304 = vst.msk [vmem:[%s303] sm:$0xf] %vm229, %v219
    %305 = vst.msk [vmem:[%s303 + $0x48] sm:$0xf] %vm229, %v227
    %s306 = scalar_lea.vmem [#allocation2], 56
    %307 = vst.msk [vmem:[%s306 - $0x4] sm:$0xf0] %vm270, %v219
    %308 = vst.msk [vmem:[%s306 + $0x44] sm:$0xf0] %vm270, %v227
    %s309 = scalar_lea.vmem [#allocation2], 60
    %310 = vst.msk [vmem:[%s309] sm:$0xf] %vm229, %v220
    %311 = vst.msk [vmem:[%s309 + $0x48] sm:$0xf] %vm229, %v228
    %s312 = scalar_lea.vmem [#allocation2], 64
    %313 = vst.msk [vmem:[%s312 - $0x4] sm:$0xf0] %vm270, %v220
    %314 = vst.msk [vmem:[%s312 + $0x44] sm:$0xf0] %vm270, %v228
    %v315 = vld [vmem:[#allocation2] sm:$0xf]
    %v316 = vld [vmem:[#allocation2 + $0x4] sm:$0xf]
    %v317 = vld [vmem:[#allocation2 + $0x8] sm:$0xf]
    %v318 = vld [vmem:[#allocation2 + $0xc] sm:$0xf]
    %v319 = vld [vmem:[#allocation2 + $0x10] sm:$0xf]
    %v320 = vld [vmem:[#allocation2 + $0x14] sm:$0xf]
    %v321 = vld [vmem:[#allocation2 + $0x18] sm:$0xf]
    %v322 = vld [vmem:[#allocation2 + $0x1c] sm:$0xf]
    %v323 = vld [vmem:[#allocation2 + $0x20] sm:$0xf]
    %v324 = vld [vmem:[#allocation2 + $0x24] sm:$0xf]
    %v325 = vld [vmem:[#allocation2 + $0x28] sm:$0xf]
    %v326 = vld [vmem:[#allocation2 + $0x2c] sm:$0xf]
    %v327 = vld [vmem:[#allocation2 + $0x30] sm:$0xf]
    %v328 = vld [vmem:[#allocation2 + $0x34] sm:$0xf]
    %v329 = vld [vmem:[#allocation2 + $0x38] sm:$0xf]
    %v330 = vld [vmem:[#allocation2 + $0x3c] sm:$0xf]
    %v331 = vld [vmem:[#allocation2 + $0x40] sm:$0xf]
    %v332 = vld [vmem:[#allocation2 + $0x44] sm:$0xf]
    %v333 = vld [vmem:[#allocation2 + $0x48] sm:$0xf]
    %v334 = vld [vmem:[#allocation2 + $0x4c] sm:$0xf]
    %v335 = vld [vmem:[#allocation2 + $0x50] sm:$0xf]
    %v336 = vld [vmem:[#allocation2 + $0x54] sm:$0xf]
    %v337 = vld [vmem:[#allocation2 + $0x58] sm:$0xf]
    %v338 = vld [vmem:[#allocation2 + $0x5c] sm:$0xf]
    %v339 = vld [vmem:[#allocation2 + $0x60] sm:$0xf]
    %v340 = vld [vmem:[#allocation2 + $0x64] sm:$0xf]
    %v341 = vld [vmem:[#allocation2 + $0x68] sm:$0xf]
    %v342 = vld [vmem:[#allocation2 + $0x6c] sm:$0xf]
    %v343 = vld [vmem:[#allocation2 + $0x70] sm:$0xf]
    %v344 = vld [vmem:[#allocation2 + $0x74] sm:$0xf]
    %v345 = vld [vmem:[#allocation2 + $0x78] sm:$0xf]
    %v346 = vld [vmem:[#allocation2 + $0x7c] sm:$0xf]
    %v347 = vld [vmem:[#allocation2 + $0x80] sm:$0xf]
    %v348 = vld [vmem:[#allocation2 + $0x84] sm:$0xf]
    %v349 = vld [vmem:[#allocation2 + $0x88] sm:$0xf]
    %v350 = vld [vmem:[#allocation2 + $0x8c] sm:$0xf]
    %v351 = vld [vmem:[%s3] sm:$0xff]
    %v352 = vld [vmem:[%s3 + $0x8] sm:$0x1]
    %v353 = vlaneseq
    %v354 = vshrl.u32 %v353, 7
    %v355 = vsub.s32 0, %v354
    %v356 = vrot.slane %v351, %v355
    %v357 = vmul.f32 %v315, %v356
    %v358 = vmul.f32 %v316, %v356
    %v359 = vmul.f32 %v317, %v356
    %v360 = vmul.f32 %v318, %v356
    %v361 = vmul.f32 %v319, %v356
    %v362 = vmul.f32 %v320, %v356
    %v363 = vmul.f32 %v321, %v356
    %v364 = vmul.f32 %v322, %v356
    %v365 = vmul.f32 %v323, %v356
    %v366 = vmul.f32 %v324, %v356
    %v367 = vmul.f32 %v325, %v356
    %v368 = vmul.f32 %v326, %v356
    %v369 = vmul.f32 %v327, %v356
    %v370 = vmul.f32 %v328, %v356
    %v371 = vmul.f32 %v329, %v356
    %v372 = vmul.f32 %v330, %v356
    %v373 = vmul.f32 %v333, %v356
    %v374 = vmul.f32 %v334, %v356
    %v375 = vmul.f32 %v335, %v356
    %v376 = vmul.f32 %v336, %v356
    %v377 = vmul.f32 %v337, %v356
    %v378 = vmul.f32 %v338, %v356
    %v379 = vmul.f32 %v339, %v356
    %v380 = vmul.f32 %v340, %v356
    %v381 = vmul.f32 %v341, %v356
    %v382 = vmul.f32 %v342, %v356
    %v383 = vmul.f32 %v343, %v356
    %v384 = vmul.f32 %v344, %v356
    %v385 = vmul.f32 %v345, %v356
    %v386 = vmul.f32 %v346, %v356
    %v387 = vmul.f32 %v347, %v356
    %v388 = vmul.f32 %v348, %v356
    %v389 = vadd.f32 %v357, 0.0
    %v390 = vadd.f32 %v358, 0.0
    %v391 = vadd.f32 %v359, 0.0
    %v392 = vadd.f32 %v360, 0.0
    %v393 = vadd.f32 %v361, 0.0
    %v394 = vadd.f32 %v362, 0.0
    %v395 = vadd.f32 %v363, 0.0
    %v396 = vadd.f32 %v364, 0.0
    %v397 = vadd.f32 %v365, 0.0
    %v398 = vadd.f32 %v366, 0.0
    %v399 = vadd.f32 %v367, 0.0
    %v400 = vadd.f32 %v368, 0.0
    %v401 = vadd.f32 %v369, 0.0
    %v402 = vadd.f32 %v370, 0.0
    %v403 = vadd.f32 %v371, 0.0
    %v404 = vadd.f32 %v372, 0.0
    %v405 = vadd.f32 %v373, 0.0
    %v406 = vadd.f32 %v374, 0.0
    %v407 = vadd.f32 %v375, 0.0
    %v408 = vadd.f32 %v376, 0.0
    %v409 = vadd.f32 %v377, 0.0
    %v410 = vadd.f32 %v378, 0.0
    %v411 = vadd.f32 %v379, 0.0
    %v412 = vadd.f32 %v380, 0.0
    %v413 = vadd.f32 %v381, 0.0
    %v414 = vadd.f32 %v382, 0.0
    %v415 = vadd.f32 %v383, 0.0
    %v416 = vadd.f32 %v384, 0.0
    %v417 = vadd.f32 %v385, 0.0
    %v418 = vadd.f32 %v386, 0.0
    %v419 = vadd.f32 %v387, 0.0
    %v420 = vadd.f32 %v388, 0.0
    %v421 = vlaneseq
    %v422 = vshrl.u32 %v421, 7
    %v423 = vsub.s32 1, %v422
    %v424 = vrot.slane %v351, %v423
    %v425 = vmul.f32 %v315, %v424
    %v426 = vmul.f32 %v316, %v424
    %v427 = vmul.f32 %v317, %v424
    %v428 = vmul.f32 %v318, %v424
    %v429 = vmul.f32 %v319, %v424
    %v430 = vmul.f32 %v320, %v424
    %v431 = vmul.f32 %v321, %v424
    %v432 = vmul.f32 %v322, %v424
    %v433 = vmul.f32 %v323, %v424
    %v434 = vmul.f32 %v324, %v424
    %v435 = vmul.f32 %v325, %v424
    %v436 = vmul.f32 %v326, %v424
    %v437 = vmul.f32 %v327, %v424
    %v438 = vmul.f32 %v328, %v424
    %v439 = vmul.f32 %v329, %v424
    %v440 = vmul.f32 %v330, %v424
    %v441 = vmul.f32 %v333, %v424
    %v442 = vmul.f32 %v334, %v424
    %v443 = vmul.f32 %v335, %v424
    %v444 = vmul.f32 %v336, %v424
    %v445 = vmul.f32 %v337, %v424
    %v446 = vmul.f32 %v338, %v424
    %v447 = vmul.f32 %v339, %v424
    %v448 = vmul.f32 %v340, %v424
    %v449 = vmul.f32 %v341, %v424
    %v450 = vmul.f32 %v342, %v424
    %v451 = vmul.f32 %v343, %v424
    %v452 = vmul.f32 %v344, %v424
    %v453 = vmul.f32 %v345, %v424
    %v454 = vmul.f32 %v346, %v424
    %v455 = vmul.f32 %v347, %v424
    %v456 = vmul.f32 %v348, %v424
    %v489 = vrot.slane %v425, 1
    %v490 = vrot.slane %v426, 1
    %v491 = vrot.slane %v427, 1
    %v492 = vrot.slane %v428, 1
    %v493 = vrot.slane %v429, 1
    %v494 = vrot.slane %v430, 1
    %v495 = vrot.slane %v431, 1
    %v496 = vrot.slane %v432, 1
    %v497 = vrot.slane %v433, 1
    %v498 = vrot.slane %v434, 1
    %v499 = vrot.slane %v435, 1
    %v500 = vrot.slane %v436, 1
    %v501 = vrot.slane %v437, 1
    %v502 = vrot.slane %v438, 1
    %v503 = vrot.slane %v439, 1
    %v504 = vrot.slane %v440, 1
    %v505 = vrot.slane %v441, 1
    %v506 = vrot.slane %v442, 1
    %v507 = vrot.slane %v443, 1
    %v508 = vrot.slane %v444, 1
    %v509 = vrot.slane %v445, 1
    %v510 = vrot.slane %v446, 1
    %v511 = vrot.slane %v447, 1
    %v512 = vrot.slane %v448, 1
    %v513 = vrot.slane %v449, 1
    %v514 = vrot.slane %v450, 1
    %v515 = vrot.slane %v451, 1
    %v516 = vrot.slane %v452, 1
    %v517 = vrot.slane %v453, 1
    %v518 = vrot.slane %v454, 1
    %v519 = vrot.slane %v455, 1
    %v520 = vrot.slane %v456, 1
    %v553 = vadd.f32 %v389, %v489
    %v554 = vadd.f32 %v390, %v490
    %v555 = vadd.f32 %v391, %v491
    %v556 = vadd.f32 %v392, %v492
    %v557 = vadd.f32 %v393, %v493
    %v558 = vadd.f32 %v394, %v494
    %v559 = vadd.f32 %v395, %v495
    %v560 = vadd.f32 %v396, %v496
    %v561 = vadd.f32 %v397, %v497
    %v562 = vadd.f32 %v398, %v498
    %v563 = vadd.f32 %v399, %v499
    %v564 = vadd.f32 %v400, %v500
    %v565 = vadd.f32 %v401, %v501
    %v566 = vadd.f32 %v402, %v502
    %v567 = vadd.f32 %v403, %v503
    %v568 = vadd.f32 %v404, %v504
    %v569 = vadd.f32 %v405, %v505
    %v570 = vadd.f32 %v406, %v506
    %v571 = vadd.f32 %v407, %v507
    %v572 = vadd.f32 %v408, %v508
    %v573 = vadd.f32 %v409, %v509
    %v574 = vadd.f32 %v410, %v510
    %v575 = vadd.f32 %v411, %v511
    %v576 = vadd.f32 %v412, %v512
    %v577 = vadd.f32 %v413, %v513
    %v578 = vadd.f32 %v414, %v514
    %v579 = vadd.f32 %v415, %v515
    %v580 = vadd.f32 %v416, %v516
    %v581 = vadd.f32 %v417, %v517
    %v582 = vadd.f32 %v418, %v518
    %v583 = vadd.f32 %v419, %v519
    %v584 = vadd.f32 %v420, %v520
    %v585 = vlaneseq
    %v586 = vshrl.u32 %v585, 7
    %v587 = vsub.s32 2, %v586
    %v588 = vrot.slane %v351, %v587
    %v589 = vmul.f32 %v315, %v588
    %v590 = vmul.f32 %v316, %v588
    %v591 = vmul.f32 %v317, %v588
    %v592 = vmul.f32 %v318, %v588
    %v593 = vmul.f32 %v319, %v588
    %v594 = vmul.f32 %v320, %v588
    %v595 = vmul.f32 %v321, %v588
    %v596 = vmul.f32 %v322, %v588
    %v597 = vmul.f32 %v323, %v588
    %v598 = vmul.f32 %v324, %v588
    %v599 = vmul.f32 %v325, %v588
    %v600 = vmul.f32 %v326, %v588
    %v601 = vmul.f32 %v327, %v588
    %v602 = vmul.f32 %v328, %v588
    %v603 = vmul.f32 %v329, %v588
    %v604 = vmul.f32 %v330, %v588
    %v605 = vmul.f32 %v333, %v588
    %v606 = vmul.f32 %v334, %v588
    %v607 = vmul.f32 %v335, %v588
    %v608 = vmul.f32 %v336, %v588
    %v609 = vmul.f32 %v337, %v588
    %v610 = vmul.f32 %v338, %v588
    %v611 = vmul.f32 %v339, %v588
    %v612 = vmul.f32 %v340, %v588
    %v613 = vmul.f32 %v341, %v588
    %v614 = vmul.f32 %v342, %v588
    %v615 = vmul.f32 %v343, %v588
    %v616 = vmul.f32 %v344, %v588
    %v617 = vmul.f32 %v345, %v588
    %v618 = vmul.f32 %v346, %v588
    %v619 = vmul.f32 %v347, %v588
    %v620 = vmul.f32 %v348, %v588
    %v653 = vrot.slane %v589, 2
    %v654 = vrot.slane %v590, 2
    %v655 = vrot.slane %v591, 2
    %v656 = vrot.slane %v592, 2
    %v657 = vrot.slane %v593, 2
    %v658 = vrot.slane %v594, 2
    %v659 = vrot.slane %v595, 2
    %v660 = vrot.slane %v596, 2
    %v661 = vrot.slane %v597, 2
    %v662 = vrot.slane %v598, 2
    %v663 = vrot.slane %v599, 2
    %v664 = vrot.slane %v600, 2
    %v665 = vrot.slane %v601, 2
    %v666 = vrot.slane %v602, 2
    %v667 = vrot.slane %v603, 2
    %v668 = vrot.slane %v604, 2
    %v669 = vrot.slane %v605, 2
    %v670 = vrot.slane %v606, 2
    %v671 = vrot.slane %v607, 2
    %v672 = vrot.slane %v608, 2
    %v673 = vrot.slane %v609, 2
    %v674 = vrot.slane %v610, 2
    %v675 = vrot.slane %v611, 2
    %v676 = vrot.slane %v612, 2
    %v677 = vrot.slane %v613, 2
    %v678 = vrot.slane %v614, 2
    %v679 = vrot.slane %v615, 2
    %v680 = vrot.slane %v616, 2
    %v681 = vrot.slane %v617, 2
    %v682 = vrot.slane %v618, 2
    %v683 = vrot.slane %v619, 2
    %v684 = vrot.slane %v620, 2
    %v717 = vadd.f32 %v553, %v653
    %v718 = vadd.f32 %v554, %v654
    %v719 = vadd.f32 %v555, %v655
    %v720 = vadd.f32 %v556, %v656
    %v721 = vadd.f32 %v557, %v657
    %v722 = vadd.f32 %v558, %v658
    %v723 = vadd.f32 %v559, %v659
    %v724 = vadd.f32 %v560, %v660
    %v725 = vadd.f32 %v561, %v661
    %v726 = vadd.f32 %v562, %v662
    %v727 = vadd.f32 %v563, %v663
    %v728 = vadd.f32 %v564, %v664
    %v729 = vadd.f32 %v565, %v665
    %v730 = vadd.f32 %v566, %v666
    %v731 = vadd.f32 %v567, %v667
    %v732 = vadd.f32 %v568, %v668
    %v733 = vadd.f32 %v569, %v669
    %v734 = vadd.f32 %v570, %v670
    %v735 = vadd.f32 %v571, %v671
    %v736 = vadd.f32 %v572, %v672
    %v737 = vadd.f32 %v573, %v673
    %v738 = vadd.f32 %v574, %v674
    %v739 = vadd.f32 %v575, %v675
    %v740 = vadd.f32 %v576, %v676
    %v741 = vadd.f32 %v577, %v677
    %v742 = vadd.f32 %v578, %v678
    %v743 = vadd.f32 %v579, %v679
    %v744 = vadd.f32 %v580, %v680
    %v745 = vadd.f32 %v581, %v681
    %v746 = vadd.f32 %v582, %v682
    %v747 = vadd.f32 %v583, %v683
    %v748 = vadd.f32 %v584, %v684
    %v749 = vlaneseq
    %v750 = vshrl.u32 %v749, 7
    %v751 = vsub.s32 3, %v750
    %v752 = vrot.slane %v351, %v751
    %v753 = vmul.f32 %v315, %v752
    %v754 = vmul.f32 %v316, %v752
    %v755 = vmul.f32 %v317, %v752
    %v756 = vmul.f32 %v318, %v752
    %v757 = vmul.f32 %v319, %v752
    %v758 = vmul.f32 %v320, %v752
    %v759 = vmul.f32 %v321, %v752
    %v760 = vmul.f32 %v322, %v752
    %v761 = vmul.f32 %v323, %v752
    %v762 = vmul.f32 %v324, %v752
    %v763 = vmul.f32 %v325, %v752
    %v764 = vmul.f32 %v326, %v752
    %v765 = vmul.f32 %v327, %v752
    %v766 = vmul.f32 %v328, %v752
    %v767 = vmul.f32 %v329, %v752
    %v768 = vmul.f32 %v330, %v752
    %v769 = vmul.f32 %v333, %v752
    %v770 = vmul.f32 %v334, %v752
    %v771 = vmul.f32 %v335, %v752
    %v772 = vmul.f32 %v336, %v752
    %v773 = vmul.f32 %v337, %v752
    %v774 = vmul.f32 %v338, %v752
    %v775 = vmul.f32 %v339, %v752
    %v776 = vmul.f32 %v340, %v752
    %v777 = vmul.f32 %v341, %v752
    %v778 = vmul.f32 %v342, %v752
    %v779 = vmul.f32 %v343, %v752
    %v780 = vmul.f32 %v344, %v752
    %v781 = vmul.f32 %v345, %v752
    %v782 = vmul.f32 %v346, %v752
    %v783 = vmul.f32 %v347, %v752
    %v784 = vmul.f32 %v348, %v752
    %v817 = vrot.slane %v753, 3
    %v818 = vrot.slane %v754, 3
    %v819 = vrot.slane %v755, 3
    %v820 = vrot.slane %v756, 3
    %v821 = vrot.slane %v757, 3
    %v822 = vrot.slane %v758, 3
    %v823 = vrot.slane %v759, 3
    %v824 = vrot.slane %v760, 3
    %v825 = vrot.slane %v761, 3
    %v826 = vrot.slane %v762, 3
    %v827 = vrot.slane %v763, 3
    %v828 = vrot.slane %v764, 3
    %v829 = vrot.slane %v765, 3
    %v830 = vrot.slane %v766, 3
    %v831 = vrot.slane %v767, 3
    %v832 = vrot.slane %v768, 3
    %v833 = vrot.slane %v769, 3
    %v834 = vrot.slane %v770, 3
    %v835 = vrot.slane %v771, 3
    %v836 = vrot.slane %v772, 3
    %v837 = vrot.slane %v773, 3
    %v838 = vrot.slane %v774, 3
    %v839 = vrot.slane %v775, 3
    %v840 = vrot.slane %v776, 3
    %v841 = vrot.slane %v777, 3
    %v842 = vrot.slane %v778, 3
    %v843 = vrot.slane %v779, 3
    %v844 = vrot.slane %v780, 3
    %v845 = vrot.slane %v781, 3
    %v846 = vrot.slane %v782, 3
    %v847 = vrot.slane %v783, 3
    %v848 = vrot.slane %v784, 3
    %v881 = vadd.f32 %v717, %v817
    %v882 = vadd.f32 %v718, %v818
    %v883 = vadd.f32 %v719, %v819
    %v884 = vadd.f32 %v720, %v820
    %v885 = vadd.f32 %v721, %v821
    %v886 = vadd.f32 %v722, %v822
    %v887 = vadd.f32 %v723, %v823
    %v888 = vadd.f32 %v724, %v824
    %v889 = vadd.f32 %v725, %v825
    %v890 = vadd.f32 %v726, %v826
    %v891 = vadd.f32 %v727, %v827
    %v892 = vadd.f32 %v728, %v828
    %v893 = vadd.f32 %v729, %v829
    %v894 = vadd.f32 %v730, %v830
    %v895 = vadd.f32 %v731, %v831
    %v896 = vadd.f32 %v732, %v832
    %v897 = vadd.f32 %v733, %v833
    %v898 = vadd.f32 %v734, %v834
    %v899 = vadd.f32 %v735, %v835
    %v900 = vadd.f32 %v736, %v836
    %v901 = vadd.f32 %v737, %v837
    %v902 = vadd.f32 %v738, %v838
    %v903 = vadd.f32 %v739, %v839
    %v904 = vadd.f32 %v740, %v840
    %v905 = vadd.f32 %v741, %v841
    %v906 = vadd.f32 %v742, %v842
    %v907 = vadd.f32 %v743, %v843
    %v908 = vadd.f32 %v744, %v844
    %v909 = vadd.f32 %v745, %v845
    %v910 = vadd.f32 %v746, %v846
    %v911 = vadd.f32 %v747, %v847
    %v912 = vadd.f32 %v748, %v848
    %v913 = vlaneseq
    %v914 = vshrl.u32 %v913, 7
    %v915 = vsub.s32 4, %v914
    %v916 = vrot.slane %v351, %v915
    %v917 = vmul.f32 %v316, %v916
    %v918 = vmul.f32 %v317, %v916
    %v919 = vmul.f32 %v318, %v916
    %v920 = vmul.f32 %v319, %v916
    %v921 = vmul.f32 %v320, %v916
    %v922 = vmul.f32 %v321, %v916
    %v923 = vmul.f32 %v322, %v916
    %v924 = vmul.f32 %v323, %v916
    %v925 = vmul.f32 %v324, %v916
    %v926 = vmul.f32 %v325, %v916
    %v927 = vmul.f32 %v326, %v916
    %v928 = vmul.f32 %v327, %v916
    %v929 = vmul.f32 %v328, %v916
    %v930 = vmul.f32 %v329, %v916
    %v931 = vmul.f32 %v330, %v916
    %v932 = vmul.f32 %v331, %v916
    %v933 = vmul.f32 %v334, %v916
    %v934 = vmul.f32 %v335, %v916
    %v935 = vmul.f32 %v336, %v916
    %v936 = vmul.f32 %v337, %v916
    %v937 = vmul.f32 %v338, %v916
    %v938 = vmul.f32 %v339, %v916
    %v939 = vmul.f32 %v340, %v916
    %v940 = vmul.f32 %v341, %v916
    %v941 = vmul.f32 %v342, %v916
    %v942 = vmul.f32 %v343, %v916
    %v943 = vmul.f32 %v344, %v916
    %v944 = vmul.f32 %v345, %v916
    %v945 = vmul.f32 %v346, %v916
    %v946 = vmul.f32 %v347, %v916
    %v947 = vmul.f32 %v348, %v916
    %v948 = vmul.f32 %v349, %v916
    %v949 = vadd.f32 %v881, %v917
    %v950 = vadd.f32 %v882, %v918
    %v951 = vadd.f32 %v883, %v919
    %v952 = vadd.f32 %v884, %v920
    %v953 = vadd.f32 %v885, %v921
    %v954 = vadd.f32 %v886, %v922
    %v955 = vadd.f32 %v887, %v923
    %v956 = vadd.f32 %v888, %v924
    %v957 = vadd.f32 %v889, %v925
    %v958 = vadd.f32 %v890, %v926
    %v959 = vadd.f32 %v891, %v927
    %v960 = vadd.f32 %v892, %v928
    %v961 = vadd.f32 %v893, %v929
    %v962 = vadd.f32 %v894, %v930
    %v963 = vadd.f32 %v895, %v931
    %v964 = vadd.f32 %v896, %v932
    %v965 = vadd.f32 %v897, %v933
    %v966 = vadd.f32 %v898, %v934
    %v967 = vadd.f32 %v899, %v935
    %v968 = vadd.f32 %v900, %v936
    %v969 = vadd.f32 %v901, %v937
    %v970 = vadd.f32 %v902, %v938
    %v971 = vadd.f32 %v903, %v939
    %v972 = vadd.f32 %v904, %v940
    %v973 = vadd.f32 %v905, %v941
    %v974 = vadd.f32 %v906, %v942
    %v975 = vadd.f32 %v907, %v943
    %v976 = vadd.f32 %v908, %v944
    %v977 = vadd.f32 %v909, %v945
    %v978 = vadd.f32 %v910, %v946
    %v979 = vadd.f32 %v911, %v947
    %v980 = vadd.f32 %v912, %v948
    %v981 = vlaneseq
    %v982 = vshrl.u32 %v981, 7
    %v983 = vsub.s32 5, %v982
    %v984 = vrot.slane %v351, %v983
    %v985 = vmul.f32 %v316, %v984
    %v986 = vmul.f32 %v317, %v984
    %v987 = vmul.f32 %v318, %v984
    %v988 = vmul.f32 %v319, %v984
    %v989 = vmul.f32 %v320, %v984
    %v990 = vmul.f32 %v321, %v984
    %v991 = vmul.f32 %v322, %v984
    %v992 = vmul.f32 %v323, %v984
    %v993 = vmul.f32 %v324, %v984
    %v994 = vmul.f32 %v325, %v984
    %v995 = vmul.f32 %v326, %v984
    %v996 = vmul.f32 %v327, %v984
    %v997 = vmul.f32 %v328, %v984
    %v998 = vmul.f32 %v329, %v984
    %v999 = vmul.f32 %v330, %v984
    %v1000 = vmul.f32 %v331, %v984
    %v1001 = vmul.f32 %v334, %v984
    %v1002 = vmul.f32 %v335, %v984
    %v1003 = vmul.f32 %v336, %v984
    %v1004 = vmul.f32 %v337, %v984
    %v1005 = vmul.f32 %v338, %v984
    %v1006 = vmul.f32 %v339, %v984
    %v1007 = vmul.f32 %v340, %v984
    %v1008 = vmul.f32 %v341, %v984
    %v1009 = vmul.f32 %v342, %v984
    %v1010 = vmul.f32 %v343, %v984
    %v1011 = vmul.f32 %v344, %v984
    %v1012 = vmul.f32 %v345, %v984
    %v1013 = vmul.f32 %v346, %v984
    %v1014 = vmul.f32 %v347, %v984
    %v1015 = vmul.f32 %v348, %v984
    %v1016 = vmul.f32 %v349, %v984
    %v1049 = vrot.slane %v985, 1
    %v1050 = vrot.slane %v986, 1
    %v1051 = vrot.slane %v987, 1
    %v1052 = vrot.slane %v988, 1
    %v1053 = vrot.slane %v989, 1
    %v1054 = vrot.slane %v990, 1
    %v1055 = vrot.slane %v991, 1
    %v1056 = vrot.slane %v992, 1
    %v1057 = vrot.slane %v993, 1
    %v1058 = vrot.slane %v994, 1
    %v1059 = vrot.slane %v995, 1
    %v1060 = vrot.slane %v996, 1
    %v1061 = vrot.slane %v997, 1
    %v1062 = vrot.slane %v998, 1
    %v1063 = vrot.slane %v999, 1
    %v1064 = vrot.slane %v1000, 1
    %v1065 = vrot.slane %v1001, 1
    %v1066 = vrot.slane %v1002, 1
    %v1067 = vrot.slane %v1003, 1
    %v1068 = vrot.slane %v1004, 1
    %v1069 = vrot.slane %v1005, 1
    %v1070 = vrot.slane %v1006, 1
    %v1071 = vrot.slane %v1007, 1
    %v1072 = vrot.slane %v1008, 1
    %v1073 = vrot.slane %v1009, 1
    %v1074 = vrot.slane %v1010, 1
    %v1075 = vrot.slane %v1011, 1
    %v1076 = vrot.slane %v1012, 1
    %v1077 = vrot.slane %v1013, 1
    %v1078 = vrot.slane %v1014, 1
    %v1079 = vrot.slane %v1015, 1
    %v1080 = vrot.slane %v1016, 1
    %v1113 = vadd.f32 %v949, %v1049
    %v1114 = vadd.f32 %v950, %v1050
    %v1115 = vadd.f32 %v951, %v1051
    %v1116 = vadd.f32 %v952, %v1052
    %v1117 = vadd.f32 %v953, %v1053
    %v1118 = vadd.f32 %v954, %v1054
    %v1119 = vadd.f32 %v955, %v1055
    %v1120 = vadd.f32 %v956, %v1056
    %v1121 = vadd.f32 %v957, %v1057
    %v1122 = vadd.f32 %v958, %v1058
    %v1123 = vadd.f32 %v959, %v1059
    %v1124 = vadd.f32 %v960, %v1060
    %v1125 = vadd.f32 %v961, %v1061
    %v1126 = vadd.f32 %v962, %v1062
    %v1127 = vadd.f32 %v963, %v1063
    %v1128 = vadd.f32 %v964, %v1064
    %v1129 = vadd.f32 %v965, %v1065
    %v1130 = vadd.f32 %v966, %v1066
    %v1131 = vadd.f32 %v967, %v1067
    %v1132 = vadd.f32 %v968, %v1068
    %v1133 = vadd.f32 %v969, %v1069
    %v1134 = vadd.f32 %v970, %v1070
    %v1135 = vadd.f32 %v971, %v1071
    %v1136 = vadd.f32 %v972, %v1072
    %v1137 = vadd.f32 %v973, %v1073
    %v1138 = vadd.f32 %v974, %v1074
    %v1139 = vadd.f32 %v975, %v1075
    %v1140 = vadd.f32 %v976, %v1076
    %v1141 = vadd.f32 %v977, %v1077
    %v1142 = vadd.f32 %v978, %v1078
    %v1143 = vadd.f32 %v979, %v1079
    %v1144 = vadd.f32 %v980, %v1080
    %v1145 = vlaneseq
    %v1146 = vshrl.u32 %v1145, 7
    %v1147 = vsub.s32 6, %v1146
    %v1148 = vrot.slane %v351, %v1147
    %v1149 = vmul.f32 %v316, %v1148
    %v1150 = vmul.f32 %v317, %v1148
    %v1151 = vmul.f32 %v318, %v1148
    %v1152 = vmul.f32 %v319, %v1148
    %v1153 = vmul.f32 %v320, %v1148
    %v1154 = vmul.f32 %v321, %v1148
    %v1155 = vmul.f32 %v322, %v1148
    %v1156 = vmul.f32 %v323, %v1148
    %v1157 = vmul.f32 %v324, %v1148
    %v1158 = vmul.f32 %v325, %v1148
    %v1159 = vmul.f32 %v326, %v1148
    %v1160 = vmul.f32 %v327, %v1148
    %v1161 = vmul.f32 %v328, %v1148
    %v1162 = vmul.f32 %v329, %v1148
    %v1163 = vmul.f32 %v330, %v1148
    %v1164 = vmul.f32 %v331, %v1148
    %v1165 = vmul.f32 %v334, %v1148
    %v1166 = vmul.f32 %v335, %v1148
    %v1167 = vmul.f32 %v336, %v1148
    %v1168 = vmul.f32 %v337, %v1148
    %v1169 = vmul.f32 %v338, %v1148
    %v1170 = vmul.f32 %v339, %v1148
    %v1171 = vmul.f32 %v340, %v1148
    %v1172 = vmul.f32 %v341, %v1148
    %v1173 = vmul.f32 %v342, %v1148
    %v1174 = vmul.f32 %v343, %v1148
    %v1175 = vmul.f32 %v344, %v1148
    %v1176 = vmul.f32 %v345, %v1148
    %v1177 = vmul.f32 %v346, %v1148
    %v1178 = vmul.f32 %v347, %v1148
    %v1179 = vmul.f32 %v348, %v1148
    %v1180 = vmul.f32 %v349, %v1148
    %v1213 = vrot.slane %v1149, 2
    %v1214 = vrot.slane %v1150, 2
    %v1215 = vrot.slane %v1151, 2
    %v1216 = vrot.slane %v1152, 2
    %v1217 = vrot.slane %v1153, 2
    %v1218 = vrot.slane %v1154, 2
    %v1219 = vrot.slane %v1155, 2
    %v1220 = vrot.slane %v1156, 2
    %v1221 = vrot.slane %v1157, 2
    %v1222 = vrot.slane %v1158, 2
    %v1223 = vrot.slane %v1159, 2
    %v1224 = vrot.slane %v1160, 2
    %v1225 = vrot.slane %v1161, 2
    %v1226 = vrot.slane %v1162, 2
    %v1227 = vrot.slane %v1163, 2
    %v1228 = vrot.slane %v1164, 2
    %v1229 = vrot.slane %v1165, 2
    %v1230 = vrot.slane %v1166, 2
    %v1231 = vrot.slane %v1167, 2
    %v1232 = vrot.slane %v1168, 2
    %v1233 = vrot.slane %v1169, 2
    %v1234 = vrot.slane %v1170, 2
    %v1235 = vrot.slane %v1171, 2
    %v1236 = vrot.slane %v1172, 2
    %v1237 = vrot.slane %v1173, 2
    %v1238 = vrot.slane %v1174, 2
    %v1239 = vrot.slane %v1175, 2
    %v1240 = vrot.slane %v1176, 2
    %v1241 = vrot.slane %v1177, 2
    %v1242 = vrot.slane %v1178, 2
    %v1243 = vrot.slane %v1179, 2
    %v1244 = vrot.slane %v1180, 2
    %v1277 = vadd.f32 %v1113, %v1213
    %v1278 = vadd.f32 %v1114, %v1214
    %v1279 = vadd.f32 %v1115, %v1215
    %v1280 = vadd.f32 %v1116, %v1216
    %v1281 = vadd.f32 %v1117, %v1217
    %v1282 = vadd.f32 %v1118, %v1218
    %v1283 = vadd.f32 %v1119, %v1219
    %v1284 = vadd.f32 %v1120, %v1220
    %v1285 = vadd.f32 %v1121, %v1221
    %v1286 = vadd.f32 %v1122, %v1222
    %v1287 = vadd.f32 %v1123, %v1223
    %v1288 = vadd.f32 %v1124, %v1224
    %v1289 = vadd.f32 %v1125, %v1225
    %v1290 = vadd.f32 %v1126, %v1226
    %v1291 = vadd.f32 %v1127, %v1227
    %v1292 = vadd.f32 %v1128, %v1228
    %v1293 = vadd.f32 %v1129, %v1229
    %v1294 = vadd.f32 %v1130, %v1230
    %v1295 = vadd.f32 %v1131, %v1231
    %v1296 = vadd.f32 %v1132, %v1232
    %v1297 = vadd.f32 %v1133, %v1233
    %v1298 = vadd.f32 %v1134, %v1234
    %v1299 = vadd.f32 %v1135, %v1235
    %v1300 = vadd.f32 %v1136, %v1236
    %v1301 = vadd.f32 %v1137, %v1237
    %v1302 = vadd.f32 %v1138, %v1238
    %v1303 = vadd.f32 %v1139, %v1239
    %v1304 = vadd.f32 %v1140, %v1240
    %v1305 = vadd.f32 %v1141, %v1241
    %v1306 = vadd.f32 %v1142, %v1242
    %v1307 = vadd.f32 %v1143, %v1243
    %v1308 = vadd.f32 %v1144, %v1244
    %v1309 = vlaneseq
    %v1310 = vshrl.u32 %v1309, 7
    %v1311 = vsub.s32 7, %v1310
    %v1312 = vrot.slane %v351, %v1311
    %v1313 = vmul.f32 %v316, %v1312
    %v1314 = vmul.f32 %v317, %v1312
    %v1315 = vmul.f32 %v318, %v1312
    %v1316 = vmul.f32 %v319, %v1312
    %v1317 = vmul.f32 %v320, %v1312
    %v1318 = vmul.f32 %v321, %v1312
    %v1319 = vmul.f32 %v322, %v1312
    %v1320 = vmul.f32 %v323, %v1312
    %v1321 = vmul.f32 %v324, %v1312
    %v1322 = vmul.f32 %v325, %v1312
    %v1323 = vmul.f32 %v326, %v1312
    %v1324 = vmul.f32 %v327, %v1312
    %v1325 = vmul.f32 %v328, %v1312
    %v1326 = vmul.f32 %v329, %v1312
    %v1327 = vmul.f32 %v330, %v1312
    %v1328 = vmul.f32 %v331, %v1312
    %v1329 = vmul.f32 %v334, %v1312
    %v1330 = vmul.f32 %v335, %v1312
    %v1331 = vmul.f32 %v336, %v1312
    %v1332 = vmul.f32 %v337, %v1312
    %v1333 = vmul.f32 %v338, %v1312
    %v1334 = vmul.f32 %v339, %v1312
    %v1335 = vmul.f32 %v340, %v1312
    %v1336 = vmul.f32 %v341, %v1312
    %v1337 = vmul.f32 %v342, %v1312
    %v1338 = vmul.f32 %v343, %v1312
    %v1339 = vmul.f32 %v344, %v1312
    %v1340 = vmul.f32 %v345, %v1312
    %v1341 = vmul.f32 %v346, %v1312
    %v1342 = vmul.f32 %v347, %v1312
    %v1343 = vmul.f32 %v348, %v1312
    %v1344 = vmul.f32 %v349, %v1312
    %v1377 = vrot.slane %v1313, 3
    %v1378 = vrot.slane %v1314, 3
    %v1379 = vrot.slane %v1315, 3
    %v1380 = vrot.slane %v1316, 3
    %v1381 = vrot.slane %v1317, 3
    %v1382 = vrot.slane %v1318, 3
    %v1383 = vrot.slane %v1319, 3
    %v1384 = vrot.slane %v1320, 3
    %v1385 = vrot.slane %v1321, 3
    %v1386 = vrot.slane %v1322, 3
    %v1387 = vrot.slane %v1323, 3
    %v1388 = vrot.slane %v1324, 3
    %v1389 = vrot.slane %v1325, 3
    %v1390 = vrot.slane %v1326, 3
    %v1391 = vrot.slane %v1327, 3
    %v1392 = vrot.slane %v1328, 3
    %v1393 = vrot.slane %v1329, 3
    %v1394 = vrot.slane %v1330, 3
    %v1395 = vrot.slane %v1331, 3
    %v1396 = vrot.slane %v1332, 3
    %v1397 = vrot.slane %v1333, 3
    %v1398 = vrot.slane %v1334, 3
    %v1399 = vrot.slane %v1335, 3
    %v1400 = vrot.slane %v1336, 3
    %v1401 = vrot.slane %v1337, 3
    %v1402 = vrot.slane %v1338, 3
    %v1403 = vrot.slane %v1339, 3
    %v1404 = vrot.slane %v1340, 3
    %v1405 = vrot.slane %v1341, 3
    %v1406 = vrot.slane %v1342, 3
    %v1407 = vrot.slane %v1343, 3
    %v1408 = vrot.slane %v1344, 3
    %v1441 = vadd.f32 %v1277, %v1377
    %v1442 = vadd.f32 %v1278, %v1378
    %v1443 = vadd.f32 %v1279, %v1379
    %v1444 = vadd.f32 %v1280, %v1380
    %v1445 = vadd.f32 %v1281, %v1381
    %v1446 = vadd.f32 %v1282, %v1382
    %v1447 = vadd.f32 %v1283, %v1383
    %v1448 = vadd.f32 %v1284, %v1384
    %v1449 = vadd.f32 %v1285, %v1385
    %v1450 = vadd.f32 %v1286, %v1386
    %v1451 = vadd.f32 %v1287, %v1387
    %v1452 = vadd.f32 %v1288, %v1388
    %v1453 = vadd.f32 %v1289, %v1389
    %v1454 = vadd.f32 %v1290, %v1390
    %v1455 = vadd.f32 %v1291, %v1391
    %v1456 = vadd.f32 %v1292, %v1392
    %v1457 = vadd.f32 %v1293, %v1393
    %v1458 = vadd.f32 %v1294, %v1394
    %v1459 = vadd.f32 %v1295, %v1395
    %v1460 = vadd.f32 %v1296, %v1396
    %v1461 = vadd.f32 %v1297, %v1397
    %v1462 = vadd.f32 %v1298, %v1398
    %v1463 = vadd.f32 %v1299, %v1399
    %v1464 = vadd.f32 %v1300, %v1400
    %v1465 = vadd.f32 %v1301, %v1401
    %v1466 = vadd.f32 %v1302, %v1402
    %v1467 = vadd.f32 %v1303, %v1403
    %v1468 = vadd.f32 %v1304, %v1404
    %v1469 = vadd.f32 %v1305, %v1405
    %v1470 = vadd.f32 %v1306, %v1406
    %v1471 = vadd.f32 %v1307, %v1407
    %v1472 = vadd.f32 %v1308, %v1408
    %v1473 = vlaneseq
    %v1474 = vshrl.u32 %v1473, 7
    %v1475 = vsub.s32 0, %v1474
    %v1476 = vrot.slane %v352, %v1475
    %v1477 = vmul.f32 %v317, %v1476
    %v1478 = vmul.f32 %v318, %v1476
    %v1479 = vmul.f32 %v319, %v1476
    %v1480 = vmul.f32 %v320, %v1476
    %v1481 = vmul.f32 %v321, %v1476
    %v1482 = vmul.f32 %v322, %v1476
    %v1483 = vmul.f32 %v323, %v1476
    %v1484 = vmul.f32 %v324, %v1476
    %v1485 = vmul.f32 %v325, %v1476
    %v1486 = vmul.f32 %v326, %v1476
    %v1487 = vmul.f32 %v327, %v1476
    %v1488 = vmul.f32 %v328, %v1476
    %v1489 = vmul.f32 %v329, %v1476
    %v1490 = vmul.f32 %v330, %v1476
    %v1491 = vmul.f32 %v331, %v1476
    %v1492 = vmul.f32 %v332, %v1476
    %v1493 = vmul.f32 %v335, %v1476
    %v1494 = vmul.f32 %v336, %v1476
    %v1495 = vmul.f32 %v337, %v1476
    %v1496 = vmul.f32 %v338, %v1476
    %v1497 = vmul.f32 %v339, %v1476
    %v1498 = vmul.f32 %v340, %v1476
    %v1499 = vmul.f32 %v341, %v1476
    %v1500 = vmul.f32 %v342, %v1476
    %v1501 = vmul.f32 %v343, %v1476
    %v1502 = vmul.f32 %v344, %v1476
    %v1503 = vmul.f32 %v345, %v1476
    %v1504 = vmul.f32 %v346, %v1476
    %v1505 = vmul.f32 %v347, %v1476
    %v1506 = vmul.f32 %v348, %v1476
    %v1507 = vmul.f32 %v349, %v1476
    %v1508 = vmul.f32 %v350, %v1476
    %v1509 = vadd.f32 %v1441, %v1477
    %v1510 = vadd.f32 %v1442, %v1478
    %v1511 = vadd.f32 %v1443, %v1479
    %v1512 = vadd.f32 %v1444, %v1480
    %v1513 = vadd.f32 %v1445, %v1481
    %v1514 = vadd.f32 %v1446, %v1482
    %v1515 = vadd.f32 %v1447, %v1483
    %v1516 = vadd.f32 %v1448, %v1484
    %v1517 = vadd.f32 %v1449, %v1485
    %v1518 = vadd.f32 %v1450, %v1486
    %v1519 = vadd.f32 %v1451, %v1487
    %v1520 = vadd.f32 %v1452, %v1488
    %v1521 = vadd.f32 %v1453, %v1489
    %v1522 = vadd.f32 %v1454, %v1490
    %v1523 = vadd.f32 %v1455, %v1491
    %v1524 = vadd.f32 %v1456, %v1492
    %v1525 = vadd.f32 %v1457, %v1493
    %v1526 = vadd.f32 %v1458, %v1494
    %v1527 = vadd.f32 %v1459, %v1495
    %v1528 = vadd.f32 %v1460, %v1496
    %v1529 = vadd.f32 %v1461, %v1497
    %v1530 = vadd.f32 %v1462, %v1498
    %v1531 = vadd.f32 %v1463, %v1499
    %v1532 = vadd.f32 %v1464, %v1500
    %v1533 = vadd.f32 %v1465, %v1501
    %v1534 = vadd.f32 %v1466, %v1502
    %v1535 = vadd.f32 %v1467, %v1503
    %v1536 = vadd.f32 %v1468, %v1504
    %v1537 = vadd.f32 %v1469, %v1505
    %v1538 = vadd.f32 %v1470, %v1506
    %v1539 = vadd.f32 %v1471, %v1507
    %v1540 = vadd.f32 %v1472, %v1508
    %v1541 = vld [vmem:[%s5] sm:$0x1]
    %v1543 = vlaneseq
    %v1544 = vshrl.u32 %v1543, 7
    %v1545 = vsub.s32 0, %v1544
    %v1546 = vrot.slane %v1541, %v1545
    %v1548 = vadd.f32 %v1509, %v1546
    %v1549 = vadd.f32 %v1510, %v1546
    %v1550 = vadd.f32 %v1511, %v1546
    %v1551 = vadd.f32 %v1512, %v1546
    %v1552 = vadd.f32 %v1513, %v1546
    %v1553 = vadd.f32 %v1514, %v1546
    %v1554 = vadd.f32 %v1515, %v1546
    %v1555 = vadd.f32 %v1516, %v1546
    %v1556 = vadd.f32 %v1517, %v1546
    %v1557 = vadd.f32 %v1518, %v1546
    %v1558 = vadd.f32 %v1519, %v1546
    %v1559 = vadd.f32 %v1520, %v1546
    %v1560 = vadd.f32 %v1521, %v1546
    %v1561 = vadd.f32 %v1522, %v1546
    %v1562 = vadd.f32 %v1523, %v1546
    %v1563 = vadd.f32 %v1524, %v1546
    %v1564 = vadd.f32 %v1525, %v1546
    %v1565 = vadd.f32 %v1526, %v1546
    %v1566 = vadd.f32 %v1527, %v1546
    %v1567 = vadd.f32 %v1528, %v1546
    %v1568 = vadd.f32 %v1529, %v1546
    %v1569 = vadd.f32 %v1530, %v1546
    %v1570 = vadd.f32 %v1531, %v1546
    %v1571 = vadd.f32 %v1532, %v1546
    %v1572 = vadd.f32 %v1533, %v1546
    %v1573 = vadd.f32 %v1534, %v1546
    %v1574 = vadd.f32 %v1535, %v1546
    %v1575 = vadd.f32 %v1536, %v1546
    %v1576 = vadd.f32 %v1537, %v1546
    %v1577 = vadd.f32 %v1538, %v1546
    %v1578 = vadd.f32 %v1539, %v1546
    %v1579 = vadd.f32 %v1540, %v1546
    %v1580 = vld [vmem:[%s7] sm:$0xf]
    %v1581 = vld [vmem:[%s9] sm:$0x1]
    %v1583 = vlaneseq
    %v1584 = vshrl.u32 %v1583, 7
    %v1585 = vsub.s32 0, %v1584
    %v1586 = vrot.slane %v1581, %v1585
    %v1620 = vrot.slane %v1549, 7
    %vm1621 = vcmask 1041409
    %v1622 = vsel %vm1621, %v1620, %v1548
    %v1623 = vrot.slane %v1550, 6
    %vm1624 = vcmask 1042434
    %v1625 = vsel %vm1624, %v1623, %v1622
    %v1626 = vrot.slane %v1551, 5
    %vm1627 = vcmask 1043459
    %v1628 = vsel %vm1627, %v1626, %v1625
    %v1629 = vrot.slane %v1552, 4
    %vm1630 = vcmask 1044484
    %v1631 = vsel %vm1630, %v1629, %v1628
    %v1632 = vrot.slane %v1553, 3
    %vm1633 = vcmask 1045509
    %v1634 = vsel %vm1633, %v1632, %v1631
    %v1635 = vrot.slane %v1554, 2
    %vm1636 = vcmask 1046534
    %v1637 = vsel %vm1636, %v1635, %v1634
    %v1638 = vrot.slane %v1555, 1
    %vm1639 = vcmask 1047559
    %v1640 = vsel %vm1639, %v1638, %v1637
    %v1641 = vrot.slane %v1557, 7
    %v1642 = vsel %vm1621, %v1641, %v1556
    %v1643 = vrot.slane %v1558, 6
    %v1644 = vsel %vm1624, %v1643, %v1642
    %v1645 = vrot.slane %v1559, 5
    %v1646 = vsel %vm1627, %v1645, %v1644
    %v1647 = vrot.slane %v1560, 4
    %v1648 = vsel %vm1630, %v1647, %v1646
    %v1649 = vrot.slane %v1561, 3
    %v1650 = vsel %vm1633, %v1649, %v1648
    %v1651 = vrot.slane %v1562, 2
    %v1652 = vsel %vm1636, %v1651, %v1650
    %v1653 = vrot.slane %v1563, 1
    %v1654 = vsel %vm1639, %v1653, %v1652
    %v1655 = vrot.slane %v1565, 7
    %v1656 = vsel %vm1621, %v1655, %v1564
    %v1657 = vrot.slane %v1566, 6
    %v1658 = vsel %vm1624, %v1657, %v1656
    %v1659 = vrot.slane %v1567, 5
    %v1660 = vsel %vm1627, %v1659, %v1658
    %v1661 = vrot.slane %v1568, 4
    %v1662 = vsel %vm1630, %v1661, %v1660
    %v1663 = vrot.slane %v1569, 3
    %v1664 = vsel %vm1633, %v1663, %v1662
    %v1665 = vrot.slane %v1570, 2
    %v1666 = vsel %vm1636, %v1665, %v1664
    %v1667 = vrot.slane %v1571, 1
    %v1668 = vsel %vm1639, %v1667, %v1666
    %v1669 = vrot.slane %v1573, 7
    %v1670 = vsel %vm1621, %v1669, %v1572
    %v1671 = vrot.slane %v1574, 6
    %v1672 = vsel %vm1624, %v1671, %v1670
    %v1673 = vrot.slane %v1575, 5
    %v1674 = vsel %vm1627, %v1673, %v1672
    %v1675 = vrot.slane %v1576, 4
    %v1676 = vsel %vm1630, %v1675, %v1674
    %v1677 = vrot.slane %v1577, 3
    %v1678 = vsel %vm1633, %v1677, %v1676
    %v1679 = vrot.slane %v1578, 2
    %v1680 = vsel %vm1636, %v1679, %v1678
    %v1681 = vrot.slane %v1579, 1
    %v1682 = vsel %vm1639, %v1681, %v1680
    %vm1683 = vcmask 31744
    %v1684 = vsel %vm1683, %v1640, 0
    %v1686 = vsel %vm1683, %v1654, 0
    %v1688 = vsel %vm1683, %v1668, 0
    %v1690 = vsel %vm1683, %v1682, 0
    %vm1692 = vcmask 1043456
    %v1694 = vsel %vm1692, %v1580, 0
    %1696 = vmatprep.subr.mxu0 0.0
    %1697 = vmatpush1.msra.mxu0 0.0
    %1698 = vmatprep.subr.mxu0 0.0
    %1699 = vmatpush1.msra.mxu0 0.0
    %1700 = vmatprep.subr.mxu0 0.0
    %1701 = vmatpush1.msra.mxu0 0.0
    %1702 = vmatprep.subr.mxu0 0.0
    %1703 = vmatpush1.msra.mxu0 0.0
    %1704 = vmatprep.subr.mxu0 0.0
    %1705 = vmatpush1.msra.mxu0 0.0
    %1706 = vmatprep.subr.mxu0 0.0
    %1707 = vmatpush1.msra.mxu0 0.0
    %1708 = vmatprep.subr.mxu0 0.0
    %1709 = vmatpush1.msra.mxu0 0.0
    %1710 = vmatprep.subr.mxu0 0.0
    %1711 = vmatpush1.msra.mxu0 0.0
    %1712 = vmatprep.subr.mxu0 0.0
    %1713 = vmatpush1.msra.mxu0 0.0
    %1714 = vmatprep.subr.mxu0 0.0
    %1715 = vmatpush1.msra.mxu0 0.0
    %1716 = vmatprep.subr.mxu0 0.0
    %1717 = vmatpush1.msra.mxu0 0.0
    %1718 = vmatprep.subr.mxu0 0.0
    %1719 = vmatpush1.msra.mxu0 0.0
    %1720 = vmatprep.subr.mxu0 0.0
    %1721 = vmatpush1.msra.mxu0 0.0
    %1722 = vmatprep.subr.mxu0 0.0
    %1723 = vmatpush1.msra.mxu0 0.0
    %1724 = vmatprep.subr.mxu0 0.0
    %1725 = vmatpush1.msra.mxu0 0.0
    %1726 = vmatprep.subr.mxu0 0.0
    %1727 = vmatpush1.msra.mxu0 %v1694
    %1728 = vmatprep.subr.mxu0 0.0
    %1729 = vmatpush2.msra.mxu0 0.0
    %1730 = vmatprep.subr.mxu0 0.0
    %1731 = vmatpush2.msra.mxu0 0.0
    %1732 = vmatprep.subr.mxu0 0.0
    %1733 = vmatpush2.msra.mxu0 0.0
    %1734 = vmatprep.subr.mxu0 0.0
    %1735 = vmatpush2.msra.mxu0 0.0
    %1736 = vmatprep.subr.mxu0 0.0
    %1737 = vmatpush2.msra.mxu0 0.0
    %1738 = vmatprep.subr.mxu0 0.0
    %1739 = vmatpush2.msra.mxu0 0.0
    %1740 = vmatprep.subr.mxu0 0.0
    %1741 = vmatpush2.msra.mxu0 0.0
    %1742 = vmatprep.subr.mxu0 0.0
    %1743 = vmatpush2.msra.mxu0 0.0
    %1744 = vmatprep.subr.mxu0 0.0
    %1745 = vmatpush2.msra.mxu0 0.0
    %1746 = vmatprep.subr.mxu0 0.0
    %1747 = vmatpush2.msra.mxu0 0.0
    %1748 = vmatprep.subr.mxu0 0.0
    %1749 = vmatpush2.msra.mxu0 0.0
    %1750 = vmatprep.subr.mxu0 0.0
    %1751 = vmatpush2.msra.mxu0 0.0
    %1752 = vmatprep.subr.mxu0 0.0
    %1753 = vmatpush2.msra.mxu0 0.0
    %1754 = vmatprep.subr.mxu0 0.0
    %1755 = vmatpush2.msra.mxu0 0.0
    %1756 = vmatprep.subr.mxu0 0.0
    %1757 = vmatpush2.msra.mxu0 0.0
    %1758 = vmatprep.subr.mxu0 0.0
    %1759 = vmatpush2.msra.mxu0 0.0
    %1760 = vmatprep.mubr.f32.mxu0 0.0
    %1761 = vmatmul.mubr.f32.gmra.mxu0 %v1684
    %v1762 = vpop.f32.mrf.mxu0
    %v1763 = vadd.f32 %v1586, %v1762
    %v1764 = vpop.f32.mrf.mxu0
    %1765 = vmatprep.mubr.f32.mxu0 0.0
    %1766 = vmatmul.mubr.f32.gmra.mxu0 %v1686
    %v1767 = vpop.f32.mrf.mxu0
    %v1768 = vadd.f32 %v1586, %v1767
    %v1769 = vpop.f32.mrf.mxu0
    %1770 = vmatprep.mubr.f32.mxu0 0.0
    %1771 = vmatmul.mubr.f32.gmra.mxu0 %v1688
    %v1772 = vpop.f32.mrf.mxu0
    %v1773 = vadd.f32 %v1586, %v1772
    %v1774 = vpop.f32.mrf.mxu0
    %1775 = vmatprep.mubr.f32.mxu0 0.0
    %1776 = vmatmul.mubr.f32.gmra.mxu0 %v1690
    %v1777 = vpop.f32.mrf.mxu0
    %v1778 = vadd.f32 %v1586, %v1777
    %v1779 = vpop.f32.mrf.mxu0
    %1780 = vdwg.mxu0
    %v1781 = vld [vmem:[%s11] sm:$0xf]
    %v1782 = vld [vmem:[%s13] sm:$0x1]
    %v1784 = vlaneseq
    %v1785 = vshrl.u32 %v1784, 7
    %v1786 = vsub.s32 0, %v1785
    %v1787 = vrot.slane %v1782, %v1786
    %v1821 = vrot.slane %v317, 7
    %v1822 = vsel %vm1621, %v1821, %v316
    %v1823 = vrot.slane %v318, 6
    %v1824 = vsel %vm1624, %v1823, %v1822
    %v1825 = vrot.slane %v319, 5
    %v1826 = vsel %vm1627, %v1825, %v1824
    %v1827 = vrot.slane %v320, 4
    %v1828 = vsel %vm1630, %v1827, %v1826
    %v1829 = vrot.slane %v321, 3
    %v1830 = vsel %vm1633, %v1829, %v1828
    %v1831 = vrot.slane %v322, 2
    %v1832 = vsel %vm1636, %v1831, %v1830
    %v1833 = vrot.slane %v323, 1
    %v1834 = vsel %vm1639, %v1833, %v1832
    %v1835 = vrot.slane %v325, 7
    %v1836 = vsel %vm1621, %v1835, %v324
    %v1837 = vrot.slane %v326, 6
    %v1838 = vsel %vm1624, %v1837, %v1836
    %v1839 = vrot.slane %v327, 5
    %v1840 = vsel %vm1627, %v1839, %v1838
    %v1841 = vrot.slane %v328, 4
    %v1842 = vsel %vm1630, %v1841, %v1840
    %v1843 = vrot.slane %v329, 3
    %v1844 = vsel %vm1633, %v1843, %v1842
    %v1845 = vrot.slane %v330, 2
    %v1846 = vsel %vm1636, %v1845, %v1844
    %v1847 = vrot.slane %v331, 1
    %v1848 = vsel %vm1639, %v1847, %v1846
    %v1849 = vrot.slane %v335, 7
    %v1850 = vsel %vm1621, %v1849, %v334
    %v1851 = vrot.slane %v336, 6
    %v1852 = vsel %vm1624, %v1851, %v1850
    %v1853 = vrot.slane %v337, 5
    %v1854 = vsel %vm1627, %v1853, %v1852
    %v1855 = vrot.slane %v338, 4
    %v1856 = vsel %vm1630, %v1855, %v1854
    %v1857 = vrot.slane %v339, 3
    %v1858 = vsel %vm1633, %v1857, %v1856
    %v1859 = vrot.slane %v340, 2
    %v1860 = vsel %vm1636, %v1859, %v1858
    %v1861 = vrot.slane %v341, 1
    %v1862 = vsel %vm1639, %v1861, %v1860
    %v1863 = vrot.slane %v343, 7
    %v1864 = vsel %vm1621, %v1863, %v342
    %v1865 = vrot.slane %v344, 6
    %v1866 = vsel %vm1624, %v1865, %v1864
    %v1867 = vrot.slane %v345, 5
    %v1868 = vsel %vm1627, %v1867, %v1866
    %v1869 = vrot.slane %v346, 4
    %v1870 = vsel %vm1630, %v1869, %v1868
    %v1871 = vrot.slane %v347, 3
    %v1872 = vsel %vm1633, %v1871, %v1870
    %v1873 = vrot.slane %v348, 2
    %v1874 = vsel %vm1636, %v1873, %v1872
    %v1875 = vrot.slane %v349, 1
    %v1876 = vsel %vm1639, %v1875, %v1874
    %v1877 = vsel %vm1683, %v1834, 0
    %v1879 = vsel %vm1683, %v1848, 0
    %v1881 = vsel %vm1683, %v1862, 0
    %v1883 = vsel %vm1683, %v1876, 0
    %v1886 = vsel %vm1692, %v1781, 0
    %1888 = vmatprep.subr.mxu0 0.0
    %1889 = vmatpush1.msra.mxu0 0.0
    %1890 = vmatprep.subr.mxu0 0.0
    %1891 = vmatpush1.msra.mxu0 0.0
    %1892 = vmatprep.subr.mxu0 0.0
    %1893 = vmatpush1.msra.mxu0 0.0
    %1894 = vmatprep.subr.mxu0 0.0
    %1895 = vmatpush1.msra.mxu0 0.0
    %1896 = vmatprep.subr.mxu0 0.0
    %1897 = vmatpush1.msra.mxu0 0.0
    %1898 = vmatprep.subr.mxu0 0.0
    %1899 = vmatpush1.msra.mxu0 0.0
    %1900 = vmatprep.subr.mxu0 0.0
    %1901 = vmatpush1.msra.mxu0 0.0
    %1902 = vmatprep.subr.mxu0 0.0
    %1903 = vmatpush1.msra.mxu0 0.0
    %1904 = vmatprep.subr.mxu0 0.0
    %1905 = vmatpush1.msra.mxu0 0.0
    %1906 = vmatprep.subr.mxu0 0.0
    %1907 = vmatpush1.msra.mxu0 0.0
    %1908 = vmatprep.subr.mxu0 0.0
    %1909 = vmatpush1.msra.mxu0 0.0
    %1910 = vmatprep.subr.mxu0 0.0
    %1911 = vmatpush1.msra.mxu0 0.0
    %1912 = vmatprep.subr.mxu0 0.0
    %1913 = vmatpush1.msra.mxu0 0.0
    %1914 = vmatprep.subr.mxu0 0.0
    %1915 = vmatpush1.msra.mxu0 0.0
    %1916 = vmatprep.subr.mxu0 0.0
    %1917 = vmatpush1.msra.mxu0 0.0
    %1918 = vmatprep.subr.mxu0 0.0
    %1919 = vmatpush1.msra.mxu0 %v1886
    %1920 = vmatprep.subr.mxu0 0.0
    %1921 = vmatpush2.msra.mxu0 0.0
    %1922 = vmatprep.subr.mxu0 0.0
    %1923 = vmatpush2.msra.mxu0 0.0
    %1924 = vmatprep.subr.mxu0 0.0
    %1925 = vmatpush2.msra.mxu0 0.0
    %1926 = vmatprep.subr.mxu0 0.0
    %1927 = vmatpush2.msra.mxu0 0.0
    %1928 = vmatprep.subr.mxu0 0.0
    %1929 = vmatpush2.msra.mxu0 0.0
    %1930 = vmatprep.subr.mxu0 0.0
    %1931 = vmatpush2.msra.mxu0 0.0
    %1932 = vmatprep.subr.mxu0 0.0
    %1933 = vmatpush2.msra.mxu0 0.0
    %1934 = vmatprep.subr.mxu0 0.0
    %1935 = vmatpush2.msra.mxu0 0.0
    %1936 = vmatprep.subr.mxu0 0.0
    %1937 = vmatpush2.msra.mxu0 0.0
    %1938 = vmatprep.subr.mxu0 0.0
    %1939 = vmatpush2.msra.mxu0 0.0
    %1940 = vmatprep.subr.mxu0 0.0
    %1941 = vmatpush2.msra.mxu0 0.0
    %1942 = vmatprep.subr.mxu0 0.0
    %1943 = vmatpush2.msra.mxu0 0.0
    %1944 = vmatprep.subr.mxu0 0.0
    %1945 = vmatpush2.msra.mxu0 0.0
    %1946 = vmatprep.subr.mxu0 0.0
    %1947 = vmatpush2.msra.mxu0 0.0
    %1948 = vmatprep.subr.mxu0 0.0
    %1949 = vmatpush2.msra.mxu0 0.0
    %1950 = vmatprep.subr.mxu0 0.0
    %1951 = vmatpush2.msra.mxu0 0.0
    %1952 = vmatprep.mubr.f32.mxu0 0.0
    %1953 = vmatmul.mubr.f32.gmra.mxu0 %v1877
    %v1954 = vpop.f32.mrf.mxu0
    %v1955 = vadd.f32 %v1787, %v1954
    %v1956 = vpop.f32.mrf.mxu0
    %1957 = vmatprep.mubr.f32.mxu0 0.0
    %1958 = vmatmul.mubr.f32.gmra.mxu0 %v1879
    %v1959 = vpop.f32.mrf.mxu0
    %v1960 = vadd.f32 %v1787, %v1959
    %v1961 = vpop.f32.mrf.mxu0
    %1962 = vmatprep.mubr.f32.mxu0 0.0
    %1963 = vmatmul.mubr.f32.gmra.mxu0 %v1881
    %v1964 = vpop.f32.mrf.mxu0
    %v1965 = vadd.f32 %v1787, %v1964
    %v1966 = vpop.f32.mrf.mxu0
    %1967 = vmatprep.mubr.f32.mxu0 0.0
    %1968 = vmatmul.mubr.f32.gmra.mxu0 %v1883
    %v1969 = vpop.f32.mrf.mxu0
    %v1970 = vadd.f32 %v1787, %v1969
    %v1971 = vpop.f32.mrf.mxu0
    %1972 = vdwg.mxu0
    %v1973 = vadd.f32 %v1763, %v1955
    %v1974 = vadd.f32 %v1768, %v1960
    %v1975 = vadd.f32 %v1773, %v1965
    %v1976 = vadd.f32 %v1778, %v1970
    %v1977 = vmax.f32 %v1973, 0.0
    %v1978 = vmax.f32 %v1974, 0.0
    %v1979 = vmax.f32 %v1975, 0.0
    %v1980 = vmax.f32 %v1976, 0.0
    %v1981 = vmin.f32 %v1977, 6.0
    %v1982 = vmin.f32 %v1978, 6.0
    %v1983 = vmin.f32 %v1979, 6.0
    %v1984 = vmin.f32 %v1980, 6.0
    %vm1985 = vcmask 64512
    %1986 = vst.msk [vmem:[#allocation3] sm:$0xff] %vm1985, 0.0
    %1987 = vst.msk [vmem:[#allocation3 + $0x8] sm:$0xff] %vm1985, 0.0
    %vm1988 = vcmask 58368
    %1989 = vst.msk [vmem:[#allocation3 + $0x10] sm:$0x3] %vm1988, 0.0
    %1990 = vst.msk [vmem:[#allocation3 + $0x18] sm:$0xff] %vm1985, 0.0
    %1991 = vst.msk [vmem:[#allocation3 + $0x20] sm:$0xff] %vm1985, 0.0
    %1992 = vst.msk [vmem:[#allocation3 + $0x28] sm:$0x3] %vm1988, 0.0
    %1993 = vst.msk [vmem:[#allocation3 + $0x1] sm:$0xff] %vm1985, %v1981
    %1994 = vst.msk [vmem:[#allocation3 + $0x9] sm:$0xff] %vm1985, %v1982
    %1995 = vst.msk [vmem:[#allocation3 + $0x19] sm:$0xff] %vm1985, %v1983
    %1996 = vst.msk [vmem:[#allocation3 + $0x21] sm:$0xff] %vm1985, %v1984
    %v1997 = vld [vmem:[#allocation3] sm:$0xff]
    %v1998 = vld [vmem:[#allocation3 + $0x8] sm:$0xff]
    %v1999 = vld [vmem:[#allocation3 + $0x10] sm:$0x3]
    %v2000 = vld [vmem:[#allocation3 + $0x18] sm:$0xff]
    %v2001 = vld [vmem:[#allocation3 + $0x20] sm:$0xff]
    %v2002 = vld [vmem:[#allocation3 + $0x28] sm:$0x3]
    %v2003 = vld [vmem:[%s15] sm:$0x7]
    %v2004 = vlaneseq
    %v2005 = vshrl.u32 %v2004, 7
    %v2006 = vsub.s32 0, %v2005
    %v2007 = vrot.slane %v2003, %v2006
    %v2008 = vmul.f32 %v1997, %v2007
    %v2009 = vmul.f32 %v1998, %v2007
    %v2010 = vmul.f32 %v2000, %v2007
    %v2011 = vmul.f32 %v2001, %v2007
    %v2012 = vadd.f32 %v2008, 0.0
    %v2013 = vadd.f32 %v2009, 0.0
    %v2014 = vadd.f32 %v2010, 0.0
    %v2015 = vadd.f32 %v2011, 0.0
    %v2016 = vlaneseq
    %v2017 = vshrl.u32 %v2016, 7
    %v2018 = vsub.s32 1, %v2017
    %v2019 = vrot.slane %v2003, %v2018
    %v2020 = vmul.f32 %v1997, %v2019
    %v2021 = vmul.f32 %v1998, %v2019
    %v2022 = vmul.f32 %v1999, %v2019
    %v2023 = vmul.f32 %v2000, %v2019
    %v2024 = vmul.f32 %v2001, %v2019
    %v2025 = vmul.f32 %v2002, %v2019
    %vm2032 = vcmask 1046528
    %v2033 = vrot.slane %v2020, 1
    %v2034 = vrot.slane %v2021, 1
    %v2035 = vsel %vm2032, %v2033, %v2034
    %v2036 = vrot.slane %v2022, 1
    %v2037 = vsel %vm2032, %v2034, %v2036
    %v2038 = vrot.slane %v2023, 1
    %v2039 = vrot.slane %v2024, 1
    %v2040 = vsel %vm2032, %v2038, %v2039
    %v2041 = vrot.slane %v2025, 1
    %v2042 = vsel %vm2032, %v2039, %v2041
    %v2047 = vadd.f32 %v2012, %v2035
    %v2048 = vadd.f32 %v2013, %v2037
    %v2049 = vadd.f32 %v2014, %v2040
    %v2050 = vadd.f32 %v2015, %v2042
    %v2051 = vlaneseq
    %v2052 = vshrl.u32 %v2051, 7
    %v2053 = vsub.s32 2, %v2052
    %v2054 = vrot.slane %v2003, %v2053
    %v2055 = vmul.f32 %v1997, %v2054
    %v2056 = vmul.f32 %v1998, %v2054
    %v2057 = vmul.f32 %v1999, %v2054
    %v2058 = vmul.f32 %v2000, %v2054
    %v2059 = vmul.f32 %v2001, %v2054
    %v2060 = vmul.f32 %v2002, %v2054
    %vm2067 = vcmask 1045504
    %v2068 = vrot.slane %v2055, 2
    %v2069 = vrot.slane %v2056, 2
    %v2070 = vsel %vm2067, %v2068, %v2069
    %v2071 = vrot.slane %v2057, 2
    %v2072 = vsel %vm2067, %v2069, %v2071
    %v2073 = vrot.slane %v2058, 2
    %v2074 = vrot.slane %v2059, 2
    %v2075 = vsel %vm2067, %v2073, %v2074
    %v2076 = vrot.slane %v2060, 2
    %v2077 = vsel %vm2067, %v2074, %v2076
    %v2082 = vadd.f32 %v2047, %v2070
    %v2083 = vadd.f32 %v2048, %v2072
    %v2084 = vadd.f32 %v2049, %v2075
    %v2085 = vadd.f32 %v2050, %v2077
    %v2086 = vld [vmem:[%s17] sm:$0x1]
    %v2088 = vlaneseq
    %v2089 = vshrl.u32 %v2088, 7
    %v2090 = vsub.s32 0, %v2089
    %v2091 = vrot.slane %v2086, %v2090
    %v2093 = vadd.f32 %v2082, %v2091
    %v2094 = vadd.f32 %v2083, %v2091
    %v2095 = vadd.f32 %v2084, %v2091
    %v2096 = vadd.f32 %v2085, %v2091
    %v2097 = vld [vmem:[%s19] sm:$0xff]
    %v2098 = vld [vmem:[%s21] sm:$0x1]
    %v2100 = vlaneseq
    %v2101 = vshrl.u32 %v2100, 7
    %v2102 = vsub.s32 0, %v2101
    %v2103 = vrot.slane %v2098, %v2102
    %v2106 = vsel %vm1985, %v2093, 0
    %v2109 = vsel %vm1985, %v2094, 0
    %v2112 = vsel %vm1985, %v2095, 0
    %v2115 = vsel %vm1985, %v2096, 0
    %2117 = vmatprep.subr.mxu0 0.0
    %2118 = vmatpush1.msra.mxu0 0.0
    %2119 = vmatprep.subr.mxu0 0.0
    %2120 = vmatpush1.msra.mxu0 0.0
    %2121 = vmatprep.subr.mxu0 0.0
    %2122 = vmatpush1.msra.mxu0 0.0
    %2123 = vmatprep.subr.mxu0 0.0
    %2124 = vmatpush1.msra.mxu0 0.0
    %2125 = vmatprep.subr.mxu0 0.0
    %2126 = vmatpush1.msra.mxu0 0.0
    %2127 = vmatprep.subr.mxu0 0.0
    %2128 = vmatpush1.msra.mxu0 0.0
    %2129 = vmatprep.subr.mxu0 0.0
    %2130 = vmatpush1.msra.mxu0 0.0
    %2131 = vmatprep.subr.mxu0 0.0
    %2132 = vmatpush1.msra.mxu0 0.0
    %2133 = vmatprep.subr.mxu0 0.0
    %2134 = vmatpush1.msra.mxu0 0.0
    %2135 = vmatprep.subr.mxu0 0.0
    %2136 = vmatpush1.msra.mxu0 0.0
    %2137 = vmatprep.subr.mxu0 0.0
    %2138 = vmatpush1.msra.mxu0 0.0
    %2139 = vmatprep.subr.mxu0 0.0
    %2140 = vmatpush1.msra.mxu0 0.0
    %2141 = vmatprep.subr.mxu0 0.0
    %2142 = vmatpush1.msra.mxu0 0.0
    %2143 = vmatprep.subr.mxu0 0.0
    %2144 = vmatpush1.msra.mxu0 0.0
    %2145 = vmatprep.subr.mxu0 0.0
    %2146 = vmatpush1.msra.mxu0 0.0
    %2147 = vmatprep.subr.mxu0 0.0
    %2148 = vmatpush1.msra.mxu0 %v2097
    %2149 = vmatprep.subr.mxu0 0.0
    %2150 = vmatpush2.msra.mxu0 0.0
    %2151 = vmatprep.subr.mxu0 0.0
    %2152 = vmatpush2.msra.mxu0 0.0
    %2153 = vmatprep.subr.mxu0 0.0
    %2154 = vmatpush2.msra.mxu0 0.0
    %2155 = vmatprep.subr.mxu0 0.0
    %2156 = vmatpush2.msra.mxu0 0.0
    %2157 = vmatprep.subr.mxu0 0.0
    %2158 = vmatpush2.msra.mxu0 0.0
    %2159 = vmatprep.subr.mxu0 0.0
    %2160 = vmatpush2.msra.mxu0 0.0
    %2161 = vmatprep.subr.mxu0 0.0
    %2162 = vmatpush2.msra.mxu0 0.0
    %2163 = vmatprep.subr.mxu0 0.0
    %2164 = vmatpush2.msra.mxu0 0.0
    %2165 = vmatprep.subr.mxu0 0.0
    %2166 = vmatpush2.msra.mxu0 0.0
    %2167 = vmatprep.subr.mxu0 0.0
    %2168 = vmatpush2.msra.mxu0 0.0
    %2169 = vmatprep.subr.mxu0 0.0
    %2170 = vmatpush2.msra.mxu0 0.0
    %2171 = vmatprep.subr.mxu0 0.0
    %2172 = vmatpush2.msra.mxu0 0.0
    %2173 = vmatprep.subr.mxu0 0.0
    %2174 = vmatpush2.msra.mxu0 0.0
    %2175 = vmatprep.subr.mxu0 0.0
    %2176 = vmatpush2.msra.mxu0 0.0
    %2177 = vmatprep.subr.mxu0 0.0
    %2178 = vmatpush2.msra.mxu0 0.0
    %2179 = vmatprep.subr.mxu0 0.0
    %2180 = vmatpush2.msra.mxu0 0.0
    %2181 = vmatprep.mubr.f32.mxu0 0.0
    %2182 = vmatmul.mubr.f32.gmra.mxu0 %v2106
    %v2183 = vpop.f32.mrf.mxu0
    %v2184 = vadd.f32 %v2103, %v2183
    %v2185 = vpop.f32.mrf.mxu0
    %2186 = vmatprep.mubr.f32.mxu0 0.0
    %2187 = vmatmul.mubr.f32.gmra.mxu0 %v2109
    %v2188 = vpop.f32.mrf.mxu0
    %v2189 = vadd.f32 %v2103, %v2188
    %v2190 = vpop.f32.mrf.mxu0
    %2191 = vmatprep.mubr.f32.mxu0 0.0
    %2192 = vmatmul.mubr.f32.gmra.mxu0 %v2112
    %v2193 = vpop.f32.mrf.mxu0
    %v2194 = vadd.f32 %v2103, %v2193
    %v2195 = vpop.f32.mrf.mxu0
    %2196 = vmatprep.mubr.f32.mxu0 0.0
    %2197 = vmatmul.mubr.f32.gmra.mxu0 %v2115
    %v2198 = vpop.f32.mrf.mxu0
    %v2199 = vadd.f32 %v2103, %v2198
    %v2200 = vpop.f32.mrf.mxu0
    %2201 = vdwg.mxu0
    %v2202 = vadd.f32 %v2184, %v1981
    %v2203 = vadd.f32 %v2189, %v1982
    %v2204 = vadd.f32 %v2194, %v1983
    %v2205 = vadd.f32 %v2199, %v1984
    %v2206 = vmax.f32 %v2202, 0.0
    %v2207 = vmax.f32 %v2203, 0.0
    %v2208 = vmax.f32 %v2204, 0.0
    %v2209 = vmax.f32 %v2205, 0.0
    %v2210 = vmin.f32 %v2206, 6.0
    %v2211 = vmin.f32 %v2207, 6.0
    %v2212 = vmin.f32 %v2208, 6.0
    %v2213 = vmin.f32 %v2209, 6.0
    %2214 = vst.msk [vmem:[#allocation4] sm:$0xff] %vm1985, 0.0
    %2215 = vst.msk [vmem:[#allocation4 + $0x8] sm:$0xff] %vm1985, 0.0
    %2216 = vst.msk [vmem:[#allocation4 + $0x10] sm:$0x3] %vm1988, 0.0
    %2217 = vst.msk [vmem:[#allocation4 + $0x18] sm:$0xff] %vm1985, 0.0
    %2218 = vst.msk [vmem:[#allocation4 + $0x20] sm:$0xff] %vm1985, 0.0
    %2219 = vst.msk [vmem:[#allocation4 + $0x28] sm:$0x3] %vm1988, 0.0
    %2220 = vst.msk [vmem:[#allocation4 + $0x1] sm:$0xff] %vm1985, %v2210
    %2221 = vst.msk [vmem:[#allocation4 + $0x9] sm:$0xff] %vm1985, %v2211
    %2222 = vst.msk [vmem:[#allocation4 + $0x19] sm:$0xff] %vm1985, %v2212
    %2223 = vst.msk [vmem:[#allocation4 + $0x21] sm:$0xff] %vm1985, %v2213
    %v2224 = vld [vmem:[#allocation4] sm:$0xff]
    %v2225 = vld [vmem:[#allocation4 + $0x8] sm:$0xff]
    %v2226 = vld [vmem:[#allocation4 + $0x10] sm:$0x3]
    %v2227 = vld [vmem:[#allocation4 + $0x18] sm:$0xff]
    %v2228 = vld [vmem:[#allocation4 + $0x20] sm:$0xff]
    %v2229 = vld [vmem:[#allocation4 + $0x28] sm:$0x3]
    %v2230 = vld [vmem:[%s23] sm:$0x7]
    %v2231 = vlaneseq
    %v2232 = vshrl.u32 %v2231, 7
    %v2233 = vsub.s32 0, %v2232
    %v2234 = vrot.slane %v2230, %v2233
    %v2235 = vmul.f32 %v2224, %v2234
    %v2236 = vmul.f32 %v2225, %v2234
    %v2237 = vmul.f32 %v2227, %v2234
    %v2238 = vmul.f32 %v2228, %v2234
    %v2239 = vadd.f32 %v2235, 0.0
    %v2240 = vadd.f32 %v2236, 0.0
    %v2241 = vadd.f32 %v2237, 0.0
    %v2242 = vadd.f32 %v2238, 0.0
    %v2243 = vlaneseq
    %v2244 = vshrl.u32 %v2243, 7
    %v2245 = vsub.s32 1, %v2244
    %v2246 = vrot.slane %v2230, %v2245
    %v2247 = vmul.f32 %v2224, %v2246
    %v2248 = vmul.f32 %v2225, %v2246
    %v2249 = vmul.f32 %v2226, %v2246
    %v2250 = vmul.f32 %v2227, %v2246
    %v2251 = vmul.f32 %v2228, %v2246
    %v2252 = vmul.f32 %v2229, %v2246
    %v2259 = vrot.slane %v2247, 1
    %v2260 = vrot.slane %v2248, 1
    %v2261 = vsel %vm2032, %v2259, %v2260
    %v2262 = vrot.slane %v2249, 1
    %v2263 = vsel %vm2032, %v2260, %v2262
    %v2264 = vrot.slane %v2250, 1
    %v2265 = vrot.slane %v2251, 1
    %v2266 = vsel %vm2032, %v2264, %v2265
    %v2267 = vrot.slane %v2252, 1
    %v2268 = vsel %vm2032, %v2265, %v2267
    %v2273 = vadd.f32 %v2239, %v2261
    %v2274 = vadd.f32 %v2240, %v2263
    %v2275 = vadd.f32 %v2241, %v2266
    %v2276 = vadd.f32 %v2242, %v2268
    %v2277 = vlaneseq
    %v2278 = vshrl.u32 %v2277, 7
    %v2279 = vsub.s32 2, %v2278
    %v2280 = vrot.slane %v2230, %v2279
    %v2281 = vmul.f32 %v2224, %v2280
    %v2282 = vmul.f32 %v2225, %v2280
    %v2283 = vmul.f32 %v2226, %v2280
    %v2284 = vmul.f32 %v2227, %v2280
    %v2285 = vmul.f32 %v2228, %v2280
    %v2286 = vmul.f32 %v2229, %v2280
    %v2293 = vrot.slane %v2281, 2
    %v2294 = vrot.slane %v2282, 2
    %v2295 = vsel %vm2067, %v2293, %v2294
    %v2296 = vrot.slane %v2283, 2
    %v2297 = vsel %vm2067, %v2294, %v2296
    %v2298 = vrot.slane %v2284, 2
    %v2299 = vrot.slane %v2285, 2
    %v2300 = vsel %vm2067, %v2298, %v2299
    %v2301 = vrot.slane %v2286, 2
    %v2302 = vsel %vm2067, %v2299, %v2301
    %v2307 = vadd.f32 %v2273, %v2295
    %v2308 = vadd.f32 %v2274, %v2297
    %v2309 = vadd.f32 %v2275, %v2300
    %v2310 = vadd.f32 %v2276, %v2302
    %v2311 = vld [vmem:[%s25] sm:$0x1]
    %v2313 = vlaneseq
    %v2314 = vshrl.u32 %v2313, 7
    %v2315 = vsub.s32 0, %v2314
    %v2316 = vrot.slane %v2311, %v2315
    %v2318 = vadd.f32 %v2307, %v2316
    %v2319 = vadd.f32 %v2308, %v2316
    %v2320 = vadd.f32 %v2309, %v2316
    %v2321 = vadd.f32 %v2310, %v2316
    %v2322 = vld [vmem:[%s27] sm:$0xff]
    %v2323 = vld [vmem:[%s29] sm:$0x1]
    %v2325 = vlaneseq
    %v2326 = vshrl.u32 %v2325, 7
    %v2327 = vsub.s32 0, %v2326
    %v2328 = vrot.slane %v2323, %v2327
    %v2331 = vsel %vm1985, %v2318, 0
    %v2334 = vsel %vm1985, %v2319, 0
    %v2337 = vsel %vm1985, %v2320, 0
    %v2340 = vsel %vm1985, %v2321, 0
    %2342 = vmatprep.subr.mxu0 0.0
    %2343 = vmatpush1.msra.mxu0 0.0
    %2344 = vmatprep.subr.mxu0 0.0
    %2345 = vmatpush1.msra.mxu0 0.0
    %2346 = vmatprep.subr.mxu0 0.0
    %2347 = vmatpush1.msra.mxu0 0.0
    %2348 = vmatprep.subr.mxu0 0.0
    %2349 = vmatpush1.msra.mxu0 0.0
    %2350 = vmatprep.subr.mxu0 0.0
    %2351 = vmatpush1.msra.mxu0 0.0
    %2352 = vmatprep.subr.mxu0 0.0
    %2353 = vmatpush1.msra.mxu0 0.0
    %2354 = vmatprep.subr.mxu0 0.0
    %2355 = vmatpush1.msra.mxu0 0.0
    %2356 = vmatprep.subr.mxu0 0.0
    %2357 = vmatpush1.msra.mxu0 0.0
    %2358 = vmatprep.subr.mxu0 0.0
    %2359 = vmatpush1.msra.mxu0 0.0
    %2360 = vmatprep.subr.mxu0 0.0
    %2361 = vmatpush1.msra.mxu0 0.0
    %2362 = vmatprep.subr.mxu0 0.0
    %2363 = vmatpush1.msra.mxu0 0.0
    %2364 = vmatprep.subr.mxu0 0.0
    %2365 = vmatpush1.msra.mxu0 0.0
    %2366 = vmatprep.subr.mxu0 0.0
    %2367 = vmatpush1.msra.mxu0 0.0
    %2368 = vmatprep.subr.mxu0 0.0
    %2369 = vmatpush1.msra.mxu0 0.0
    %2370 = vmatprep.subr.mxu0 0.0
    %2371 = vmatpush1.msra.mxu0 0.0
    %2372 = vmatprep.subr.mxu0 0.0
    %2373 = vmatpush1.msra.mxu0 %v2322
    %2374 = vmatprep.subr.mxu0 0.0
    %2375 = vmatpush2.msra.mxu0 0.0
    %2376 = vmatprep.subr.mxu0 0.0
    %2377 = vmatpush2.msra.mxu0 0.0
    %2378 = vmatprep.subr.mxu0 0.0
    %2379 = vmatpush2.msra.mxu0 0.0
    %2380 = vmatprep.subr.mxu0 0.0
    %2381 = vmatpush2.msra.mxu0 0.0
    %2382 = vmatprep.subr.mxu0 0.0
    %2383 = vmatpush2.msra.mxu0 0.0
    %2384 = vmatprep.subr.mxu0 0.0
    %2385 = vmatpush2.msra.mxu0 0.0
    %2386 = vmatprep.subr.mxu0 0.0
    %2387 = vmatpush2.msra.mxu0 0.0
    %2388 = vmatprep.subr.mxu0 0.0
    %2389 = vmatpush2.msra.mxu0 0.0
    %2390 = vmatprep.subr.mxu0 0.0
    %2391 = vmatpush2.msra.mxu0 0.0
    %2392 = vmatprep.subr.mxu0 0.0
    %2393 = vmatpush2.msra.mxu0 0.0
    %2394 = vmatprep.subr.mxu0 0.0
    %2395 = vmatpush2.msra.mxu0 0.0
    %2396 = vmatprep.subr.mxu0 0.0
    %2397 = vmatpush2.msra.mxu0 0.0
    %2398 = vmatprep.subr.mxu0 0.0
    %2399 = vmatpush2.msra.mxu0 0.0
    %2400 = vmatprep.subr.mxu0 0.0
    %2401 = vmatpush2.msra.mxu0 0.0
    %2402 = vmatprep.subr.mxu0 0.0
    %2403 = vmatpush2.msra.mxu0 0.0
    %2404 = vmatprep.subr.mxu0 0.0
    %2405 = vmatpush2.msra.mxu0 0.0
    %2406 = vmatprep.mubr.f32.mxu0 0.0
    %2407 = vmatmul.mubr.f32.gmra.mxu0 %v2331
    %v2408 = vpop.f32.mrf.mxu0
    %v2409 = vadd.f32 %v2328, %v2408
    %v2410 = vpop.f32.mrf.mxu0
    %2411 = vmatprep.mubr.f32.mxu0 0.0
    %2412 = vmatmul.mubr.f32.gmra.mxu0 %v2334
    %v2413 = vpop.f32.mrf.mxu0
    %v2414 = vadd.f32 %v2328, %v2413
    %v2415 = vpop.f32.mrf.mxu0
    %2416 = vmatprep.mubr.f32.mxu0 0.0
    %2417 = vmatmul.mubr.f32.gmra.mxu0 %v2337
    %v2418 = vpop.f32.mrf.mxu0
    %v2419 = vadd.f32 %v2328, %v2418
    %v2420 = vpop.f32.mrf.mxu0
    %2421 = vmatprep.mubr.f32.mxu0 0.0
    %2422 = vmatmul.mubr.f32.gmra.mxu0 %v2340
    %v2423 = vpop.f32.mrf.mxu0
    %v2424 = vadd.f32 %v2328, %v2423
    %v2425 = vpop.f32.mrf.mxu0
    %2426 = vdwg.mxu0
    %v2427 = vadd.f32 %v2409, %v2210
    %v2428 = vadd.f32 %v2414, %v2211
    %v2429 = vadd.f32 %v2419, %v2212
    %v2430 = vadd.f32 %v2424, %v2213
    %v2431 = vmax.f32 %v2427, 0.0
    %v2432 = vmax.f32 %v2428, 0.0
    %v2433 = vmax.f32 %v2429, 0.0
    %v2434 = vmax.f32 %v2430, 0.0
    %v2435 = vmin.f32 %v2431, 6.0
    %v2436 = vmin.f32 %v2432, 6.0
    %v2437 = vmin.f32 %v2433, 6.0
    %v2438 = vmin.f32 %v2434, 6.0
    %vm2439 = vcmask 60416
    %2440 = vst.msk [vmem:[#allocation5] sm:$0xf] %vm2439, 0.0
    %2441 = vst.msk [vmem:[#allocation5 + $0x4] sm:$0xf] %vm2439, 0.0
    %2442 = vst.msk [vmem:[#allocation5 + $0x8] sm:$0xf] %vm2439, 0.0
    %2443 = vst.msk [vmem:[#allocation5 + $0xc] sm:$0xf] %vm2439, 0.0
    %2444 = vst.msk [vmem:[#allocation5 + $0x10] sm:$0xf] %vm2439, 0.0
    %2445 = vst.msk [vmem:[#allocation5 + $0x14] sm:$0xf] %vm2439, 0.0
    %2446 = vst.msk [vmem:[#allocation5 + $0x18] sm:$0xf] %vm2439, 0.0
    %2447 = vst.msk [vmem:[#allocation5 + $0x1c] sm:$0xf] %vm2439, 0.0
    %2448 = vst.msk [vmem:[#allocation5 + $0x20] sm:$0xf] %vm2439, 0.0
    %2449 = vst.msk [vmem:[#allocation5 + $0x24] sm:$0xf] %vm2439, 0.0
    %2450 = vst.msk [vmem:[#allocation5 + $0x28] sm:$0xf] %vm2439, 0.0
    %2451 = vst.msk [vmem:[#allocation5 + $0x2c] sm:$0xf] %vm2439, 0.0
    %s2452 = scalar_lea.vmem [#allocation5], 4
    %2453 = vst.msk [vmem:[%s2452] sm:$0xf] %vm2439, %v2435
    %2454 = vst.msk [vmem:[%s2452 + $0x18] sm:$0xf] %vm2439, %v2437
    %s2455 = scalar_lea.vmem [#allocation5], 8
    %vm2456 = vcmask 64516
    %2457 = vst.msk [vmem:[%s2455 - $0x4] sm:$0xf0] %vm2456, %v2435
    %2458 = vst.msk [vmem:[%s2455 + $0x14] sm:$0xf0] %vm2456, %v2437
    %s2459 = scalar_lea.vmem [#allocation5], 12
    %2460 = vst.msk [vmem:[%s2459] sm:$0xf] %vm2439, %v2436
    %2461 = vst.msk [vmem:[%s2459 + $0x18] sm:$0xf] %vm2439, %v2438
    %s2462 = scalar_lea.vmem [#allocation5], 16
    %2463 = vst.msk [vmem:[%s2462 - $0x4] sm:$0xf0] %vm2456, %v2436
    %2464 = vst.msk [vmem:[%s2462 + $0x14] sm:$0xf0] %vm2456, %v2438
    %v2465 = vld [vmem:[#allocation5] sm:$0xf]
    %v2466 = vld [vmem:[#allocation5 + $0x4] sm:$0xf]
    %v2467 = vld [vmem:[#allocation5 + $0x8] sm:$0xf]
    %v2468 = vld [vmem:[#allocation5 + $0xc] sm:$0xf]
    %v2469 = vld [vmem:[#allocation5 + $0x10] sm:$0xf]
    %v2470 = vld [vmem:[#allocation5 + $0x14] sm:$0xf]
    %v2471 = vld [vmem:[#allocation5 + $0x18] sm:$0xf]
    %v2472 = vld [vmem:[#allocation5 + $0x1c] sm:$0xf]
    %v2473 = vld [vmem:[#allocation5 + $0x20] sm:$0xf]
    %v2474 = vld [vmem:[#allocation5 + $0x24] sm:$0xf]
    %v2475 = vld [vmem:[#allocation5 + $0x28] sm:$0xf]
    %v2476 = vld [vmem:[#allocation5 + $0x2c] sm:$0xf]
    %v2477 = vld [vmem:[%s31] sm:$0xff]
    %v2478 = vld [vmem:[%s31 + $0x8] sm:$0x1]
    %v2479 = vlaneseq
    %v2480 = vshrl.u32 %v2479, 7
    %v2481 = vsub.s32 0, %v2480
    %v2482 = vrot.slane %v2477, %v2481
    %v2483 = vmul.f32 %v2465, %v2482
    %v2484 = vmul.f32 %v2466, %v2482
    %v2485 = vmul.f32 %v2467, %v2482
    %v2486 = vmul.f32 %v2468, %v2482
    %v2487 = vmul.f32 %v2471, %v2482
    %v2488 = vmul.f32 %v2472, %v2482
    %v2489 = vmul.f32 %v2473, %v2482
    %v2490 = vmul.f32 %v2474, %v2482
    %v2491 = vadd.f32 %v2483, 0.0
    %v2492 = vadd.f32 %v2484, 0.0
    %v2493 = vadd.f32 %v2485, 0.0
    %v2494 = vadd.f32 %v2486, 0.0
    %v2495 = vadd.f32 %v2487, 0.0
    %v2496 = vadd.f32 %v2488, 0.0
    %v2497 = vadd.f32 %v2489, 0.0
    %v2498 = vadd.f32 %v2490, 0.0
    %v2499 = vlaneseq
    %v2500 = vshrl.u32 %v2499, 7
    %v2501 = vsub.s32 1, %v2500
    %v2502 = vrot.slane %v2477, %v2501
    %v2503 = vmul.f32 %v2465, %v2502
    %v2504 = vmul.f32 %v2466, %v2502
    %v2505 = vmul.f32 %v2467, %v2502
    %v2506 = vmul.f32 %v2468, %v2502
    %v2507 = vmul.f32 %v2471, %v2502
    %v2508 = vmul.f32 %v2472, %v2502
    %v2509 = vmul.f32 %v2473, %v2502
    %v2510 = vmul.f32 %v2474, %v2502
    %v2519 = vrot.slane %v2503, 1
    %v2520 = vrot.slane %v2504, 1
    %v2521 = vrot.slane %v2505, 1
    %v2522 = vrot.slane %v2506, 1
    %v2523 = vrot.slane %v2507, 1
    %v2524 = vrot.slane %v2508, 1
    %v2525 = vrot.slane %v2509, 1
    %v2526 = vrot.slane %v2510, 1
    %v2535 = vadd.f32 %v2491, %v2519
    %v2536 = vadd.f32 %v2492, %v2520
    %v2537 = vadd.f32 %v2493, %v2521
    %v2538 = vadd.f32 %v2494, %v2522
    %v2539 = vadd.f32 %v2495, %v2523
    %v2540 = vadd.f32 %v2496, %v2524
    %v2541 = vadd.f32 %v2497, %v2525
    %v2542 = vadd.f32 %v2498, %v2526
    %v2543 = vlaneseq
    %v2544 = vshrl.u32 %v2543, 7
    %v2545 = vsub.s32 2, %v2544
    %v2546 = vrot.slane %v2477, %v2545
    %v2547 = vmul.f32 %v2465, %v2546
    %v2548 = vmul.f32 %v2466, %v2546
    %v2549 = vmul.f32 %v2467, %v2546
    %v2550 = vmul.f32 %v2468, %v2546
    %v2551 = vmul.f32 %v2471, %v2546
    %v2552 = vmul.f32 %v2472, %v2546
    %v2553 = vmul.f32 %v2473, %v2546
    %v2554 = vmul.f32 %v2474, %v2546
    %v2563 = vrot.slane %v2547, 2
    %v2564 = vrot.slane %v2548, 2
    %v2565 = vrot.slane %v2549, 2
    %v2566 = vrot.slane %v2550, 2
    %v2567 = vrot.slane %v2551, 2
    %v2568 = vrot.slane %v2552, 2
    %v2569 = vrot.slane %v2553, 2
    %v2570 = vrot.slane %v2554, 2
    %v2579 = vadd.f32 %v2535, %v2563
    %v2580 = vadd.f32 %v2536, %v2564
    %v2581 = vadd.f32 %v2537, %v2565
    %v2582 = vadd.f32 %v2538, %v2566
    %v2583 = vadd.f32 %v2539, %v2567
    %v2584 = vadd.f32 %v2540, %v2568
    %v2585 = vadd.f32 %v2541, %v2569
    %v2586 = vadd.f32 %v2542, %v2570
    %v2587 = vlaneseq
    %v2588 = vshrl.u32 %v2587, 7
    %v2589 = vsub.s32 3, %v2588
    %v2590 = vrot.slane %v2477, %v2589
    %v2591 = vmul.f32 %v2465, %v2590
    %v2592 = vmul.f32 %v2466, %v2590
    %v2593 = vmul.f32 %v2467, %v2590
    %v2594 = vmul.f32 %v2468, %v2590
    %v2595 = vmul.f32 %v2471, %v2590
    %v2596 = vmul.f32 %v2472, %v2590
    %v2597 = vmul.f32 %v2473, %v2590
    %v2598 = vmul.f32 %v2474, %v2590
    %v2607 = vrot.slane %v2591, 3
    %v2608 = vrot.slane %v2592, 3
    %v2609 = vrot.slane %v2593, 3
    %v2610 = vrot.slane %v2594, 3
    %v2611 = vrot.slane %v2595, 3
    %v2612 = vrot.slane %v2596, 3
    %v2613 = vrot.slane %v2597, 3
    %v2614 = vrot.slane %v2598, 3
    %v2623 = vadd.f32 %v2579, %v2607
    %v2624 = vadd.f32 %v2580, %v2608
    %v2625 = vadd.f32 %v2581, %v2609
    %v2626 = vadd.f32 %v2582, %v2610
    %v2627 = vadd.f32 %v2583, %v2611
    %v2628 = vadd.f32 %v2584, %v2612
    %v2629 = vadd.f32 %v2585, %v2613
    %v2630 = vadd.f32 %v2586, %v2614
    %v2631 = vlaneseq
    %v2632 = vshrl.u32 %v2631, 7
    %v2633 = vsub.s32 4, %v2632
    %v2634 = vrot.slane %v2477, %v2633
    %v2635 = vmul.f32 %v2466, %v2634
    %v2636 = vmul.f32 %v2467, %v2634
    %v2637 = vmul.f32 %v2468, %v2634
    %v2638 = vmul.f32 %v2469, %v2634
    %v2639 = vmul.f32 %v2472, %v2634
    %v2640 = vmul.f32 %v2473, %v2634
    %v2641 = vmul.f32 %v2474, %v2634
    %v2642 = vmul.f32 %v2475, %v2634
    %v2643 = vadd.f32 %v2623, %v2635
    %v2644 = vadd.f32 %v2624, %v2636
    %v2645 = vadd.f32 %v2625, %v2637
    %v2646 = vadd.f32 %v2626, %v2638
    %v2647 = vadd.f32 %v2627, %v2639
    %v2648 = vadd.f32 %v2628, %v2640
    %v2649 = vadd.f32 %v2629, %v2641
    %v2650 = vadd.f32 %v2630, %v2642
    %v2651 = vlaneseq
    %v2652 = vshrl.u32 %v2651, 7
    %v2653 = vsub.s32 5, %v2652
    %v2654 = vrot.slane %v2477, %v2653
    %v2655 = vmul.f32 %v2466, %v2654
    %v2656 = vmul.f32 %v2467, %v2654
    %v2657 = vmul.f32 %v2468, %v2654
    %v2658 = vmul.f32 %v2469, %v2654
    %v2659 = vmul.f32 %v2472, %v2654
    %v2660 = vmul.f32 %v2473, %v2654
    %v2661 = vmul.f32 %v2474, %v2654
    %v2662 = vmul.f32 %v2475, %v2654
    %v2671 = vrot.slane %v2655, 1
    %v2672 = vrot.slane %v2656, 1
    %v2673 = vrot.slane %v2657, 1
    %v2674 = vrot.slane %v2658, 1
    %v2675 = vrot.slane %v2659, 1
    %v2676 = vrot.slane %v2660, 1
    %v2677 = vrot.slane %v2661, 1
    %v2678 = vrot.slane %v2662, 1
    %v2687 = vadd.f32 %v2643, %v2671
    %v2688 = vadd.f32 %v2644, %v2672
    %v2689 = vadd.f32 %v2645, %v2673
    %v2690 = vadd.f32 %v2646, %v2674
    %v2691 = vadd.f32 %v2647, %v2675
    %v2692 = vadd.f32 %v2648, %v2676
    %v2693 = vadd.f32 %v2649, %v2677
    %v2694 = vadd.f32 %v2650, %v2678
    %v2695 = vlaneseq
    %v2696 = vshrl.u32 %v2695, 7
    %v2697 = vsub.s32 6, %v2696
    %v2698 = vrot.slane %v2477, %v2697
    %v2699 = vmul.f32 %v2466, %v2698
    %v2700 = vmul.f32 %v2467, %v2698
    %v2701 = vmul.f32 %v2468, %v2698
    %v2702 = vmul.f32 %v2469, %v2698
    %v2703 = vmul.f32 %v2472, %v2698
    %v2704 = vmul.f32 %v2473, %v2698
    %v2705 = vmul.f32 %v2474, %v2698
    %v2706 = vmul.f32 %v2475, %v2698
    %v2715 = vrot.slane %v2699, 2
    %v2716 = vrot.slane %v2700, 2
    %v2717 = vrot.slane %v2701, 2
    %v2718 = vrot.slane %v2702, 2
    %v2719 = vrot.slane %v2703, 2
    %v2720 = vrot.slane %v2704, 2
    %v2721 = vrot.slane %v2705, 2
    %v2722 = vrot.slane %v2706, 2
    %v2731 = vadd.f32 %v2687, %v2715
    %v2732 = vadd.f32 %v2688, %v2716
    %v2733 = vadd.f32 %v2689, %v2717
    %v2734 = vadd.f32 %v2690, %v2718
    %v2735 = vadd.f32 %v2691, %v2719
    %v2736 = vadd.f32 %v2692, %v2720
    %v2737 = vadd.f32 %v2693, %v2721
    %v2738 = vadd.f32 %v2694, %v2722
    %v2739 = vlaneseq
    %v2740 = vshrl.u32 %v2739, 7
    %v2741 = vsub.s32 7, %v2740
    %v2742 = vrot.slane %v2477, %v2741
    %v2743 = vmul.f32 %v2466, %v2742
    %v2744 = vmul.f32 %v2467, %v2742
    %v2745 = vmul.f32 %v2468, %v2742
    %v2746 = vmul.f32 %v2469, %v2742
    %v2747 = vmul.f32 %v2472, %v2742
    %v2748 = vmul.f32 %v2473, %v2742
    %v2749 = vmul.f32 %v2474, %v2742
    %v2750 = vmul.f32 %v2475, %v2742
    %v2759 = vrot.slane %v2743, 3
    %v2760 = vrot.slane %v2744, 3
    %v2761 = vrot.slane %v2745, 3
    %v2762 = vrot.slane %v2746, 3
    %v2763 = vrot.slane %v2747, 3
    %v2764 = vrot.slane %v2748, 3
    %v2765 = vrot.slane %v2749, 3
    %v2766 = vrot.slane %v2750, 3
    %v2775 = vadd.f32 %v2731, %v2759
    %v2776 = vadd.f32 %v2732, %v2760
    %v2777 = vadd.f32 %v2733, %v2761
    %v2778 = vadd.f32 %v2734, %v2762
    %v2779 = vadd.f32 %v2735, %v2763
    %v2780 = vadd.f32 %v2736, %v2764
    %v2781 = vadd.f32 %v2737, %v2765
    %v2782 = vadd.f32 %v2738, %v2766
    %v2783 = vlaneseq
    %v2784 = vshrl.u32 %v2783, 7
    %v2785 = vsub.s32 0, %v2784
    %v2786 = vrot.slane %v2478, %v2785
    %v2787 = vmul.f32 %v2467, %v2786
    %v2788 = vmul.f32 %v2468, %v2786
    %v2789 = vmul.f32 %v2469, %v2786
    %v2790 = vmul.f32 %v2470, %v2786
    %v2791 = vmul.f32 %v2473, %v2786
    %v2792 = vmul.f32 %v2474, %v2786
    %v2793 = vmul.f32 %v2475, %v2786
    %v2794 = vmul.f32 %v2476, %v2786
    %v2795 = vadd.f32 %v2775, %v2787
    %v2796 = vadd.f32 %v2776, %v2788
    %v2797 = vadd.f32 %v2777, %v2789
    %v2798 = vadd.f32 %v2778, %v2790
    %v2799 = vadd.f32 %v2779, %v2791
    %v2800 = vadd.f32 %v2780, %v2792
    %v2801 = vadd.f32 %v2781, %v2793
    %v2802 = vadd.f32 %v2782, %v2794
    %v2803 = vld [vmem:[%s33] sm:$0x1]
    %v2805 = vlaneseq
    %v2806 = vshrl.u32 %v2805, 7
    %v2807 = vsub.s32 0, %v2806
    %v2808 = vrot.slane %v2803, %v2807
    %v2810 = vadd.f32 %v2795, %v2808
    %v2811 = vadd.f32 %v2796, %v2808
    %v2812 = vadd.f32 %v2797, %v2808
    %v2813 = vadd.f32 %v2798, %v2808
    %v2814 = vadd.f32 %v2799, %v2808
    %v2815 = vadd.f32 %v2800, %v2808
    %v2816 = vadd.f32 %v2801, %v2808
    %v2817 = vadd.f32 %v2802, %v2808
    %v2818 = vld [vmem:[%s35] sm:$0xff]
    %v2819 = vld [vmem:[%s37] sm:$0x1]
    %v2821 = vlaneseq
    %v2822 = vshrl.u32 %v2821, 7
    %v2823 = vsub.s32 0, %v2822
    %v2824 = vrot.slane %v2819, %v2823
    %v2834 = vrot.slane %v2811, 7
    %v2835 = vsel %vm1621, %v2834, %v2810
    %v2836 = vrot.slane %v2812, 6
    %v2837 = vsel %vm1624, %v2836, %v2835
    %v2838 = vrot.slane %v2813, 5
    %v2839 = vsel %vm1627, %v2838, %v2837
    %v2840 = vrot.slane %v2814, 4
    %v2841 = vsel %vm1630, %v2840, %v2839
    %v2842 = vrot.slane %v2815, 3
    %v2843 = vsel %vm1633, %v2842, %v2841
    %v2844 = vrot.slane %v2816, 2
    %v2845 = vsel %vm1636, %v2844, %v2843
    %v2846 = vrot.slane %v2817, 1
    %v2847 = vsel %vm1639, %v2846, %v2845
    %v2848 = vsel %vm1985, %v2847, 0
    %2850 = vmatprep.subr.mxu0 0.0
    %2851 = vmatpush1.msra.mxu0 0.0
    %2852 = vmatprep.subr.mxu0 0.0
    %2853 = vmatpush1.msra.mxu0 0.0
    %2854 = vmatprep.subr.mxu0 0.0
    %2855 = vmatpush1.msra.mxu0 0.0
    %2856 = vmatprep.subr.mxu0 0.0
    %2857 = vmatpush1.msra.mxu0 0.0
    %2858 = vmatprep.subr.mxu0 0.0
    %2859 = vmatpush1.msra.mxu0 0.0
    %2860 = vmatprep.subr.mxu0 0.0
    %2861 = vmatpush1.msra.mxu0 0.0
    %2862 = vmatprep.subr.mxu0 0.0
    %2863 = vmatpush1.msra.mxu0 0.0
    %2864 = vmatprep.subr.mxu0 0.0
    %2865 = vmatpush1.msra.mxu0 0.0
    %2866 = vmatprep.subr.mxu0 0.0
    %2867 = vmatpush1.msra.mxu0 0.0
    %2868 = vmatprep.subr.mxu0 0.0
    %2869 = vmatpush1.msra.mxu0 0.0
    %2870 = vmatprep.subr.mxu0 0.0
    %2871 = vmatpush1.msra.mxu0 0.0
    %2872 = vmatprep.subr.mxu0 0.0
    %2873 = vmatpush1.msra.mxu0 0.0
    %2874 = vmatprep.subr.mxu0 0.0
    %2875 = vmatpush1.msra.mxu0 0.0
    %2876 = vmatprep.subr.mxu0 0.0
    %2877 = vmatpush1.msra.mxu0 0.0
    %2878 = vmatprep.subr.mxu0 0.0
    %2879 = vmatpush1.msra.mxu0 0.0
    %2880 = vmatprep.subr.mxu0 0.0
    %2881 = vmatpush1.msra.mxu0 %v2818
    %2882 = vmatprep.subr.mxu0 0.0
    %2883 = vmatpush2.msra.mxu0 0.0
    %2884 = vmatprep.subr.mxu0 0.0
    %2885 = vmatpush2.msra.mxu0 0.0
    %2886 = vmatprep.subr.mxu0 0.0
    %2887 = vmatpush2.msra.mxu0 0.0
    %2888 = vmatprep.subr.mxu0 0.0
    %2889 = vmatpush2.msra.mxu0 0.0
    %2890 = vmatprep.subr.mxu0 0.0
    %2891 = vmatpush2.msra.mxu0 0.0
    %2892 = vmatprep.subr.mxu0 0.0
    %2893 = vmatpush2.msra.mxu0 0.0
    %2894 = vmatprep.subr.mxu0 0.0
    %2895 = vmatpush2.msra.mxu0 0.0
    %2896 = vmatprep.subr.mxu0 0.0
    %2897 = vmatpush2.msra.mxu0 0.0
    %2898 = vmatprep.subr.mxu0 0.0
    %2899 = vmatpush2.msra.mxu0 0.0
    %2900 = vmatprep.subr.mxu0 0.0
    %2901 = vmatpush2.msra.mxu0 0.0
    %2902 = vmatprep.subr.mxu0 0.0
    %2903 = vmatpush2.msra.mxu0 0.0
    %2904 = vmatprep.subr.mxu0 0.0
    %2905 = vmatpush2.msra.mxu0 0.0
    %2906 = vmatprep.subr.mxu0 0.0
    %2907 = vmatpush2.msra.mxu0 0.0
    %2908 = vmatprep.subr.mxu0 0.0
    %2909 = vmatpush2.msra.mxu0 0.0
    %2910 = vmatprep.subr.mxu0 0.0
    %2911 = vmatpush2.msra.mxu0 0.0
    %2912 = vmatprep.subr.mxu0 0.0
    %2913 = vmatpush2.msra.mxu0 0.0
    %2914 = vmatprep.mubr.f32.mxu0 0.0
    %2915 = vmatmul.mubr.f32.gmra.mxu0 %v2848
    %v2916 = vpop.f32.mrf.mxu0
    %v2917 = vadd.f32 %v2824, %v2916
    %v2918 = vpop.f32.mrf.mxu0
    %2919 = vdwg.mxu0
    %v2920 = vld [vmem:[%s39] sm:$0xff]
    %v2921 = vld [vmem:[%s41] sm:$0x1]
    %v2923 = vlaneseq
    %v2924 = vshrl.u32 %v2923, 7
    %v2925 = vsub.s32 0, %v2924
    %v2926 = vrot.slane %v2921, %v2925
    %v2936 = vrot.slane %v2467, 7
    %v2937 = vsel %vm1621, %v2936, %v2466
    %v2938 = vrot.slane %v2468, 6
    %v2939 = vsel %vm1624, %v2938, %v2937
    %v2940 = vrot.slane %v2469, 5
    %v2941 = vsel %vm1627, %v2940, %v2939
    %v2942 = vrot.slane %v2472, 4
    %v2943 = vsel %vm1630, %v2942, %v2941
    %v2944 = vrot.slane %v2473, 3
    %v2945 = vsel %vm1633, %v2944, %v2943
    %v2946 = vrot.slane %v2474, 2
    %v2947 = vsel %vm1636, %v2946, %v2945
    %v2948 = vrot.slane %v2475, 1
    %v2949 = vsel %vm1639, %v2948, %v2947
    %v2950 = vsel %vm1985, %v2949, 0
    %2952 = vmatprep.subr.mxu0 0.0
    %2953 = vmatpush1.msra.mxu0 0.0
    %2954 = vmatprep.subr.mxu0 0.0
    %2955 = vmatpush1.msra.mxu0 0.0
    %2956 = vmatprep.subr.mxu0 0.0
    %2957 = vmatpush1.msra.mxu0 0.0
    %2958 = vmatprep.subr.mxu0 0.0
    %2959 = vmatpush1.msra.mxu0 0.0
    %2960 = vmatprep.subr.mxu0 0.0
    %2961 = vmatpush1.msra.mxu0 0.0
    %2962 = vmatprep.subr.mxu0 0.0
    %2963 = vmatpush1.msra.mxu0 0.0
    %2964 = vmatprep.subr.mxu0 0.0
    %2965 = vmatpush1.msra.mxu0 0.0
    %2966 = vmatprep.subr.mxu0 0.0
    %2967 = vmatpush1.msra.mxu0 0.0
    %2968 = vmatprep.subr.mxu0 0.0
    %2969 = vmatpush1.msra.mxu0 0.0
    %2970 = vmatprep.subr.mxu0 0.0
    %2971 = vmatpush1.msra.mxu0 0.0
    %2972 = vmatprep.subr.mxu0 0.0
    %2973 = vmatpush1.msra.mxu0 0.0
    %2974 = vmatprep.subr.mxu0 0.0
    %2975 = vmatpush1.msra.mxu0 0.0
    %2976 = vmatprep.subr.mxu0 0.0
    %2977 = vmatpush1.msra.mxu0 0.0
    %2978 = vmatprep.subr.mxu0 0.0
    %2979 = vmatpush1.msra.mxu0 0.0
    %2980 = vmatprep.subr.mxu0 0.0
    %2981 = vmatpush1.msra.mxu0 0.0
    %2982 = vmatprep.subr.mxu0 0.0
    %2983 = vmatpush1.msra.mxu0 %v2920
    %2984 = vmatprep.subr.mxu0 0.0
    %2985 = vmatpush2.msra.mxu0 0.0
    %2986 = vmatprep.subr.mxu0 0.0
    %2987 = vmatpush2.msra.mxu0 0.0
    %2988 = vmatprep.subr.mxu0 0.0
    %2989 = vmatpush2.msra.mxu0 0.0
    %2990 = vmatprep.subr.mxu0 0.0
    %2991 = vmatpush2.msra.mxu0 0.0
    %2992 = vmatprep.subr.mxu0 0.0
    %2993 = vmatpush2.msra.mxu0 0.0
    %2994 = vmatprep.subr.mxu0 0.0
    %2995 = vmatpush2.msra.mxu0 0.0
    %2996 = vmatprep.subr.mxu0 0.0
    %2997 = vmatpush2.msra.mxu0 0.0
    %2998 = vmatprep.subr.mxu0 0.0
    %2999 = vmatpush2.msra.mxu0 0.0
    %3000 = vmatprep.subr.mxu0 0.0
    %3001 = vmatpush2.msra.mxu0 0.0
    %3002 = vmatprep.subr.mxu0 0.0
    %3003 = vmatpush2.msra.mxu0 0.0
    %3004 = vmatprep.subr.mxu0 0.0
    %3005 = vmatpush2.msra.mxu0 0.0
    %3006 = vmatprep.subr.mxu0 0.0
    %3007 = vmatpush2.msra.mxu0 0.0
    %3008 = vmatprep.subr.mxu0 0.0
    %3009 = vmatpush2.msra.mxu0 0.0
    %3010 = vmatprep.subr.mxu0 0.0
    %3011 = vmatpush2.msra.mxu0 0.0
    %3012 = vmatprep.subr.mxu0 0.0
    %3013 = vmatpush2.msra.mxu0 0.0
    %3014 = vmatprep.subr.mxu0 0.0
    %3015 = vmatpush2.msra.mxu0 0.0
    %3016 = vmatprep.mubr.f32.mxu0 0.0
    %3017 = vmatmul.mubr.f32.gmra.mxu0 %v2950
    %v3018 = vpop.f32.mrf.mxu0
    %v3019 = vadd.f32 %v2926, %v3018
    %v3020 = vpop.f32.mrf.mxu0
    %3021 = vdwg.mxu0
    %v3022 = vadd.f32 %v2917, %v3019
    %v3023 = vmax.f32 %v3022, 0.0
    %v3024 = vmin.f32 %v3023, 6.0
    %v3026 = vcombine.high %v3024, %v3024
    %vm3028 = vcmask 128000
    %3029 = vst.msk [vmem:[#allocation6] sm:$0x3f] %vm3028, 0.0
    %3030 = vst.msk [vmem:[#allocation6 + $0x8] sm:$0x3f] %vm3028, 0.0
    %vm3031 = vcmask 125952
    %3032 = vst.msk [vmem:[#allocation6 + $0x1] sm:$0xf] %vm3031, %v3024
    %3033 = vst.msk [vmem:[#allocation6 + $0x9] sm:$0xf] %vm3031, %v3026
    %v3034 = vld [vmem:[#allocation6] sm:$0x3f]
    %v3035 = vld [vmem:[#allocation6 + $0x8] sm:$0x3f]
    %v3036 = vld [vmem:[%s43] sm:$0x7]
    %v3037 = vlaneseq
    %v3038 = vshrl.u32 %v3037, 7
    %v3039 = vsub.s32 0, %v3038
    %v3040 = vrot.slane %v3036, %v3039
    %v3041 = vmul.f32 %v3034, %v3040
    %v3042 = vmul.f32 %v3035, %v3040
    %v3043 = vadd.f32 %v3041, 0.0
    %v3044 = vadd.f32 %v3042, 0.0
    %v3045 = vlaneseq
    %v3046 = vshrl.u32 %v3045, 7
    %v3047 = vsub.s32 1, %v3046
    %v3048 = vrot.slane %v3036, %v3047
    %v3049 = vmul.f32 %v3034, %v3048
    %v3050 = vmul.f32 %v3035, %v3048
    %v3053 = vrot.slane %v3049, 1
    %v3054 = vrot.slane %v3050, 1
    %v3057 = vadd.f32 %v3043, %v3053
    %v3058 = vadd.f32 %v3044, %v3054
    %v3059 = vlaneseq
    %v3060 = vshrl.u32 %v3059, 7
    %v3061 = vsub.s32 2, %v3060
    %v3062 = vrot.slane %v3036, %v3061
    %v3063 = vmul.f32 %v3034, %v3062
    %v3064 = vmul.f32 %v3035, %v3062
    %v3067 = vrot.slane %v3063, 2
    %v3068 = vrot.slane %v3064, 2
    %v3071 = vadd.f32 %v3057, %v3067
    %v3072 = vadd.f32 %v3058, %v3068
    %v3073 = vld [vmem:[#allocation8] sm:$0x1]
    %v3075 = vlaneseq
    %v3076 = vshrl.u32 %v3075, 7
    %v3077 = vsub.s32 0, %v3076
    %v3078 = vrot.slane %v3073, %v3077
    %v3080 = vcombine.high %v3078, %v3078
    %v3082 = vadd.f32 %v3071, %v3078
    %v3083 = vadd.f32 %v3072, %v3080
    %v3084 = vld [vmem:[%s47] sm:$0xff]
    %v3085 = vld [vmem:[%s47 + $0x8] sm:$0xff]
    %v3086 = vld [vmem:[#allocation11] sm:$0x1]
    %v3088 = vlaneseq
    %v3089 = vshrl.u32 %v3088, 7
    %v3090 = vsub.s32 0, %v3089
    %v3091 = vrot.slane %v3086, %v3090
    %v3095 = vcombine.low %v3082, %v3083
    %vm3096 = vcmask 130048
    %v3097 = vsel %vm3096, %v3095, 0
    %3099 = vmatprep.subr.mxu0 0.0
    %3100 = vmatpush1.msra.mxu0 0.0
    %3101 = vmatprep.subr.mxu0 0.0
    %3102 = vmatpush1.msra.mxu0 0.0
    %3103 = vmatprep.subr.mxu0 0.0
    %3104 = vmatpush1.msra.mxu0 0.0
    %3105 = vmatprep.subr.mxu0 0.0
    %3106 = vmatpush1.msra.mxu0 0.0
    %3107 = vmatprep.subr.mxu0 0.0
    %3108 = vmatpush1.msra.mxu0 0.0
    %3109 = vmatprep.subr.mxu0 0.0
    %3110 = vmatpush1.msra.mxu0 0.0
    %3111 = vmatprep.subr.mxu0 0.0
    %3112 = vmatpush1.msra.mxu0 0.0
    %3113 = vmatprep.subr.mxu0 0.0
    %3114 = vmatpush1.msra.mxu0 0.0
    %3115 = vmatprep.subr.mxu0 0.0
    %3116 = vmatpush1.msra.mxu0 0.0
    %3117 = vmatprep.subr.mxu0 0.0
    %3118 = vmatpush1.msra.mxu0 0.0
    %3119 = vmatprep.subr.mxu0 0.0
    %3120 = vmatpush1.msra.mxu0 0.0
    %3121 = vmatprep.subr.mxu0 0.0
    %3122 = vmatpush1.msra.mxu0 0.0
    %3123 = vmatprep.subr.mxu0 0.0
    %3124 = vmatpush1.msra.mxu0 0.0
    %3125 = vmatprep.subr.mxu0 0.0
    %3126 = vmatpush1.msra.mxu0 0.0
    %3127 = vmatprep.subr.mxu0 0.0
    %3128 = vmatpush1.msra.mxu0 %v3085
    %3129 = vmatprep.subr.mxu0 0.0
    %3130 = vmatpush1.msra.mxu0 %v3084
    %3131 = vmatprep.subr.mxu0 0.0
    %3132 = vmatpush2.msra.mxu0 0.0
    %3133 = vmatprep.subr.mxu0 0.0
    %3134 = vmatpush2.msra.mxu0 0.0
    %3135 = vmatprep.subr.mxu0 0.0
    %3136 = vmatpush2.msra.mxu0 0.0
    %3137 = vmatprep.subr.mxu0 0.0
    %3138 = vmatpush2.msra.mxu0 0.0
    %3139 = vmatprep.subr.mxu0 0.0
    %3140 = vmatpush2.msra.mxu0 0.0
    %3141 = vmatprep.subr.mxu0 0.0
    %3142 = vmatpush2.msra.mxu0 0.0
    %3143 = vmatprep.subr.mxu0 0.0
    %3144 = vmatpush2.msra.mxu0 0.0
    %3145 = vmatprep.subr.mxu0 0.0
    %3146 = vmatpush2.msra.mxu0 0.0
    %3147 = vmatprep.subr.mxu0 0.0
    %3148 = vmatpush2.msra.mxu0 0.0
    %3149 = vmatprep.subr.mxu0 0.0
    %3150 = vmatpush2.msra.mxu0 0.0
    %3151 = vmatprep.subr.mxu0 0.0
    %3152 = vmatpush2.msra.mxu0 0.0
    %3153 = vmatprep.subr.mxu0 0.0
    %3154 = vmatpush2.msra.mxu0 0.0
    %3155 = vmatprep.subr.mxu0 0.0
    %3156 = vmatpush2.msra.mxu0 0.0
    %3157 = vmatprep.subr.mxu0 0.0
    %3158 = vmatpush2.msra.mxu0 0.0
    %3159 = vmatprep.subr.mxu0 0.0
    %3160 = vmatpush2.msra.mxu0 0.0
    %3161 = vmatprep.subr.mxu0 0.0
    %3162 = vmatpush2.msra.mxu0 0.0
    %3163 = vmatprep.mubr.f32.mxu0 0.0
    %3164 = vmatmul.mubr.f32.gmra.mxu0 %v3097
    %v3165 = vpop.f32.mrf.mxu0
    %v3166 = vadd.f32 %v3091, %v3165
    %v3167 = vpop.f32.mrf.mxu0
    %3168 = vdwg.mxu0
    %v3169 = vadd.f32 %v3166, %v3024
    %v3170 = vmax.f32 %v3169, 0.0
    %v3171 = vmin.f32 %v3170, 6.0
    %v3173 = vcombine.high %v3171, %v3171
    %3175 = vst.msk [vmem:[#allocation7] sm:$0x3f] %vm3028, 0.0
    %3176 = vst.msk [vmem:[#allocation7 + $0x8] sm:$0x3f] %vm3028, 0.0
    %3177 = vst.msk [vmem:[#allocation7 + $0x1] sm:$0xf] %vm3031, %v3171
    %3178 = vst.msk [vmem:[#allocation7 + $0x9] sm:$0xf] %vm3031, %v3173
    %v3179 = vld [vmem:[#allocation7] sm:$0x3f]
    %v3180 = vld [vmem:[#allocation7 + $0x8] sm:$0x3f]
    %v3181 = vld [vmem:[%s51] sm:$0x7]
    %v3182 = vlaneseq
    %v3183 = vshrl.u32 %v3182, 7
    %v3184 = vsub.s32 0, %v3183
    %v3185 = vrot.slane %v3181, %v3184
    %v3186 = vmul.f32 %v3179, %v3185
    %v3187 = vmul.f32 %v3180, %v3185
    %v3188 = vadd.f32 %v3186, 0.0
    %v3189 = vadd.f32 %v3187, 0.0
    %v3190 = vlaneseq
    %v3191 = vshrl.u32 %v3190, 7
    %v3192 = vsub.s32 1, %v3191
    %v3193 = vrot.slane %v3181, %v3192
    %v3194 = vmul.f32 %v3179, %v3193
    %v3195 = vmul.f32 %v3180, %v3193
    %v3198 = vrot.slane %v3194, 1
    %v3199 = vrot.slane %v3195, 1
    %v3202 = vadd.f32 %v3188, %v3198
    %v3203 = vadd.f32 %v3189, %v3199
    %v3204 = vlaneseq
    %v3205 = vshrl.u32 %v3204, 7
    %v3206 = vsub.s32 2, %v3205
    %v3207 = vrot.slane %v3181, %v3206
    %v3208 = vmul.f32 %v3179, %v3207
    %v3209 = vmul.f32 %v3180, %v3207
    %v3212 = vrot.slane %v3208, 2
    %v3213 = vrot.slane %v3209, 2
    %v3216 = vadd.f32 %v3202, %v3212
    %v3217 = vadd.f32 %v3203, %v3213
    %v3218 = vld [vmem:[#allocation13] sm:$0x1]
    %v3220 = vlaneseq
    %v3221 = vshrl.u32 %v3220, 7
    %v3222 = vsub.s32 0, %v3221
    %v3223 = vrot.slane %v3218, %v3222
    %v3225 = vcombine.high %v3223, %v3223
    %v3227 = vadd.f32 %v3216, %v3223
    %v3228 = vadd.f32 %v3217, %v3225
    %v3229 = vld [vmem:[%s55] sm:$0xff]
    %v3230 = vld [vmem:[%s55 + $0x8] sm:$0xff]
    %v3231 = vld [vmem:[#allocation14] sm:$0x1]
    %v3233 = vlaneseq
    %v3234 = vshrl.u32 %v3233, 7
    %v3235 = vsub.s32 0, %v3234
    %v3236 = vrot.slane %v3231, %v3235
    %v3240 = vcombine.low %v3227, %v3228
    %v3241 = vsel %vm3096, %v3240, 0
    %3243 = vmatprep.subr.mxu0 0.0
    %3244 = vmatpush1.msra.mxu0 0.0
    %3245 = vmatprep.subr.mxu0 0.0
    %3246 = vmatpush1.msra.mxu0 0.0
    %3247 = vmatprep.subr.mxu0 0.0
    %3248 = vmatpush1.msra.mxu0 0.0
    %3249 = vmatprep.subr.mxu0 0.0
    %3250 = vmatpush1.msra.mxu0 0.0
    %3251 = vmatprep.subr.mxu0 0.0
    %3252 = vmatpush1.msra.mxu0 0.0
    %3253 = vmatprep.subr.mxu0 0.0
    %3254 = vmatpush1.msra.mxu0 0.0
    %3255 = vmatprep.subr.mxu0 0.0
    %3256 = vmatpush1.msra.mxu0 0.0
    %3257 = vmatprep.subr.mxu0 0.0
    %3258 = vmatpush1.msra.mxu0 0.0
    %3259 = vmatprep.subr.mxu0 0.0
    %3260 = vmatpush1.msra.mxu0 0.0
    %3261 = vmatprep.subr.mxu0 0.0
    %3262 = vmatpush1.msra.mxu0 0.0
    %3263 = vmatprep.subr.mxu0 0.0
    %3264 = vmatpush1.msra.mxu0 0.0
    %3265 = vmatprep.subr.mxu0 0.0
    %3266 = vmatpush1.msra.mxu0 0.0
    %3267 = vmatprep.subr.mxu0 0.0
    %3268 = vmatpush1.msra.mxu0 0.0
    %3269 = vmatprep.subr.mxu0 0.0
    %3270 = vmatpush1.msra.mxu0 0.0
    %3271 = vmatprep.subr.mxu0 0.0
    %3272 = vmatpush1.msra.mxu0 %v3230
    %3273 = vmatprep.subr.mxu0 0.0
    %3274 = vmatpush1.msra.mxu0 %v3229
    %3275 = vmatprep.subr.mxu0 0.0
    %3276 = vmatpush2.msra.mxu0 0.0
    %3277 = vmatprep.subr.mxu0 0.0
    %3278 = vmatpush2.msra.mxu0 0.0
    %3279 = vmatprep.subr.mxu0 0.0
    %3280 = vmatpush2.msra.mxu0 0.0
    %3281 = vmatprep.subr.mxu0 0.0
    %3282 = vmatpush2.msra.mxu0 0.0
    %3283 = vmatprep.subr.mxu0 0.0
    %3284 = vmatpush2.msra.mxu0 0.0
    %3285 = vmatprep.subr.mxu0 0.0
    %3286 = vmatpush2.msra.mxu0 0.0
    %3287 = vmatprep.subr.mxu0 0.0
    %3288 = vmatpush2.msra.mxu0 0.0
    %3289 = vmatprep.subr.mxu0 0.0
    %3290 = vmatpush2.msra.mxu0 0.0
    %3291 = vmatprep.subr.mxu0 0.0
    %3292 = vmatpush2.msra.mxu0 0.0
    %3293 = vmatprep.subr.mxu0 0.0
    %3294 = vmatpush2.msra.mxu0 0.0
    %3295 = vmatprep.subr.mxu0 0.0
    %3296 = vmatpush2.msra.mxu0 0.0
    %3297 = vmatprep.subr.mxu0 0.0
    %3298 = vmatpush2.msra.mxu0 0.0
    %3299 = vmatprep.subr.mxu0 0.0
    %3300 = vmatpush2.msra.mxu0 0.0
    %3301 = vmatprep.subr.mxu0 0.0
    %3302 = vmatpush2.msra.mxu0 0.0
    %3303 = vmatprep.subr.mxu0 0.0
    %3304 = vmatpush2.msra.mxu0 0.0
    %3305 = vmatprep.subr.mxu0 0.0
    %3306 = vmatpush2.msra.mxu0 0.0
    %3307 = vmatprep.mubr.f32.mxu0 0.0
    %3308 = vmatmul.mubr.f32.gmra.mxu0 %v3241
    %v3309 = vpop.f32.mrf.mxu0
    %v3310 = vadd.f32 %v3236, %v3309
    %v3311 = vpop.f32.mrf.mxu0
    %3312 = vdwg.mxu0
    %v3313 = vadd.f32 %v3310, %v3171
    %v3314 = vmax.f32 %v3313, 0.0
    %v3315 = vmin.f32 %v3314, 6.0
    %v3317 = vcombine.high %v3315, %v3315
    %v3319 = vsel %vm3031, %v3315, 0.0
    %v3320 = vrot.slane %v3319, 4
    %v3321 = vadd.f32 %v3319, %v3320
    %v3322 = vrot.slane %v3321, 2
    %v3323 = vadd.f32 %v3321, %v3322
    %v3324 = vrot.slane %v3323, 1
    %v3325 = vadd.f32 %v3323, %v3324
    %v3326 = vsel %vm3031, %v3317, 0.0
    %v3327 = vrot.slane %v3326, 4
    %v3328 = vadd.f32 %v3326, %v3327
    %v3329 = vrot.slane %v3328, 2
    %v3330 = vadd.f32 %v3328, %v3329
    %v3331 = vrot.slane %v3330, 1
    %v3332 = vadd.f32 %v3330, %v3331
    %v3333 = vrcp.pop 4.0
    %v3334 = vmul.f32 %v3325, %v3333
    %v3335 = vmul.f32 %v3332, %v3333
    %v3336 = vld [vmem:[%s59] sm:$0xff]
    %v3337 = vld [vmem:[%s59 + $0x8] sm:$0xff]
    %v3338 = vld [vmem:[#allocation16] sm:$0x1]
    %v3340 = vlaneseq
    %v3341 = vshrl.u32 %v3340, 7
    %v3342 = vsub.s32 0, %v3341
    %v3343 = vrot.slane %v3338, %v3342
    %v3347 = vsel %vm1621, %v3335, %v3334
    %v3348 = vsel %vm3096, %v3347, 0
    %3350 = vmatprep.subr.mxu0 0.0
    %3351 = vmatpush1.msra.mxu0 0.0
    %3352 = vmatprep.subr.mxu0 0.0
    %3353 = vmatpush1.msra.mxu0 0.0
    %3354 = vmatprep.subr.mxu0 0.0
    %3355 = vmatpush1.msra.mxu0 0.0
    %3356 = vmatprep.subr.mxu0 0.0
    %3357 = vmatpush1.msra.mxu0 0.0
    %3358 = vmatprep.subr.mxu0 0.0
    %3359 = vmatpush1.msra.mxu0 0.0
    %3360 = vmatprep.subr.mxu0 0.0
    %3361 = vmatpush1.msra.mxu0 0.0
    %3362 = vmatprep.subr.mxu0 0.0
    %3363 = vmatpush1.msra.mxu0 0.0
    %3364 = vmatprep.subr.mxu0 0.0
    %3365 = vmatpush1.msra.mxu0 0.0
    %3366 = vmatprep.subr.mxu0 0.0
    %3367 = vmatpush1.msra.mxu0 0.0
    %3368 = vmatprep.subr.mxu0 0.0
    %3369 = vmatpush1.msra.mxu0 0.0
    %3370 = vmatprep.subr.mxu0 0.0
    %3371 = vmatpush1.msra.mxu0 0.0
    %3372 = vmatprep.subr.mxu0 0.0
    %3373 = vmatpush1.msra.mxu0 0.0
    %3374 = vmatprep.subr.mxu0 0.0
    %3375 = vmatpush1.msra.mxu0 0.0
    %3376 = vmatprep.subr.mxu0 0.0
    %3377 = vmatpush1.msra.mxu0 0.0
    %3378 = vmatprep.subr.mxu0 0.0
    %3379 = vmatpush1.msra.mxu0 %v3337
    %3380 = vmatprep.subr.mxu0 0.0
    %3381 = vmatpush1.msra.mxu0 %v3336
    %3382 = vmatprep.subr.mxu0 0.0
    %3383 = vmatpush2.msra.mxu0 0.0
    %3384 = vmatprep.subr.mxu0 0.0
    %3385 = vmatpush2.msra.mxu0 0.0
    %3386 = vmatprep.subr.mxu0 0.0
    %3387 = vmatpush2.msra.mxu0 0.0
    %3388 = vmatprep.subr.mxu0 0.0
    %3389 = vmatpush2.msra.mxu0 0.0
    %3390 = vmatprep.subr.mxu0 0.0
    %3391 = vmatpush2.msra.mxu0 0.0
    %3392 = vmatprep.subr.mxu0 0.0
    %3393 = vmatpush2.msra.mxu0 0.0
    %3394 = vmatprep.subr.mxu0 0.0
    %3395 = vmatpush2.msra.mxu0 0.0
    %3396 = vmatprep.subr.mxu0 0.0
    %3397 = vmatpush2.msra.mxu0 0.0
    %3398 = vmatprep.subr.mxu0 0.0
    %3399 = vmatpush2.msra.mxu0 0.0
    %3400 = vmatprep.subr.mxu0 0.0
    %3401 = vmatpush2.msra.mxu0 0.0
    %3402 = vmatprep.subr.mxu0 0.0
    %3403 = vmatpush2.msra.mxu0 0.0
    %3404 = vmatprep.subr.mxu0 0.0
    %3405 = vmatpush2.msra.mxu0 0.0
    %3406 = vmatprep.subr.mxu0 0.0
    %3407 = vmatpush2.msra.mxu0 0.0
    %3408 = vmatprep.subr.mxu0 0.0
    %3409 = vmatpush2.msra.mxu0 0.0
    %3410 = vmatprep.subr.mxu0 0.0
    %3411 = vmatpush2.msra.mxu0 0.0
    %3412 = vmatprep.subr.mxu0 0.0
    %3413 = vmatpush2.msra.mxu0 0.0
    %3414 = vmatprep.mubr.f32.mxu0 0.0
    %3415 = vmatmul.mubr.f32.gmra.mxu0 %v3348
    %v3416 = vpop.f32.mrf.mxu0
    %v3417 = vadd.f32 %v3343, %v3416
    %v3418 = vpop.f32.mrf.mxu0
    %3419 = vdwg.mxu0
    %v3420 = vmax.f32 %v3417, 0.0
    %v3421 = vmin.f32 %v3420, 6.0
    %v3422 = vld [vmem:[%s63] sm:$0xff]
    %v3423 = vld [vmem:[#allocation17] sm:$0x1]
    %v3425 = vlaneseq
    %v3426 = vshrl.u32 %v3425, 7
    %v3427 = vsub.s32 0, %v3426
    %v3428 = vrot.slane %v3423, %v3427
    %v3431 = vsel %vm1985, %v3421, 0
    %3433 = vmatprep.subr.mxu0 0.0
    %3434 = vmatpush1.msra.mxu0 0.0
    %3435 = vmatprep.subr.mxu0 0.0
    %3436 = vmatpush1.msra.mxu0 0.0
    %3437 = vmatprep.subr.mxu0 0.0
    %3438 = vmatpush1.msra.mxu0 0.0
    %3439 = vmatprep.subr.mxu0 0.0
    %3440 = vmatpush1.msra.mxu0 0.0
    %3441 = vmatprep.subr.mxu0 0.0
    %3442 = vmatpush1.msra.mxu0 0.0
    %3443 = vmatprep.subr.mxu0 0.0
    %3444 = vmatpush1.msra.mxu0 0.0
    %3445 = vmatprep.subr.mxu0 0.0
    %3446 = vmatpush1.msra.mxu0 0.0
    %3447 = vmatprep.subr.mxu0 0.0
    %3448 = vmatpush1.msra.mxu0 0.0
    %3449 = vmatprep.subr.mxu0 0.0
    %3450 = vmatpush1.msra.mxu0 0.0
    %3451 = vmatprep.subr.mxu0 0.0
    %3452 = vmatpush1.msra.mxu0 0.0
    %3453 = vmatprep.subr.mxu0 0.0
    %3454 = vmatpush1.msra.mxu0 0.0
    %3455 = vmatprep.subr.mxu0 0.0
    %3456 = vmatpush1.msra.mxu0 0.0
    %3457 = vmatprep.subr.mxu0 0.0
    %3458 = vmatpush1.msra.mxu0 0.0
    %3459 = vmatprep.subr.mxu0 0.0
    %3460 = vmatpush1.msra.mxu0 0.0
    %3461 = vmatprep.subr.mxu0 0.0
    %3462 = vmatpush1.msra.mxu0 0.0
    %3463 = vmatprep.subr.mxu0 0.0
    %3464 = vmatpush1.msra.mxu0 %v3422
    %3465 = vmatprep.subr.mxu0 0.0
    %3466 = vmatpush2.msra.mxu0 0.0
    %3467 = vmatprep.subr.mxu0 0.0
    %3468 = vmatpush2.msra.mxu0 0.0
    %3469 = vmatprep.subr.mxu0 0.0
    %3470 = vmatpush2.msra.mxu0 0.0
    %3471 = vmatprep.subr.mxu0 0.0
    %3472 = vmatpush2.msra.mxu0 0.0
    %3473 = vmatprep.subr.mxu0 0.0
    %3474 = vmatpush2.msra.mxu0 0.0
    %3475 = vmatprep.subr.mxu0 0.0
    %3476 = vmatpush2.msra.mxu0 0.0
    %3477 = vmatprep.subr.mxu0 0.0
    %3478 = vmatpush2.msra.mxu0 0.0
    %3479 = vmatprep.subr.mxu0 0.0
    %3480 = vmatpush2.msra.mxu0 0.0
    %3481 = vmatprep.subr.mxu0 0.0
    %3482 = vmatpush2.msra.mxu0 0.0
    %3483 = vmatprep.subr.mxu0 0.0
    %3484 = vmatpush2.msra.mxu0 0.0
    %3485 = vmatprep.subr.mxu0 0.0
    %3486 = vmatpush2.msra.mxu0 0.0
    %3487 = vmatprep.subr.mxu0 0.0
    %3488 = vmatpush2.msra.mxu0 0.0
    %3489 = vmatprep.subr.mxu0 0.0
    %3490 = vmatpush2.msra.mxu0 0.0
    %3491 = vmatprep.subr.mxu0 0.0
    %3492 = vmatpush2.msra.mxu0 0.0
    %3493 = vmatprep.subr.mxu0 0.0
    %3494 = vmatpush2.msra.mxu0 0.0
    %3495 = vmatprep.subr.mxu0 0.0
    %3496 = vmatpush2.msra.mxu0 0.0
    %3497 = vmatprep.mubr.f32.mxu0 0.0
    %3498 = vmatmul.mubr.f32.gmra.mxu0 %v3431
    %v3499 = vpop.f32.mrf.mxu0
    %v3500 = vadd.f32 %v3428, %v3499
    %v3501 = vpop.f32.mrf.mxu0
    %3502 = vdwg.mxu0
    %vm3503 = vcmask 9216
    %v3504 = vsel %vm3503, %v3500, -inf
    %3505 = vmax.xlane.f32.xlu0 %v3504
    %v3506 = vpop.xlane.xlu0 %3505
    %v3507 = vsub.f32 %v3500, %v3506
    %v3508 = vmul.f32 %v3507, 1.442695
    %v3509 = vpow.pop %v3508
    %v3510 = vsel %vm3503, %v3509, 0.0
    %3511 = vadd.xlane.f32.xlu0 %v3510
    %v3512 = vpop.xlane.xlu0 %3511
    %v3513 = vrcp.pop %v3512
    %v3514 = vmul.f32 %v3509, %v3513
    %3515 = vst.msk [vmem:[#allocation19] sm:$0x3] %vm3503, %v3514
    %vm3517 = vcmask 123904
    %3518 = vst.msk [vmem:[#allocation20] sm:$0x3] %vm3517, %v3347
    // Predicated region
    $region158: #{_lambda_.1} parent=1 // pred_check
      _
    $region159: #{_lambda_.1} parent=1 // pred_check_branch
      %3520 = sbr.rel (0) target = $region161
    $region160: #{_lambda_.1} parent=1 // pred_region
      %s3522 = ssub.s32 32, 32
      %3523 = vsyncadd [#allocation10], %s3522
      %s3525 = sshll.u32 [#allocation19], 4
      %s3526 = int_to_ptr.vmem [resolvable:$true] %s3525
      %3528 = dma.vmem_to_hbm [thread:$0]  %s3526, 32, %s67, [#allocation10]
    $region161: #{_lambda_.1} parent=1 // pred_fallthru
      _
    // Predicated region
    $region162: #{_lambda_.1} parent=1 // pred_check
      _
    $region163: #{_lambda_.1} parent=1 // pred_check_branch
      %3530 = sbr.rel (0) target = $region165
    $region164: #{_lambda_.1} parent=1 // pred_region
      %s3532 = ssub.s32 32, 32
      %3533 = vsyncadd [#allocation21], %s3532
      %s3535 = sshll.u32 [#allocation20], 4
      %s3536 = int_to_ptr.vmem [resolvable:$true] %s3535
      %3538 = dma.vmem_to_hbm [thread:$0]  %s3536, 32, %s69, [#allocation21]
    $region165: #{_lambda_.1} parent=1 // pred_fallthru
      _
    // Predicated region
    $region166: #{_lambda_.1} parent=1 // pred_check
      _
    $region167: #{_lambda_.1} parent=1 // pred_check_branch
      %3540 = sbr.rel (0) target = $region169
    $region168: #{_lambda_.1} parent=1 // pred_region
      %3541 = dma.done [#allocation10], 32
    $region169: #{_lambda_.1} parent=1 // pred_fallthru
      _
    // Predicated region
    $region170: #{_lambda_.1} parent=1 // pred_check
      _
    $region171: #{_lambda_.1} parent=1 // pred_check_branch
      %3543 = sbr.rel (0) target = $region173
    $region172: #{_lambda_.1} parent=1 // pred_region
      %3544 = dma.done [#allocation21], 32
    $region173: #{_lambda_.1} parent=1 // pred_fallthru
      _
    %3545 = vsyncpa [#allocation9], 1
    %3546 = vsyncpa [#allocation12], 1
    %3547 = vsyncpa [#allocation15], 1
    %3548 = vsyncpa [#allocation18], 1
    %3549 = vsyncpa [#allocation10], 1
    %3550 = vsyncpa [#allocation21], 1

</llo_original>
